<compile_context>
chip_gen: v7x
topology: tpu7x:2x2x1
jax: 0.10.0
libtpu: 0.0.40
codegen_flags: <defaults>
</compile_context>

<pallas_src>
import functools

import jax
import jax.numpy as jnp
from jax.experimental import pallas as pl
from jax.experimental.pallas import tpu as pltpu


# ----------------------------------------------------------------------------
# The fused kernel: entire forward pass on VMEM-resident data.
# ----------------------------------------------------------------------------
def _lenet_kernel(xp_ref, w1_ref, b1_ref, w2_ref, b2_ref,
                  wf1_ref, bf1_ref, wf2_ref, bf2_ref, wf3_ref, bf3_ref,
                  out_ref, *, nb):
    f32 = jnp.float32
    bf16 = jnp.bfloat16

    # ---- conv1 + bias + relu: ONE aligned bf16 MXU matmul (K=80) -----------
    xp = xp_ref[...]                                        # [nb, 1024, 80] bf16
    c1 = jnp.dot(xp.reshape(nb * 1024, 80), w1_ref[...],
                 preferred_element_type=f32)                # [nb*1024, 128] f32
    c1 = jnp.maximum(c1 + b1_ref[...], 0.0).astype(bf16)
    c1 = c1.reshape(nb, 1024, 128)

    # ---- pool1: rows are parity-ordered, so the 2x2 max is the elementwise
    #      max of four ALIGNED 240-row blocks (no selection matmul) ----------
    p1 = jnp.maximum(jnp.maximum(c1[:, 0:240, :], c1[:, 256:496, :]),
                     jnp.maximum(c1[:, 512:752, :], c1[:, 768:1008, :]))
    # p1 row = i*16 + j  (i,j valid for 0..13); channels replicated in 5
    # lane groups 6*g + c (conv1 weights were replicated accordingly).

    # ---- pack (kw, channel) into lanes for conv2: lane masks only ----------
    lane = jax.lax.broadcasted_iota(jnp.int32, (1, 1, 128), 2)
    pp = jnp.zeros((nb, 232, 128), bf16)
    for kw in range(5):
        seg = p1[:, kw:kw + 232, :]                         # small row shift
        mask = (lane >= 6 * kw) & (lane < 6 * kw + 6)
        pp = pp + jnp.where(mask, seg, jnp.zeros_like(seg))
    # pp[n, a*16 + j, 6*kw + c] = pooled1[n, a, j + kw, c]

    # ---- conv2 + bias + relu: 5 ALIGNED kh-taps, K=32 bf16 matmuls ---------
    acc = jnp.zeros((nb * 168, 128), f32)
    for kh in range(5):
        win = pp[:, kh * 16:kh * 16 + 168, 0:32]            # aligned offsets
        acc = acc + jnp.dot(win.reshape(nb * 168, 32), w2_ref[kh],
                            preferred_element_type=f32)
    c2 = jnp.maximum(acc + b2_ref[...], 0.0).reshape(nb, 168, 128)
    # c2 row = i2*16 + j2 (valid i2,j2 in 0..9), lanes 0..15 = conv2 channels

    # ---- pool2: elementwise max of 4 shifted windows; no compaction --------
    m2 = jnp.maximum(jnp.maximum(c2[:, 0:144, :], c2[:, 1:145, :]),
                     jnp.maximum(c2[:, 16:160, :], c2[:, 17:161, :]))
    # pooled2[a, b, :] lives at m2 row 32*a + 2*b

    # ---- fc1 + relu: 25 tiny K=16 dots (f32, negligible work) --------------
    h1 = jnp.zeros((nb, 128), f32)
    for a in range(5):
        for b in range(5):
            v = m2[:, 32 * a + 2 * b, 0:16]                 # [nb, 16]
            h1 = h1 + jnp.dot(v, wf1_ref[a * 5 + b],
                              preferred_element_type=f32)
    h1 = jnp.maximum(h1 + bf1_ref[...], 0.0)

    # ---- fc2 + relu, fc3 (f32 for numerical margin) ------------------------
    h2 = jnp.maximum(jnp.dot(h1, wf2_ref[...], preferred_element_type=f32)
                     + bf2_ref[...], 0.0)
    y = jnp.dot(h2, wf3_ref[...], preferred_element_type=f32) + bf3_ref[...]
    out_ref[0, 0:nb, :] = y


# ----------------------------------------------------------------------------
# Parameter preparation (PyTorch layout -> packed kernel layout, done once).
# ----------------------------------------------------------------------------
def init_params(key):
    ks = jax.random.split(key, 10)
    s = 0.1
    return {
        "conv1_w": s * jax.random.normal(ks[0], (6, 3, 5, 5), jnp.float32),
        "conv1_b": s * jax.random.normal(ks[1], (6,), jnp.float32),
        "conv2_w": s * jax.random.normal(ks[2], (16, 6, 5, 5), jnp.float32),
        "conv2_b": s * jax.random.normal(ks[3], (16,), jnp.float32),
        "fc1_w": s * jax.random.normal(ks[4], (120, 16 * 5 * 5), jnp.float32),
        "fc1_b": s * jax.random.normal(ks[5], (120,), jnp.float32),
        "fc2_w": s * jax.random.normal(ks[6], (84, 120), jnp.float32),
        "fc2_b": s * jax.random.normal(ks[7], (84,), jnp.float32),
        "fc3_w": s * jax.random.normal(ks[8], (10, 84), jnp.float32),
        "fc3_b": s * jax.random.normal(ks[9], (10,), jnp.float32),
    }


def prepare_params(params):
    f32, bf16 = jnp.float32, jnp.bfloat16

    # conv1: rows = (kh*5+kw)*3 + c ; output lanes replicated into 5 groups
    # (6*g + o) so the conv2 lane-packing needs no cross-lane moves.
    w1 = jnp.transpose(params["conv1_w"], (2, 3, 1, 0)).reshape(75, 6)
    w1p = jnp.zeros((80, 128), f32)
    b1 = jnp.zeros((1, 128), f32)
    for g in range(5):
        w1p = w1p.at[:75, 6 * g:6 * g + 6].set(w1)
        b1 = b1.at[0, 6 * g:6 * g + 6].set(params["conv1_b"])

    # conv2: per-kh blocks, rows = kw*6 + c, cols = output channel.
    w2 = jnp.transpose(params["conv2_w"], (2, 3, 1, 0)).reshape(5, 30, 16)
    w2p = jnp.zeros((5, 32, 128), f32).at[:, :30, :16].set(w2)
    b2 = jnp.zeros((1, 128), f32).at[0, :16].set(params["conv2_b"])

    # fc1: torch flatten order is c*25 + a*5 + b -> per-position [16,128] blocks
    f1 = jnp.transpose(params["fc1_w"].reshape(120, 16, 25), (2, 1, 0))
    wf1p = jnp.zeros((25, 16, 128), f32).at[:, :, :120].set(f1)
    bf1 = jnp.zeros((1, 128), f32).at[0, :120].set(params["fc1_b"])

    wf2p = jnp.zeros((128, 128), f32).at[:120, :84].set(params["fc2_w"].T)
    bf2 = jnp.zeros((1, 128), f32).at[0, :84].set(params["fc2_b"])
    wf3p = jnp.zeros((128, 128), f32).at[:84, :10].set(params["fc3_w"].T)
    bf3 = jnp.zeros((1, 128), f32).at[0, :10].set(params["fc3_b"])

    return {
        "w1": w1p.astype(bf16), "b1": b1,
        "w2": w2p.astype(bf16), "b2": b2,
        "wf1": wf1p, "bf1": bf1,
        "wf2": wf2p, "bf2": bf2,
        "wf3": wf3p, "bf3": bf3,
    }


_WEIGHT_KEYS = ("w1", "b1", "w2", "b2", "wf1", "bf1",
                "wf2", "bf2", "wf3", "bf3")


def _block_batch(n):
    # Largest nb <= 4 that divides n and gives >= 2 grid steps (v7x has two
    # TensorCores; the extra grid step costs ~nothing on v5e/v6e).
    for cand in (4, 2, 1):
        if n % cand == 0 and n // cand >= 2:
            return cand
    return 1


@jax.jit
def net_forward(prepped, x):
    """x: [N, 3, 32, 32] (NCHW, like PyTorch) -> logits [N, 10]."""
    n = x.shape[0]
    nb = _block_batch(n)
    nblk = n // nb

    # ---- build conv1 im2col frame in XLA (pure layout work on tiny data) ---
    # lanes: (kh*5+kw)*3 + c ; rows: (h%2)*512 + (w%2)*256 + (h//2)*16 + w//2
    xh = jnp.transpose(x, (0, 2, 3, 1))                       # [N,32,32,3]
    xpad = jnp.pad(xh, ((0, 0), (0, 0), (0, 4), (0, 0)))      # zero-pad w
    parts = [xpad[:, kh:kh + 28, kw:kw + 32, :]
             for kh in range(5) for kw in range(5)]
    im = jnp.concatenate(parts, axis=-1)                      # [N,28,32,75]
    im = im.reshape(n, 14, 2, 16, 2, 75).transpose(0, 2, 4, 1, 3, 5)
    im = im.reshape(n, 2, 2, 224, 75)
    im = jnp.pad(im, ((0, 0), (0, 0), (0, 0), (0, 32), (0, 5)))
    xp = im.reshape(n, 1024, 80).astype(jnp.bfloat16)

    in_specs = [pl.BlockSpec((nb, 1024, 80), lambda b: (b, 0, 0))]
    for k in _WEIGHT_KEYS:
        arr = prepped[k]
        if arr.ndim == 2:
            in_specs.append(pl.BlockSpec(arr.shape, lambda b: (0, 0)))
        else:
            in_specs.append(pl.BlockSpec(arr.shape, lambda b: (0, 0, 0)))

    out = pl.pallas_call(
        functools.partial(_lenet_kernel, nb=nb),
        out_shape=jax.ShapeDtypeStruct((nblk, 8, 128), jnp.float32),
        grid=(nblk,),
        in_specs=in_specs,
        out_specs=pl.BlockSpec((1, 8, 128), lambda b: (b, 0, 0)),
        compiler_params=pltpu.CompilerParams(
            dimension_semantics=("parallel",),
            vmem_limit_bytes=32 * 1024 * 1024,
        ),
    )(xp, *(prepped[k] for k in _WEIGHT_KEYS))

    # block b, row i  ->  sample b*nb + i ; lanes [:10] are the real logits.
    return out[:, :nb, :10].reshape(n, 10)


# ----------------------------------------------------------------------------
# Pure-JAX reference (mirrors the PyTorch module) for a numerical check.
# ----------------------------------------------------------------------------
def reference_forward(params, x):
    dn = ("NCHW", "OIHW", "NCHW")
    hp = jax.lax.Precision.HIGHEST

    def conv(v, w, b):
        y = jax.lax.conv_general_dilated(v, w, (1, 1), "VALID",
                                         dimension_numbers=dn, precision=hp)
        return jax.nn.relu(y + b[None, :, None, None])

    def pool(v):
        return jax.lax.reduce_window(v, -jnp.inf, jax.lax.max,
                                     (1, 1, 2, 2), (1, 1, 2, 2), "VALID")

    y = pool(conv(x, params["conv1_w"], params["conv1_b"]))
    y = pool(conv(y, params["conv2_w"], params["conv2_b"]))
    y = y.reshape(y.shape[0], -1)                 # (c,h,w) flatten, as torch .view
    y = jax.nn.relu(jnp.dot(y, params["fc1_w"].T, precision=hp) + params["fc1_b"])
    y = jax.nn.relu(jnp.dot(y, params["fc2_w"].T, precision=hp) + params["fc2_b"])
    return jnp.dot(y, params["fc3_w"].T, precision=hp) + params["fc3_b"]


if __name__ == "__main__":
    key = jax.random.PRNGKey(0)
    k_params, k_x = jax.random.split(key)
    params = init_params(k_params)
    x = jax.random.normal(k_x, (2, 3, 32, 32), jnp.float32)

    prepped = prepare_params(params)
    out = jax.block_until_ready(net_forward(prepped, x))
    assert out.shape == (2, 10), out.shape
    assert out.dtype == jnp.float32

    ref = jax.block_until_ready(reference_forward(params, x))
    err = float(jnp.max(jnp.abs(out - ref)))
    assert err < 5e-2, f"mismatch vs reference: max abs err = {err}"

    print("KERNEL_OK")
</pallas_src>

<mosaic_0001>
module attributes {stable_mosaic.version = 11 : i64} {
  func.func @_lenet_kernel(%arg0: i32, %arg1: memref<1x1024x80xbf16, #tpu.memory_space<vmem>>, %arg2: memref<80x128xbf16, #tpu.memory_space<vmem>>, %arg3: memref<1x128xf32, #tpu.memory_space<vmem>>, %arg4: memref<5x32x128xbf16, #tpu.memory_space<vmem>>, %arg5: memref<1x128xf32, #tpu.memory_space<vmem>>, %arg6: memref<25x16x128xf32, #tpu.memory_space<vmem>>, %arg7: memref<1x128xf32, #tpu.memory_space<vmem>>, %arg8: memref<128x128xf32, #tpu.memory_space<vmem>>, %arg9: memref<1x128xf32, #tpu.memory_space<vmem>>, %arg10: memref<128x128xf32, #tpu.memory_space<vmem>>, %arg11: memref<1x128xf32, #tpu.memory_space<vmem>>, %arg12: memref<1x8x128xf32, #tpu.memory_space<vmem>>) attributes {dimension_semantics = [#tpu.dimension_semantics<parallel>], iteration_bounds = array<i64: 2>, scalar_prefetch = 0 : i64, scratch_operands = 0 : i64, tpu.core_type = #tpu.core_type<tc>, window_params = [{transform_indices = @transform_0, window_bounds = array<i64: 1, 1024, 80>}, {pipeline_mode = #tpu.pipeline_mode<synchronous>, transform_indices = @transform_1, window_bounds = array<i64: 80, 128>}, {pipeline_mode = #tpu.pipeline_mode<synchronous>, transform_indices = @transform_2, window_bounds = array<i64: 1, 128>}, {pipeline_mode = #tpu.pipeline_mode<synchronous>, transform_indices = @transform_3, window_bounds = array<i64: 5, 32, 128>}, {pipeline_mode = #tpu.pipeline_mode<synchronous>, transform_indices = @transform_4, window_bounds = array<i64: 1, 128>}, {pipeline_mode = #tpu.pipeline_mode<synchronous>, transform_indices = @transform_5, window_bounds = array<i64: 25, 16, 128>}, {pipeline_mode = #tpu.pipeline_mode<synchronous>, transform_indices = @transform_6, window_bounds = array<i64: 1, 128>}, {pipeline_mode = #tpu.pipeline_mode<synchronous>, transform_indices = @transform_7, window_bounds = array<i64: 128, 128>}, {pipeline_mode = #tpu.pipeline_mode<synchronous>, transform_indices = @transform_8, window_bounds = array<i64: 1, 128>}, {pipeline_mode = #tpu.pipeline_mode<synchronous>, transform_indices = @transform_9, window_bounds = array<i64: 128, 128>}, {pipeline_mode = #tpu.pipeline_mode<synchronous>, transform_indices = @transform_10, window_bounds = array<i64: 1, 128>}, {transform_indices = @transform_11, window_bounds = array<i64: 1, 8, 128>}]} {
    %c0 = arith.constant 0 : index
    %c0_0 = arith.constant 0 : index
    %c0_1 = arith.constant 0 : index
    %0 = vector.load %arg1[%c0, %c0_0, %c0_1] : memref<1x1024x80xbf16, #tpu.memory_space<vmem>>, vector<1x1024x80xbf16>
    %1 = vector.shape_cast %0 : vector<1x1024x80xbf16> to vector<1024x80xbf16>
    %c0_2 = arith.constant 0 : index
    %c0_3 = arith.constant 0 : index
    %2 = vector.load %arg2[%c0_2, %c0_3] : memref<80x128xbf16, #tpu.memory_space<vmem>>, vector<80x128xbf16>
    %cst = arith.constant dense<0.000000e+00> : vector<1024x128xf32>
    %3 = tpu.matmul %1, %2, %cst {dimension_numbers = #tpu.dot_dimension_numbers<[1], [0], [0], [1], [0, 0, 1, 1], [], []>} : vector<1024x80xbf16>, vector<80x128xbf16>, vector<1024x128xf32> -> vector<1024x128xf32>
    %c0_4 = arith.constant 0 : index
    %c0_5 = arith.constant 0 : index
    %4 = vector.load %arg3[%c0_4, %c0_5] : memref<1x128xf32, #tpu.memory_space<vmem>>, vector<1x128xf32>
    %5 = vector.broadcast %4 : vector<1x128xf32> to vector<1024x128xf32>
    %6 = arith.addf %3, %5 : vector<1024x128xf32>
    %cst_6 = arith.constant 0.000000e+00 : f32
    %7 = vector.broadcast %cst_6 : f32 to vector<1024x128xf32>
    %8 = arith.maximumf %6, %7 : vector<1024x128xf32>
    %9 = arith.truncf %8 : vector<1024x128xf32> to vector<1024x128xbf16>
    %10 = vector.shape_cast %9 : vector<1024x128xbf16> to vector<1x1024x128xbf16>
    %11 = vector.extract_strided_slice %10 {offsets = [0, 0, 0], sizes = [1, 240, 128], strides = [1, 1, 1]} : vector<1x1024x128xbf16> to vector<1x240x128xbf16>
    %12 = vector.extract_strided_slice %10 {offsets = [0, 256, 0], sizes = [1, 240, 128], strides = [1, 1, 1]} : vector<1x1024x128xbf16> to vector<1x240x128xbf16>
    %13 = arith.maximumf %11, %12 : vector<1x240x128xbf16>
    %14 = vector.extract_strided_slice %10 {offsets = [0, 512, 0], sizes = [1, 240, 128], strides = [1, 1, 1]} : vector<1x1024x128xbf16> to vector<1x240x128xbf16>
    %15 = vector.extract_strided_slice %10 {offsets = [0, 768, 0], sizes = [1, 240, 128], strides = [1, 1, 1]} : vector<1x1024x128xbf16> to vector<1x240x128xbf16>
    %16 = arith.maximumf %14, %15 : vector<1x240x128xbf16>
    %17 = arith.maximumf %13, %16 : vector<1x240x128xbf16>
    %18 = tpu.iota {dimensions = array<i32: 2>} : vector<1x1x128xi32>
    %cst_7 = arith.constant 0.000000e+00 : bf16
    %19 = vector.broadcast %cst_7 : bf16 to vector<1x232x128xbf16>
    %20 = vector.extract_strided_slice %17 {offsets = [0, 0, 0], sizes = [1, 232, 128], strides = [1, 1, 1]} : vector<1x240x128xbf16> to vector<1x232x128xbf16>
    %c0_i32 = arith.constant 0 : i32
    %21 = vector.broadcast %c0_i32 : i32 to vector<1x1x128xi32>
    %22 = arith.cmpi sge, %18, %21 : vector<1x1x128xi32>
    %c6_i32 = arith.constant 6 : i32
    %23 = vector.broadcast %c6_i32 : i32 to vector<1x1x128xi32>
    %24 = arith.cmpi slt, %18, %23 : vector<1x1x128xi32>
    %25 = arith.andi %22, %24 : vector<1x1x128xi1>
    %cst_8 = arith.constant 0.000000e+00 : bf16
    %26 = vector.broadcast %cst_8 : bf16 to vector<1x232x128xbf16>
    %27 = vector.shape_cast %25 : vector<1x1x128xi1> to vector<1x1x128xi1>
    %28 = vector.broadcast %27 : vector<1x1x128xi1> to vector<1x232x128xi1>
    %29 = arith.select %28, %20, %26 : vector<1x232x128xi1>, vector<1x232x128xbf16>
    %30 = arith.addf %19, %29 : vector<1x232x128xbf16>
    %31 = vector.extract_strided_slice %17 {offsets = [0, 1, 0], sizes = [1, 232, 128], strides = [1, 1, 1]} : vector<1x240x128xbf16> to vector<1x232x128xbf16>
    %c6_i32_9 = arith.constant 6 : i32
    %32 = vector.broadcast %c6_i32_9 : i32 to vector<1x1x128xi32>
    %33 = arith.cmpi sge, %18, %32 : vector<1x1x128xi32>
    %c12_i32 = arith.constant 12 : i32
    %34 = vector.broadcast %c12_i32 : i32 to vector<1x1x128xi32>
    %35 = arith.cmpi slt, %18, %34 : vector<1x1x128xi32>
    %36 = arith.andi %33, %35 : vector<1x1x128xi1>
    %cst_10 = arith.constant 0.000000e+00 : bf16
    %37 = vector.broadcast %cst_10 : bf16 to vector<1x232x128xbf16>
    %38 = vector.shape_cast %36 : vector<1x1x128xi1> to vector<1x1x128xi1>
    %39 = vector.broadcast %38 : vector<1x1x128xi1> to vector<1x232x128xi1>
    %40 = arith.select %39, %31, %37 : vector<1x232x128xi1>, vector<1x232x128xbf16>
    %41 = arith.addf %30, %40 : vector<1x232x128xbf16>
    %42 = vector.extract_strided_slice %17 {offsets = [0, 2, 0], sizes = [1, 232, 128], strides = [1, 1, 1]} : vector<1x240x128xbf16> to vector<1x232x128xbf16>
    %c12_i32_11 = arith.constant 12 : i32
    %43 = vector.broadcast %c12_i32_11 : i32 to vector<1x1x128xi32>
    %44 = arith.cmpi sge, %18, %43 : vector<1x1x128xi32>
    %c18_i32 = arith.constant 18 : i32
    %45 = vector.broadcast %c18_i32 : i32 to vector<1x1x128xi32>
    %46 = arith.cmpi slt, %18, %45 : vector<1x1x128xi32>
    %47 = arith.andi %44, %46 : vector<1x1x128xi1>
    %cst_12 = arith.constant 0.000000e+00 : bf16
    %48 = vector.broadcast %cst_12 : bf16 to vector<1x232x128xbf16>
    %49 = vector.shape_cast %47 : vector<1x1x128xi1> to vector<1x1x128xi1>
    %50 = vector.broadcast %49 : vector<1x1x128xi1> to vector<1x232x128xi1>
    %51 = arith.select %50, %42, %48 : vector<1x232x128xi1>, vector<1x232x128xbf16>
    %52 = arith.addf %41, %51 : vector<1x232x128xbf16>
    %53 = vector.extract_strided_slice %17 {offsets = [0, 3, 0], sizes = [1, 232, 128], strides = [1, 1, 1]} : vector<1x240x128xbf16> to vector<1x232x128xbf16>
    %c18_i32_13 = arith.constant 18 : i32
    %54 = vector.broadcast %c18_i32_13 : i32 to vector<1x1x128xi32>
    %55 = arith.cmpi sge, %18, %54 : vector<1x1x128xi32>
    %c24_i32 = arith.constant 24 : i32
    %56 = vector.broadcast %c24_i32 : i32 to vector<1x1x128xi32>
    %57 = arith.cmpi slt, %18, %56 : vector<1x1x128xi32>
    %58 = arith.andi %55, %57 : vector<1x1x128xi1>
    %cst_14 = arith.constant 0.000000e+00 : bf16
    %59 = vector.broadcast %cst_14 : bf16 to vector<1x232x128xbf16>
    %60 = vector.shape_cast %58 : vector<1x1x128xi1> to vector<1x1x128xi1>
    %61 = vector.broadcast %60 : vector<1x1x128xi1> to vector<1x232x128xi1>
    %62 = arith.select %61, %53, %59 : vector<1x232x128xi1>, vector<1x232x128xbf16>
    %63 = arith.addf %52, %62 : vector<1x232x128xbf16>
    %64 = vector.extract_strided_slice %17 {offsets = [0, 4, 0], sizes = [1, 232, 128], strides = [1, 1, 1]} : vector<1x240x128xbf16> to vector<1x232x128xbf16>
    %c24_i32_15 = arith.constant 24 : i32
    %65 = vector.broadcast %c24_i32_15 : i32 to vector<1x1x128xi32>
    %66 = arith.cmpi sge, %18, %65 : vector<1x1x128xi32>
    %c30_i32 = arith.constant 30 : i32
    %67 = vector.broadcast %c30_i32 : i32 to vector<1x1x128xi32>
    %68 = arith.cmpi slt, %18, %67 : vector<1x1x128xi32>
    %69 = arith.andi %66, %68 : vector<1x1x128xi1>
    %cst_16 = arith.constant 0.000000e+00 : bf16
    %70 = vector.broadcast %cst_16 : bf16 to vector<1x232x128xbf16>
    %71 = vector.shape_cast %69 : vector<1x1x128xi1> to vector<1x1x128xi1>
    %72 = vector.broadcast %71 : vector<1x1x128xi1> to vector<1x232x128xi1>
    %73 = arith.select %72, %64, %70 : vector<1x232x128xi1>, vector<1x232x128xbf16>
    %74 = arith.addf %63, %73 : vector<1x232x128xbf16>
    %cst_17 = arith.constant 0.000000e+00 : f32
    %75 = vector.broadcast %cst_17 : f32 to vector<168x128xf32>
    %76 = vector.extract_strided_slice %74 {offsets = [0, 0, 0], sizes = [1, 168, 32], strides = [1, 1, 1]} : vector<1x232x128xbf16> to vector<1x168x32xbf16>
    %77 = vector.shape_cast %76 : vector<1x168x32xbf16> to vector<168x32xbf16>
    %c0_18 = arith.constant 0 : index
    %c0_19 = arith.constant 0 : index
    %c0_20 = arith.constant 0 : index
    %78 = vector.load %arg4[%c0_18, %c0_19, %c0_20] : memref<5x32x128xbf16, #tpu.memory_space<vmem>>, vector<1x32x128xbf16>
    %79 = vector.shape_cast %78 : vector<1x32x128xbf16> to vector<32x128xbf16>
    %cst_21 = arith.constant dense<0.000000e+00> : vector<168x128xf32>
    %80 = tpu.matmul %77, %79, %cst_21 {dimension_numbers = #tpu.dot_dimension_numbers<[1], [0], [0], [1], [0, 0, 1, 1], [], []>} : vector<168x32xbf16>, vector<32x128xbf16>, vector<168x128xf32> -> vector<168x128xf32>
    %81 = arith.addf %75, %80 : vector<168x128xf32>
    %82 = vector.extract_strided_slice %74 {offsets = [0, 16, 0], sizes = [1, 168, 32], strides = [1, 1, 1]} : vector<1x232x128xbf16> to vector<1x168x32xbf16>
    %83 = vector.shape_cast %82 : vector<1x168x32xbf16> to vector<168x32xbf16>
    %c1 = arith.constant 1 : index
    %c0_22 = arith.constant 0 : index
    %c0_23 = arith.constant 0 : index
    %84 = vector.load %arg4[%c1, %c0_22, %c0_23] : memref<5x32x128xbf16, #tpu.memory_space<vmem>>, vector<1x32x128xbf16>
    %85 = vector.shape_cast %84 : vector<1x32x128xbf16> to vector<32x128xbf16>
    %cst_24 = arith.constant dense<0.000000e+00> : vector<168x128xf32>
    %86 = tpu.matmul %83, %85, %cst_24 {dimension_numbers = #tpu.dot_dimension_numbers<[1], [0], [0], [1], [0, 0, 1, 1], [], []>} : vector<168x32xbf16>, vector<32x128xbf16>, vector<168x128xf32> -> vector<168x128xf32>
    %87 = arith.addf %81, %86 : vector<168x128xf32>
    %88 = vector.extract_strided_slice %74 {offsets = [0, 32, 0], sizes = [1, 168, 32], strides = [1, 1, 1]} : vector<1x232x128xbf16> to vector<1x168x32xbf16>
    %89 = vector.shape_cast %88 : vector<1x168x32xbf16> to vector<168x32xbf16>
    %c2 = arith.constant 2 : index
    %c0_25 = arith.constant 0 : index
    %c0_26 = arith.constant 0 : index
    %90 = vector.load %arg4[%c2, %c0_25, %c0_26] : memref<5x32x128xbf16, #tpu.memory_space<vmem>>, vector<1x32x128xbf16>
    %91 = vector.shape_cast %90 : vector<1x32x128xbf16> to vector<32x128xbf16>
    %cst_27 = arith.constant dense<0.000000e+00> : vector<168x128xf32>
    %92 = tpu.matmul %89, %91, %cst_27 {dimension_numbers = #tpu.dot_dimension_numbers<[1], [0], [0], [1], [0, 0, 1, 1], [], []>} : vector<168x32xbf16>, vector<32x128xbf16>, vector<168x128xf32> -> vector<168x128xf32>
    %93 = arith.addf %87, %92 : vector<168x128xf32>
    %94 = vector.extract_strided_slice %74 {offsets = [0, 48, 0], sizes = [1, 168, 32], strides = [1, 1, 1]} : vector<1x232x128xbf16> to vector<1x168x32xbf16>
    %95 = vector.shape_cast %94 : vector<1x168x32xbf16> to vector<168x32xbf16>
    %c3 = arith.constant 3 : index
    %c0_28 = arith.constant 0 : index
    %c0_29 = arith.constant 0 : index
    %96 = vector.load %arg4[%c3, %c0_28, %c0_29] : memref<5x32x128xbf16, #tpu.memory_space<vmem>>, vector<1x32x128xbf16>
    %97 = vector.shape_cast %96 : vector<1x32x128xbf16> to vector<32x128xbf16>
    %cst_30 = arith.constant dense<0.000000e+00> : vector<168x128xf32>
    %98 = tpu.matmul %95, %97, %cst_30 {dimension_numbers = #tpu.dot_dimension_numbers<[1], [0], [0], [1], [0, 0, 1, 1], [], []>} : vector<168x32xbf16>, vector<32x128xbf16>, vector<168x128xf32> -> vector<168x128xf32>
    %99 = arith.addf %93, %98 : vector<168x128xf32>
    %100 = vector.extract_strided_slice %74 {offsets = [0, 64, 0], sizes = [1, 168, 32], strides = [1, 1, 1]} : vector<1x232x128xbf16> to vector<1x168x32xbf16>
    %101 = vector.shape_cast %100 : vector<1x168x32xbf16> to vector<168x32xbf16>
    %c4 = arith.constant 4 : index
    %c0_31 = arith.constant 0 : index
    %c0_32 = arith.constant 0 : index
    %102 = vector.load %arg4[%c4, %c0_31, %c0_32] : memref<5x32x128xbf16, #tpu.memory_space<vmem>>, vector<1x32x128xbf16>
    %103 = vector.shape_cast %102 : vector<1x32x128xbf16> to vector<32x128xbf16>
    %cst_33 = arith.constant dense<0.000000e+00> : vector<168x128xf32>
    %104 = tpu.matmul %101, %103, %cst_33 {dimension_numbers = #tpu.dot_dimension_numbers<[1], [0], [0], [1], [0, 0, 1, 1], [], []>} : vector<168x32xbf16>, vector<32x128xbf16>, vector<168x128xf32> -> vector<168x128xf32>
    %105 = arith.addf %99, %104 : vector<168x128xf32>
    %c0_34 = arith.constant 0 : index
    %c0_35 = arith.constant 0 : index
    %106 = vector.load %arg5[%c0_34, %c0_35] : memref<1x128xf32, #tpu.memory_space<vmem>>, vector<1x128xf32>
    %107 = vector.broadcast %106 : vector<1x128xf32> to vector<168x128xf32>
    %108 = arith.addf %105, %107 : vector<168x128xf32>
    %cst_36 = arith.constant 0.000000e+00 : f32
    %109 = vector.broadcast %cst_36 : f32 to vector<168x128xf32>
    %110 = arith.maximumf %108, %109 : vector<168x128xf32>
    %111 = vector.shape_cast %110 : vector<168x128xf32> to vector<1x168x128xf32>
    %112 = vector.extract_strided_slice %111 {offsets = [0, 0, 0], sizes = [1, 144, 128], strides = [1, 1, 1]} : vector<1x168x128xf32> to vector<1x144x128xf32>
    %113 = vector.extract_strided_slice %111 {offsets = [0, 1, 0], sizes = [1, 144, 128], strides = [1, 1, 1]} : vector<1x168x128xf32> to vector<1x144x128xf32>
    %114 = arith.maximumf %112, %113 : vector<1x144x128xf32>
    %115 = vector.extract_strided_slice %111 {offsets = [0, 16, 0], sizes = [1, 144, 128], strides = [1, 1, 1]} : vector<1x168x128xf32> to vector<1x144x128xf32>
    %116 = vector.extract_strided_slice %111 {offsets = [0, 17, 0], sizes = [1, 144, 128], strides = [1, 1, 1]} : vector<1x168x128xf32> to vector<1x144x128xf32>
    %117 = arith.maximumf %115, %116 : vector<1x144x128xf32>
    %118 = arith.maximumf %114, %117 : vector<1x144x128xf32>
    %cst_37 = arith.constant 0.000000e+00 : f32
    %119 = vector.broadcast %cst_37 : f32 to vector<1x128xf32>
    %120 = vector.extract_strided_slice %118 {offsets = [0, 0, 0], sizes = [1, 1, 16], strides = [1, 1, 1]} : vector<1x144x128xf32> to vector<1x1x16xf32>
    %121 = vector.shape_cast %120 : vector<1x1x16xf32> to vector<1x16xf32>
    %c0_38 = arith.constant 0 : index
    %c0_39 = arith.constant 0 : index
    %c0_40 = arith.constant 0 : index
    %122 = vector.load %arg6[%c0_38, %c0_39, %c0_40] : memref<25x16x128xf32, #tpu.memory_space<vmem>>, vector<1x16x128xf32>
    %123 = vector.shape_cast %122 : vector<1x16x128xf32> to vector<16x128xf32>
    %cst_41 = arith.constant dense<0.000000e+00> : vector<1x128xf32>
    %124 = tpu.matmul %121, %123, %cst_41 {dimension_numbers = #tpu.dot_dimension_numbers<[1], [0], [0], [1], [0, 0, 1, 1], [], []>} : vector<1x16xf32>, vector<16x128xf32>, vector<1x128xf32> -> vector<1x128xf32>
    %125 = arith.addf %119, %124 : vector<1x128xf32>
    %126 = vector.extract_strided_slice %118 {offsets = [0, 2, 0], sizes = [1, 1, 16], strides = [1, 1, 1]} : vector<1x144x128xf32> to vector<1x1x16xf32>
    %127 = vector.shape_cast %126 : vector<1x1x16xf32> to vector<1x16xf32>
    %c1_42 = arith.constant 1 : index
    %c0_43 = arith.constant 0 : index
    %c0_44 = arith.constant 0 : index
    %128 = vector.load %arg6[%c1_42, %c0_43, %c0_44] : memref<25x16x128xf32, #tpu.memory_space<vmem>>, vector<1x16x128xf32>
    %129 = vector.shape_cast %128 : vector<1x16x128xf32> to vector<16x128xf32>
    %cst_45 = arith.constant dense<0.000000e+00> : vector<1x128xf32>
    %130 = tpu.matmul %127, %129, %cst_45 {dimension_numbers = #tpu.dot_dimension_numbers<[1], [0], [0], [1], [0, 0, 1, 1], [], []>} : vector<1x16xf32>, vector<16x128xf32>, vector<1x128xf32> -> vector<1x128xf32>
    %131 = arith.addf %125, %130 : vector<1x128xf32>
    %132 = vector.extract_strided_slice %118 {offsets = [0, 4, 0], sizes = [1, 1, 16], strides = [1, 1, 1]} : vector<1x144x128xf32> to vector<1x1x16xf32>
    %133 = vector.shape_cast %132 : vector<1x1x16xf32> to vector<1x16xf32>
    %c2_46 = arith.constant 2 : index
    %c0_47 = arith.constant 0 : index
    %c0_48 = arith.constant 0 : index
    %134 = vector.load %arg6[%c2_46, %c0_47, %c0_48] : memref<25x16x128xf32, #tpu.memory_space<vmem>>, vector<1x16x128xf32>
    %135 = vector.shape_cast %134 : vector<1x16x128xf32> to vector<16x128xf32>
    %cst_49 = arith.constant dense<0.000000e+00> : vector<1x128xf32>
    %136 = tpu.matmul %133, %135, %cst_49 {dimension_numbers = #tpu.dot_dimension_numbers<[1], [0], [0], [1], [0, 0, 1, 1], [], []>} : vector<1x16xf32>, vector<16x128xf32>, vector<1x128xf32> -> vector<1x128xf32>
    %137 = arith.addf %131, %136 : vector<1x128xf32>
    %138 = vector.extract_strided_slice %118 {offsets = [0, 6, 0], sizes = [1, 1, 16], strides = [1, 1, 1]} : vector<1x144x128xf32> to vector<1x1x16xf32>
    %139 = vector.shape_cast %138 : vector<1x1x16xf32> to vector<1x16xf32>
    %c3_50 = arith.constant 3 : index
    %c0_51 = arith.constant 0 : index
    %c0_52 = arith.constant 0 : index
    %140 = vector.load %arg6[%c3_50, %c0_51, %c0_52] : memref<25x16x128xf32, #tpu.memory_space<vmem>>, vector<1x16x128xf32>
    %141 = vector.shape_cast %140 : vector<1x16x128xf32> to vector<16x128xf32>
    %cst_53 = arith.constant dense<0.000000e+00> : vector<1x128xf32>
    %142 = tpu.matmul %139, %141, %cst_53 {dimension_numbers = #tpu.dot_dimension_numbers<[1], [0], [0], [1], [0, 0, 1, 1], [], []>} : vector<1x16xf32>, vector<16x128xf32>, vector<1x128xf32> -> vector<1x128xf32>
    %143 = arith.addf %137, %142 : vector<1x128xf32>
    %144 = vector.extract_strided_slice %118 {offsets = [0, 8, 0], sizes = [1, 1, 16], strides = [1, 1, 1]} : vector<1x144x128xf32> to vector<1x1x16xf32>
    %145 = vector.shape_cast %144 : vector<1x1x16xf32> to vector<1x16xf32>
    %c4_54 = arith.constant 4 : index
    %c0_55 = arith.constant 0 : index
    %c0_56 = arith.constant 0 : index
    %146 = vector.load %arg6[%c4_54, %c0_55, %c0_56] : memref<25x16x128xf32, #tpu.memory_space<vmem>>, vector<1x16x128xf32>
    %147 = vector.shape_cast %146 : vector<1x16x128xf32> to vector<16x128xf32>
    %cst_57 = arith.constant dense<0.000000e+00> : vector<1x128xf32>
    %148 = tpu.matmul %145, %147, %cst_57 {dimension_numbers = #tpu.dot_dimension_numbers<[1], [0], [0], [1], [0, 0, 1, 1], [], []>} : vector<1x16xf32>, vector<16x128xf32>, vector<1x128xf32> -> vector<1x128xf32>
    %149 = arith.addf %143, %148 : vector<1x128xf32>
    %150 = vector.extract_strided_slice %118 {offsets = [0, 32, 0], sizes = [1, 1, 16], strides = [1, 1, 1]} : vector<1x144x128xf32> to vector<1x1x16xf32>
    %151 = vector.shape_cast %150 : vector<1x1x16xf32> to vector<1x16xf32>
    %c5 = arith.constant 5 : index
    %c0_58 = arith.constant 0 : index
    %c0_59 = arith.constant 0 : index
    %152 = vector.load %arg6[%c5, %c0_58, %c0_59] : memref<25x16x128xf32, #tpu.memory_space<vmem>>, vector<1x16x128xf32>
    %153 = vector.shape_cast %152 : vector<1x16x128xf32> to vector<16x128xf32>
    %cst_60 = arith.constant dense<0.000000e+00> : vector<1x128xf32>
    %154 = tpu.matmul %151, %153, %cst_60 {dimension_numbers = #tpu.dot_dimension_numbers<[1], [0], [0], [1], [0, 0, 1, 1], [], []>} : vector<1x16xf32>, vector<16x128xf32>, vector<1x128xf32> -> vector<1x128xf32>
    %155 = arith.addf %149, %154 : vector<1x128xf32>
    %156 = vector.extract_strided_slice %118 {offsets = [0, 34, 0], sizes = [1, 1, 16], strides = [1, 1, 1]} : vector<1x144x128xf32> to vector<1x1x16xf32>
    %157 = vector.shape_cast %156 : vector<1x1x16xf32> to vector<1x16xf32>
    %c6 = arith.constant 6 : index
    %c0_61 = arith.constant 0 : index
    %c0_62 = arith.constant 0 : index
    %158 = vector.load %arg6[%c6, %c0_61, %c0_62] : memref<25x16x128xf32, #tpu.memory_space<vmem>>, vector<1x16x128xf32>
    %159 = vector.shape_cast %158 : vector<1x16x128xf32> to vector<16x128xf32>
    %cst_63 = arith.constant dense<0.000000e+00> : vector<1x128xf32>
    %160 = tpu.matmul %157, %159, %cst_63 {dimension_numbers = #tpu.dot_dimension_numbers<[1], [0], [0], [1], [0, 0, 1, 1], [], []>} : vector<1x16xf32>, vector<16x128xf32>, vector<1x128xf32> -> vector<1x128xf32>
    %161 = arith.addf %155, %160 : vector<1x128xf32>
    %162 = vector.extract_strided_slice %118 {offsets = [0, 36, 0], sizes = [1, 1, 16], strides = [1, 1, 1]} : vector<1x144x128xf32> to vector<1x1x16xf32>
    %163 = vector.shape_cast %162 : vector<1x1x16xf32> to vector<1x16xf32>
    %c7 = arith.constant 7 : index
    %c0_64 = arith.constant 0 : index
    %c0_65 = arith.constant 0 : index
    %164 = vector.load %arg6[%c7, %c0_64, %c0_65] : memref<25x16x128xf32, #tpu.memory_space<vmem>>, vector<1x16x128xf32>
    %165 = vector.shape_cast %164 : vector<1x16x128xf32> to vector<16x128xf32>
    %cst_66 = arith.constant dense<0.000000e+00> : vector<1x128xf32>
    %166 = tpu.matmul %163, %165, %cst_66 {dimension_numbers = #tpu.dot_dimension_numbers<[1], [0], [0], [1], [0, 0, 1, 1], [], []>} : vector<1x16xf32>, vector<16x128xf32>, vector<1x128xf32> -> vector<1x128xf32>
    %167 = arith.addf %161, %166 : vector<1x128xf32>
    %168 = vector.extract_strided_slice %118 {offsets = [0, 38, 0], sizes = [1, 1, 16], strides = [1, 1, 1]} : vector<1x144x128xf32> to vector<1x1x16xf32>
    %169 = vector.shape_cast %168 : vector<1x1x16xf32> to vector<1x16xf32>
    %c8 = arith.constant 8 : index
    %c0_67 = arith.constant 0 : index
    %c0_68 = arith.constant 0 : index
    %170 = vector.load %arg6[%c8, %c0_67, %c0_68] : memref<25x16x128xf32, #tpu.memory_space<vmem>>, vector<1x16x128xf32>
    %171 = vector.shape_cast %170 : vector<1x16x128xf32> to vector<16x128xf32>
    %cst_69 = arith.constant dense<0.000000e+00> : vector<1x128xf32>
    %172 = tpu.matmul %169, %171, %cst_69 {dimension_numbers = #tpu.dot_dimension_numbers<[1], [0], [0], [1], [0, 0, 1, 1], [], []>} : vector<1x16xf32>, vector<16x128xf32>, vector<1x128xf32> -> vector<1x128xf32>
    %173 = arith.addf %167, %172 : vector<1x128xf32>
    %174 = vector.extract_strided_slice %118 {offsets = [0, 40, 0], sizes = [1, 1, 16], strides = [1, 1, 1]} : vector<1x144x128xf32> to vector<1x1x16xf32>
    %175 = vector.shape_cast %174 : vector<1x1x16xf32> to vector<1x16xf32>
    %c9 = arith.constant 9 : index
    %c0_70 = arith.constant 0 : index
    %c0_71 = arith.constant 0 : index
    %176 = vector.load %arg6[%c9, %c0_70, %c0_71] : memref<25x16x128xf32, #tpu.memory_space<vmem>>, vector<1x16x128xf32>
    %177 = vector.shape_cast %176 : vector<1x16x128xf32> to vector<16x128xf32>
    %cst_72 = arith.constant dense<0.000000e+00> : vector<1x128xf32>
    %178 = tpu.matmul %175, %177, %cst_72 {dimension_numbers = #tpu.dot_dimension_numbers<[1], [0], [0], [1], [0, 0, 1, 1], [], []>} : vector<1x16xf32>, vector<16x128xf32>, vector<1x128xf32> -> vector<1x128xf32>
    %179 = arith.addf %173, %178 : vector<1x128xf32>
    %180 = vector.extract_strided_slice %118 {offsets = [0, 64, 0], sizes = [1, 1, 16], strides = [1, 1, 1]} : vector<1x144x128xf32> to vector<1x1x16xf32>
    %181 = vector.shape_cast %180 : vector<1x1x16xf32> to vector<1x16xf32>
    %c10 = arith.constant 10 : index
    %c0_73 = arith.constant 0 : index
    %c0_74 = arith.constant 0 : index
    %182 = vector.load %arg6[%c10, %c0_73, %c0_74] : memref<25x16x128xf32, #tpu.memory_space<vmem>>, vector<1x16x128xf32>
    %183 = vector.shape_cast %182 : vector<1x16x128xf32> to vector<16x128xf32>
    %cst_75 = arith.constant dense<0.000000e+00> : vector<1x128xf32>
    %184 = tpu.matmul %181, %183, %cst_75 {dimension_numbers = #tpu.dot_dimension_numbers<[1], [0], [0], [1], [0, 0, 1, 1], [], []>} : vector<1x16xf32>, vector<16x128xf32>, vector<1x128xf32> -> vector<1x128xf32>
    %185 = arith.addf %179, %184 : vector<1x128xf32>
    %186 = vector.extract_strided_slice %118 {offsets = [0, 66, 0], sizes = [1, 1, 16], strides = [1, 1, 1]} : vector<1x144x128xf32> to vector<1x1x16xf32>
    %187 = vector.shape_cast %186 : vector<1x1x16xf32> to vector<1x16xf32>
    %c11 = arith.constant 11 : index
    %c0_76 = arith.constant 0 : index
    %c0_77 = arith.constant 0 : index
    %188 = vector.load %arg6[%c11, %c0_76, %c0_77] : memref<25x16x128xf32, #tpu.memory_space<vmem>>, vector<1x16x128xf32>
    %189 = vector.shape_cast %188 : vector<1x16x128xf32> to vector<16x128xf32>
    %cst_78 = arith.constant dense<0.000000e+00> : vector<1x128xf32>
    %190 = tpu.matmul %187, %189, %cst_78 {dimension_numbers = #tpu.dot_dimension_numbers<[1], [0], [0], [1], [0, 0, 1, 1], [], []>} : vector<1x16xf32>, vector<16x128xf32>, vector<1x128xf32> -> vector<1x128xf32>
    %191 = arith.addf %185, %190 : vector<1x128xf32>
    %192 = vector.extract_strided_slice %118 {offsets = [0, 68, 0], sizes = [1, 1, 16], strides = [1, 1, 1]} : vector<1x144x128xf32> to vector<1x1x16xf32>
    %193 = vector.shape_cast %192 : vector<1x1x16xf32> to vector<1x16xf32>
    %c12 = arith.constant 12 : index
    %c0_79 = arith.constant 0 : index
    %c0_80 = arith.constant 0 : index
    %194 = vector.load %arg6[%c12, %c0_79, %c0_80] : memref<25x16x128xf32, #tpu.memory_space<vmem>>, vector<1x16x128xf32>
    %195 = vector.shape_cast %194 : vector<1x16x128xf32> to vector<16x128xf32>
    %cst_81 = arith.constant dense<0.000000e+00> : vector<1x128xf32>
    %196 = tpu.matmul %193, %195, %cst_81 {dimension_numbers = #tpu.dot_dimension_numbers<[1], [0], [0], [1], [0, 0, 1, 1], [], []>} : vector<1x16xf32>, vector<16x128xf32>, vector<1x128xf32> -> vector<1x128xf32>
    %197 = arith.addf %191, %196 : vector<1x128xf32>
    %198 = vector.extract_strided_slice %118 {offsets = [0, 70, 0], sizes = [1, 1, 16], strides = [1, 1, 1]} : vector<1x144x128xf32> to vector<1x1x16xf32>
    %199 = vector.shape_cast %198 : vector<1x1x16xf32> to vector<1x16xf32>
    %c13 = arith.constant 13 : index
    %c0_82 = arith.constant 0 : index
    %c0_83 = arith.constant 0 : index
    %200 = vector.load %arg6[%c13, %c0_82, %c0_83] : memref<25x16x128xf32, #tpu.memory_space<vmem>>, vector<1x16x128xf32>
    %201 = vector.shape_cast %200 : vector<1x16x128xf32> to vector<16x128xf32>
    %cst_84 = arith.constant dense<0.000000e+00> : vector<1x128xf32>
    %202 = tpu.matmul %199, %201, %cst_84 {dimension_numbers = #tpu.dot_dimension_numbers<[1], [0], [0], [1], [0, 0, 1, 1], [], []>} : vector<1x16xf32>, vector<16x128xf32>, vector<1x128xf32> -> vector<1x128xf32>
    %203 = arith.addf %197, %202 : vector<1x128xf32>
    %204 = vector.extract_strided_slice %118 {offsets = [0, 72, 0], sizes = [1, 1, 16], strides = [1, 1, 1]} : vector<1x144x128xf32> to vector<1x1x16xf32>
    %205 = vector.shape_cast %204 : vector<1x1x16xf32> to vector<1x16xf32>
    %c14 = arith.constant 14 : index
    %c0_85 = arith.constant 0 : index
    %c0_86 = arith.constant 0 : index
    %206 = vector.load %arg6[%c14, %c0_85, %c0_86] : memref<25x16x128xf32, #tpu.memory_space<vmem>>, vector<1x16x128xf32>
    %207 = vector.shape_cast %206 : vector<1x16x128xf32> to vector<16x128xf32>
    %cst_87 = arith.constant dense<0.000000e+00> : vector<1x128xf32>
    %208 = tpu.matmul %205, %207, %cst_87 {dimension_numbers = #tpu.dot_dimension_numbers<[1], [0], [0], [1], [0, 0, 1, 1], [], []>} : vector<1x16xf32>, vector<16x128xf32>, vector<1x128xf32> -> vector<1x128xf32>
    %209 = arith.addf %203, %208 : vector<1x128xf32>
    %210 = vector.extract_strided_slice %118 {offsets = [0, 96, 0], sizes = [1, 1, 16], strides = [1, 1, 1]} : vector<1x144x128xf32> to vector<1x1x16xf32>
    %211 = vector.shape_cast %210 : vector<1x1x16xf32> to vector<1x16xf32>
    %c15 = arith.constant 15 : index
    %c0_88 = arith.constant 0 : index
    %c0_89 = arith.constant 0 : index
    %212 = vector.load %arg6[%c15, %c0_88, %c0_89] : memref<25x16x128xf32, #tpu.memory_space<vmem>>, vector<1x16x128xf32>
    %213 = vector.shape_cast %212 : vector<1x16x128xf32> to vector<16x128xf32>
    %cst_90 = arith.constant dense<0.000000e+00> : vector<1x128xf32>
    %214 = tpu.matmul %211, %213, %cst_90 {dimension_numbers = #tpu.dot_dimension_numbers<[1], [0], [0], [1], [0, 0, 1, 1], [], []>} : vector<1x16xf32>, vector<16x128xf32>, vector<1x128xf32> -> vector<1x128xf32>
    %215 = arith.addf %209, %214 : vector<1x128xf32>
    %216 = vector.extract_strided_slice %118 {offsets = [0, 98, 0], sizes = [1, 1, 16], strides = [1, 1, 1]} : vector<1x144x128xf32> to vector<1x1x16xf32>
    %217 = vector.shape_cast %216 : vector<1x1x16xf32> to vector<1x16xf32>
    %c16 = arith.constant 16 : index
    %c0_91 = arith.constant 0 : index
    %c0_92 = arith.constant 0 : index
    %218 = vector.load %arg6[%c16, %c0_91, %c0_92] : memref<25x16x128xf32, #tpu.memory_space<vmem>>, vector<1x16x128xf32>
    %219 = vector.shape_cast %218 : vector<1x16x128xf32> to vector<16x128xf32>
    %cst_93 = arith.constant dense<0.000000e+00> : vector<1x128xf32>
    %220 = tpu.matmul %217, %219, %cst_93 {dimension_numbers = #tpu.dot_dimension_numbers<[1], [0], [0], [1], [0, 0, 1, 1], [], []>} : vector<1x16xf32>, vector<16x128xf32>, vector<1x128xf32> -> vector<1x128xf32>
    %221 = arith.addf %215, %220 : vector<1x128xf32>
    %222 = vector.extract_strided_slice %118 {offsets = [0, 100, 0], sizes = [1, 1, 16], strides = [1, 1, 1]} : vector<1x144x128xf32> to vector<1x1x16xf32>
    %223 = vector.shape_cast %222 : vector<1x1x16xf32> to vector<1x16xf32>
    %c17 = arith.constant 17 : index
    %c0_94 = arith.constant 0 : index
    %c0_95 = arith.constant 0 : index
    %224 = vector.load %arg6[%c17, %c0_94, %c0_95] : memref<25x16x128xf32, #tpu.memory_space<vmem>>, vector<1x16x128xf32>
    %225 = vector.shape_cast %224 : vector<1x16x128xf32> to vector<16x128xf32>
    %cst_96 = arith.constant dense<0.000000e+00> : vector<1x128xf32>
    %226 = tpu.matmul %223, %225, %cst_96 {dimension_numbers = #tpu.dot_dimension_numbers<[1], [0], [0], [1], [0, 0, 1, 1], [], []>} : vector<1x16xf32>, vector<16x128xf32>, vector<1x128xf32> -> vector<1x128xf32>
    %227 = arith.addf %221, %226 : vector<1x128xf32>
    %228 = vector.extract_strided_slice %118 {offsets = [0, 102, 0], sizes = [1, 1, 16], strides = [1, 1, 1]} : vector<1x144x128xf32> to vector<1x1x16xf32>
    %229 = vector.shape_cast %228 : vector<1x1x16xf32> to vector<1x16xf32>
    %c18 = arith.constant 18 : index
    %c0_97 = arith.constant 0 : index
    %c0_98 = arith.constant 0 : index
    %230 = vector.load %arg6[%c18, %c0_97, %c0_98] : memref<25x16x128xf32, #tpu.memory_space<vmem>>, vector<1x16x128xf32>
    %231 = vector.shape_cast %230 : vector<1x16x128xf32> to vector<16x128xf32>
    %cst_99 = arith.constant dense<0.000000e+00> : vector<1x128xf32>
    %232 = tpu.matmul %229, %231, %cst_99 {dimension_numbers = #tpu.dot_dimension_numbers<[1], [0], [0], [1], [0, 0, 1, 1], [], []>} : vector<1x16xf32>, vector<16x128xf32>, vector<1x128xf32> -> vector<1x128xf32>
    %233 = arith.addf %227, %232 : vector<1x128xf32>
    %234 = vector.extract_strided_slice %118 {offsets = [0, 104, 0], sizes = [1, 1, 16], strides = [1, 1, 1]} : vector<1x144x128xf32> to vector<1x1x16xf32>
    %235 = vector.shape_cast %234 : vector<1x1x16xf32> to vector<1x16xf32>
    %c19 = arith.constant 19 : index
    %c0_100 = arith.constant 0 : index
    %c0_101 = arith.constant 0 : index
    %236 = vector.load %arg6[%c19, %c0_100, %c0_101] : memref<25x16x128xf32, #tpu.memory_space<vmem>>, vector<1x16x128xf32>
    %237 = vector.shape_cast %236 : vector<1x16x128xf32> to vector<16x128xf32>
    %cst_102 = arith.constant dense<0.000000e+00> : vector<1x128xf32>
    %238 = tpu.matmul %235, %237, %cst_102 {dimension_numbers = #tpu.dot_dimension_numbers<[1], [0], [0], [1], [0, 0, 1, 1], [], []>} : vector<1x16xf32>, vector<16x128xf32>, vector<1x128xf32> -> vector<1x128xf32>
    %239 = arith.addf %233, %238 : vector<1x128xf32>
    %240 = vector.extract_strided_slice %118 {offsets = [0, 128, 0], sizes = [1, 1, 16], strides = [1, 1, 1]} : vector<1x144x128xf32> to vector<1x1x16xf32>
    %241 = vector.shape_cast %240 : vector<1x1x16xf32> to vector<1x16xf32>
    %c20 = arith.constant 20 : index
    %c0_103 = arith.constant 0 : index
    %c0_104 = arith.constant 0 : index
    %242 = vector.load %arg6[%c20, %c0_103, %c0_104] : memref<25x16x128xf32, #tpu.memory_space<vmem>>, vector<1x16x128xf32>
    %243 = vector.shape_cast %242 : vector<1x16x128xf32> to vector<16x128xf32>
    %cst_105 = arith.constant dense<0.000000e+00> : vector<1x128xf32>
    %244 = tpu.matmul %241, %243, %cst_105 {dimension_numbers = #tpu.dot_dimension_numbers<[1], [0], [0], [1], [0, 0, 1, 1], [], []>} : vector<1x16xf32>, vector<16x128xf32>, vector<1x128xf32> -> vector<1x128xf32>
    %245 = arith.addf %239, %244 : vector<1x128xf32>
    %246 = vector.extract_strided_slice %118 {offsets = [0, 130, 0], sizes = [1, 1, 16], strides = [1, 1, 1]} : vector<1x144x128xf32> to vector<1x1x16xf32>
    %247 = vector.shape_cast %246 : vector<1x1x16xf32> to vector<1x16xf32>
    %c21 = arith.constant 21 : index
    %c0_106 = arith.constant 0 : index
    %c0_107 = arith.constant 0 : index
    %248 = vector.load %arg6[%c21, %c0_106, %c0_107] : memref<25x16x128xf32, #tpu.memory_space<vmem>>, vector<1x16x128xf32>
    %249 = vector.shape_cast %248 : vector<1x16x128xf32> to vector<16x128xf32>
    %cst_108 = arith.constant dense<0.000000e+00> : vector<1x128xf32>
    %250 = tpu.matmul %247, %249, %cst_108 {dimension_numbers = #tpu.dot_dimension_numbers<[1], [0], [0], [1], [0, 0, 1, 1], [], []>} : vector<1x16xf32>, vector<16x128xf32>, vector<1x128xf32> -> vector<1x128xf32>
    %251 = arith.addf %245, %250 : vector<1x128xf32>
    %252 = vector.extract_strided_slice %118 {offsets = [0, 132, 0], sizes = [1, 1, 16], strides = [1, 1, 1]} : vector<1x144x128xf32> to vector<1x1x16xf32>
    %253 = vector.shape_cast %252 : vector<1x1x16xf32> to vector<1x16xf32>
    %c22 = arith.constant 22 : index
    %c0_109 = arith.constant 0 : index
    %c0_110 = arith.constant 0 : index
    %254 = vector.load %arg6[%c22, %c0_109, %c0_110] : memref<25x16x128xf32, #tpu.memory_space<vmem>>, vector<1x16x128xf32>
    %255 = vector.shape_cast %254 : vector<1x16x128xf32> to vector<16x128xf32>
    %cst_111 = arith.constant dense<0.000000e+00> : vector<1x128xf32>
    %256 = tpu.matmul %253, %255, %cst_111 {dimension_numbers = #tpu.dot_dimension_numbers<[1], [0], [0], [1], [0, 0, 1, 1], [], []>} : vector<1x16xf32>, vector<16x128xf32>, vector<1x128xf32> -> vector<1x128xf32>
    %257 = arith.addf %251, %256 : vector<1x128xf32>
    %258 = vector.extract_strided_slice %118 {offsets = [0, 134, 0], sizes = [1, 1, 16], strides = [1, 1, 1]} : vector<1x144x128xf32> to vector<1x1x16xf32>
    %259 = vector.shape_cast %258 : vector<1x1x16xf32> to vector<1x16xf32>
    %c23 = arith.constant 23 : index
    %c0_112 = arith.constant 0 : index
    %c0_113 = arith.constant 0 : index
    %260 = vector.load %arg6[%c23, %c0_112, %c0_113] : memref<25x16x128xf32, #tpu.memory_space<vmem>>, vector<1x16x128xf32>
    %261 = vector.shape_cast %260 : vector<1x16x128xf32> to vector<16x128xf32>
    %cst_114 = arith.constant dense<0.000000e+00> : vector<1x128xf32>
    %262 = tpu.matmul %259, %261, %cst_114 {dimension_numbers = #tpu.dot_dimension_numbers<[1], [0], [0], [1], [0, 0, 1, 1], [], []>} : vector<1x16xf32>, vector<16x128xf32>, vector<1x128xf32> -> vector<1x128xf32>
    %263 = arith.addf %257, %262 : vector<1x128xf32>
    %264 = vector.extract_strided_slice %118 {offsets = [0, 136, 0], sizes = [1, 1, 16], strides = [1, 1, 1]} : vector<1x144x128xf32> to vector<1x1x16xf32>
    %265 = vector.shape_cast %264 : vector<1x1x16xf32> to vector<1x16xf32>
    %c24 = arith.constant 24 : index
    %c0_115 = arith.constant 0 : index
    %c0_116 = arith.constant 0 : index
    %266 = vector.load %arg6[%c24, %c0_115, %c0_116] : memref<25x16x128xf32, #tpu.memory_space<vmem>>, vector<1x16x128xf32>
    %267 = vector.shape_cast %266 : vector<1x16x128xf32> to vector<16x128xf32>
    %cst_117 = arith.constant dense<0.000000e+00> : vector<1x128xf32>
    %268 = tpu.matmul %265, %267, %cst_117 {dimension_numbers = #tpu.dot_dimension_numbers<[1], [0], [0], [1], [0, 0, 1, 1], [], []>} : vector<1x16xf32>, vector<16x128xf32>, vector<1x128xf32> -> vector<1x128xf32>
    %269 = arith.addf %263, %268 : vector<1x128xf32>
    %c0_118 = arith.constant 0 : index
    %c0_119 = arith.constant 0 : index
    %270 = vector.load %arg7[%c0_118, %c0_119] : memref<1x128xf32, #tpu.memory_space<vmem>>, vector<1x128xf32>
    %271 = arith.addf %269, %270 : vector<1x128xf32>
    %cst_120 = arith.constant 0.000000e+00 : f32
    %272 = vector.broadcast %cst_120 : f32 to vector<1x128xf32>
    %273 = arith.maximumf %271, %272 : vector<1x128xf32>
    %c0_121 = arith.constant 0 : index
    %c0_122 = arith.constant 0 : index
    %274 = vector.load %arg8[%c0_121, %c0_122] : memref<128x128xf32, #tpu.memory_space<vmem>>, vector<128x128xf32>
    %cst_123 = arith.constant dense<0.000000e+00> : vector<1x128xf32>
    %275 = tpu.matmul %273, %274, %cst_123 {dimension_numbers = #tpu.dot_dimension_numbers<[1], [0], [0], [1], [0, 0, 1, 1], [], []>} : vector<1x128xf32>, vector<128x128xf32>, vector<1x128xf32> -> vector<1x128xf32>
    %c0_124 = arith.constant 0 : index
    %c0_125 = arith.constant 0 : index
    %276 = vector.load %arg9[%c0_124, %c0_125] : memref<1x128xf32, #tpu.memory_space<vmem>>, vector<1x128xf32>
    %277 = arith.addf %275, %276 : vector<1x128xf32>
    %cst_126 = arith.constant 0.000000e+00 : f32
    %278 = vector.broadcast %cst_126 : f32 to vector<1x128xf32>
    %279 = arith.maximumf %277, %278 : vector<1x128xf32>
    %c0_127 = arith.constant 0 : index
    %c0_128 = arith.constant 0 : index
    %280 = vector.load %arg10[%c0_127, %c0_128] : memref<128x128xf32, #tpu.memory_space<vmem>>, vector<128x128xf32>
    %cst_129 = arith.constant dense<0.000000e+00> : vector<1x128xf32>
    %281 = tpu.matmul %279, %280, %cst_129 {dimension_numbers = #tpu.dot_dimension_numbers<[1], [0], [0], [1], [0, 0, 1, 1], [], []>} : vector<1x128xf32>, vector<128x128xf32>, vector<1x128xf32> -> vector<1x128xf32>
    %c0_130 = arith.constant 0 : index
    %c0_131 = arith.constant 0 : index
    %282 = vector.load %arg11[%c0_130, %c0_131] : memref<1x128xf32, #tpu.memory_space<vmem>>, vector<1x128xf32>
    %283 = arith.addf %281, %282 : vector<1x128xf32>
    %c0_132 = arith.constant 0 : index
    %c0_133 = arith.constant 0 : index
    %c0_134 = arith.constant 0 : index
    %284 = vector.load %arg12[%c0_132, %c0_133, %c0_134] : memref<1x8x128xf32, #tpu.memory_space<vmem>>, vector<1x1x128xf32>
    %285 = vector.shape_cast %284 : vector<1x1x128xf32> to vector<1x128xf32>
    %286 = vector.shape_cast %283 : vector<1x128xf32> to vector<1x1x128xf32>
    tpu.vector_store %arg12[%c0_132, %c0_133, %c0_134], %286 {strides = array<i32>} : memref<1x8x128xf32, #tpu.memory_space<vmem>>, vector<1x1x128xf32>,
    return
  }
  func.func @transform_0(%arg0: i32) -> (i32, i32, i32) {
    %c0_i32 = arith.constant 0 : i32
    %c0_i32_0 = arith.constant 0 : i32
    %c0_i32_1 = arith.constant 0 : i32
    return %arg0, %c0_i32, %c0_i32_0 : i32, i32, i32
  }
  func.func @transform_1(%arg0: i32) -> (i32, i32) {
    %c0_i32 = arith.constant 0 : i32
    %c0_i32_0 = arith.constant 0 : i32
    %c0_i32_1 = arith.constant 0 : i32
    return %c0_i32, %c0_i32_0 : i32, i32
  }
  func.func @transform_2(%arg0: i32) -> (i32, i32) {
    %c0_i32 = arith.constant 0 : i32
    %c0_i32_0 = arith.constant 0 : i32
    %c0_i32_1 = arith.constant 0 : i32
    return %c0_i32, %c0_i32_0 : i32, i32
  }
  func.func @transform_3(%arg0: i32) -> (i32, i32, i32) {
    %c0_i32 = arith.constant 0 : i32
    %c0_i32_0 = arith.constant 0 : i32
    %c0_i32_1 = arith.constant 0 : i32
    %c0_i32_2 = arith.constant 0 : i32
    return %c0_i32, %c0_i32_0, %c0_i32_1 : i32, i32, i32
  }
  func.func @transform_4(%arg0: i32) -> (i32, i32) {
    %c0_i32 = arith.constant 0 : i32
    %c0_i32_0 = arith.constant 0 : i32
    %c0_i32_1 = arith.constant 0 : i32
    return %c0_i32, %c0_i32_0 : i32, i32
  }
  func.func @transform_5(%arg0: i32) -> (i32, i32, i32) {
    %c0_i32 = arith.constant 0 : i32
    %c0_i32_0 = arith.constant 0 : i32
    %c0_i32_1 = arith.constant 0 : i32
    %c0_i32_2 = arith.constant 0 : i32
    return %c0_i32, %c0_i32_0, %c0_i32_1 : i32, i32, i32
  }
  func.func @transform_6(%arg0: i32) -> (i32, i32) {
    %c0_i32 = arith.constant 0 : i32
    %c0_i32_0 = arith.constant 0 : i32
    %c0_i32_1 = arith.constant 0 : i32
    return %c0_i32, %c0_i32_0 : i32, i32
  }
  func.func @transform_7(%arg0: i32) -> (i32, i32) {
    %c0_i32 = arith.constant 0 : i32
    %c0_i32_0 = arith.constant 0 : i32
    %c0_i32_1 = arith.constant 0 : i32
    return %c0_i32, %c0_i32_0 : i32, i32
  }
  func.func @transform_8(%arg0: i32) -> (i32, i32) {
    %c0_i32 = arith.constant 0 : i32
    %c0_i32_0 = arith.constant 0 : i32
    %c0_i32_1 = arith.constant 0 : i32
    return %c0_i32, %c0_i32_0 : i32, i32
  }
  func.func @transform_9(%arg0: i32) -> (i32, i32) {
    %c0_i32 = arith.constant 0 : i32
    %c0_i32_0 = arith.constant 0 : i32
    %c0_i32_1 = arith.constant 0 : i32
    return %c0_i32, %c0_i32_0 : i32, i32
  }
  func.func @transform_10(%arg0: i32) -> (i32, i32) {
    %c0_i32 = arith.constant 0 : i32
    %c0_i32_0 = arith.constant 0 : i32
    %c0_i32_1 = arith.constant 0 : i32
    return %c0_i32, %c0_i32_0 : i32, i32
  }
  func.func @transform_11(%arg0: i32) -> (i32, i32, i32) {
    %c0_i32 = arith.constant 0 : i32
    %c0_i32_0 = arith.constant 0 : i32
    %c0_i32_1 = arith.constant 0 : i32
    return %arg0, %c0_i32, %c0_i32_0 : i32, i32, i32
  }
}

</mosaic_0001>

<llo_original>
// kernel: net_forward.1
$region0: #{net_forward.1}
  #allocation0 [shape = 'u32[]', space=smem, size = 0x4, offset = 0x4, fixed_abs, tag = 'smem constant byte address 0x4 - core index']
  #allocation1 [shape = 'u32[144,128]{1,0:T(1,128)}', space=vmem, size = 0x12000, scoped, tag = 'internal scratch']
  %s0 = inlined_call_operand.vmem [shape: bf16[2,1024,80], index: 0, kind: input, shape index: {}]
  %s1 = inlined_call_operand.vmem [shape: bf16[80,128], index: 1, kind: input, shape index: {}]
  %s2 = inlined_call_operand.vmem [shape: f32[1,128], index: 2, kind: input, shape index: {}]
  %s3 = inlined_call_operand.vmem [shape: bf16[5,32,128], index: 3, kind: input, shape index: {}]
  %s4 = inlined_call_operand.vmem [shape: f32[1,128], index: 4, kind: input, shape index: {}]
  %s5 = inlined_call_operand.vmem [shape: f32[25,16,128], index: 5, kind: input, shape index: {}]
  %s6 = inlined_call_operand.vmem [shape: f32[1,128], index: 6, kind: input, shape index: {}]
  %s7 = inlined_call_operand.vmem [shape: f32[128,128], index: 7, kind: input, shape index: {}]
  %s8 = inlined_call_operand.vmem [shape: f32[1,128], index: 8, kind: input, shape index: {}]
  %s9 = inlined_call_operand.vmem [shape: f32[128,128], index: 9, kind: input, shape index: {}]
  %s10 = inlined_call_operand.vmem [shape: f32[1,128], index: 10, kind: input, shape index: {}]
  %s11 = inlined_call_operand.vmem [shape: f32[2,8,128], index: 11, kind: output, shape index: {}]
  %s12 = sld [smem:[#allocation0]]
  $region77: #{net_forward.1} parent=0
    _
  %s14 = ssub.s32 1, %s12
  %s15 = scalar_select 0, %s14, %s12
  loop: start=0, step=1, limit=4
  $region2: #{net_forward.1} parent=0 // loop_pre_header
    _
  $region3: #{net_forward.1} parent=0 // loop_header
    %s17 = sphi 0, %s21
    %p18 = scmp.ge.s32.totalorder %s17, 4
    %s27 = sphi 0, %s29
    %s30 = sphi 0, %s27
    %s31 = sphi 0, %s30
    %s47 = sphi 0, %s31
    %s51 = sphi 0, %s51
    %s53 = sphi 0, %s51
    %s54 = sphi 0, %s53
    %s68 = sphi 0, %s54
    %s72 = sphi 0, %s72
    %s74 = sphi 0, %s72
    %s75 = sphi 0, %s74
    %s89 = sphi 0, %s75
    %s93 = sphi 0, %s93
    %s95 = sphi 0, %s93
    %s96 = sphi 0, %s95
    %s110 = sphi 0, %s96
    %s114 = sphi 0, %s114
    %s116 = sphi 0, %s114
    %s117 = sphi 0, %s116
    %s131 = sphi 0, %s117
    %s135 = sphi 0, %s135
    %s137 = sphi 0, %s135
    %s138 = sphi 0, %s137
    %s152 = sphi 0, %s138
    %s156 = sphi 0, %s156
    %s158 = sphi 0, %s156
    %s159 = sphi 0, %s158
    %s173 = sphi 0, %s159
    %s177 = sphi 0, %s177
    %s179 = sphi 0, %s177
    %s180 = sphi 0, %s179
    %s194 = sphi 0, %s180
    %s198 = sphi 0, %s198
    %s200 = sphi 0, %s198
    %s201 = sphi 0, %s200
    %s215 = sphi 0, %s201
    %s219 = sphi 0, %s219
    %s221 = sphi 0, %s219
    %s222 = sphi 0, %s221
    %s236 = sphi 0, %s222
    %s240 = sphi 0, %s240
    %s242 = sphi 0, %s240
    %s243 = sphi 0, %s242
    %s257 = sphi 0, %s243
    %s263 = sphi 0, %s265
    %s266 = sphi 0, %s263
    %s267 = sphi 0, %s266
    %s283 = sphi 0, %s267
  $region4: #{net_forward.1} parent=0 // loop_header_branch
    %20 = sbr.rel (%p18) target = $region8
  $region5: #{net_forward.1} parent=0 // loop_body
    %s22 = ssub.s32 %s17, 1
    %s23 = ssub.s32 %s17, 2
    %s24 = sadd.s32 %s17, 1
    %s25 = ssub.s32 %s17, %s24
    %p26 = scmp.eq.s32.totalorder %s25, 0
    %s28 = sadd.s32 %s27, 1
    %s29 = scalar_select %p26, %s27, %s28
    %p32 = pneg %p26
    %p33 = scmp.eq.s32.totalorder %s17, 1
    %p34 = por %p32, %p33
    %p35 = scmp.ne.s32.totalorder %s27, %s30
    %p36 = scmp.eq.s32.totalorder %s17, 0
    %p37 = por %p35, %p36
    %p38 = scmp.ne.s32.totalorder %s27, %s30
    %p39 = scmp.eq.s32.totalorder %s22, 1
    %p40 = por %p38, %p39
    %p41 = scmp.ne.s32.totalorder %s30, %s31
    %p42 = scmp.eq.s32.totalorder %s22, 0
    %p43 = por %p41, %p42
    %p44 = scmp.ne.s32.totalorder %s30, %s31
    %p45 = scmp.eq.s32.totalorder %s23, 1
    %p46 = por %p44, %p45
    %p48 = scmp.ne.s32.totalorder %s31, %s47
    %p49 = scmp.eq.s32.totalorder %s23, 0
    %p50 = por %p48, %p49
    %s52 = sadd.s32 %s51, 1
    %p55 = scmp.eq.s32.totalorder %s17, 1
    %p56 = scmp.ne.s32.totalorder %s51, %s53
    %p57 = scmp.eq.s32.totalorder %s17, 0
    %p58 = por %p56, %p57
    %p59 = scmp.ne.s32.totalorder %s51, %s53
    %p60 = scmp.eq.s32.totalorder %s22, 1
    %p61 = por %p59, %p60
    %p62 = scmp.ne.s32.totalorder %s53, %s54
    %p63 = scmp.eq.s32.totalorder %s22, 0
    %p64 = por %p62, %p63
    %p65 = scmp.ne.s32.totalorder %s53, %s54
    %p66 = scmp.eq.s32.totalorder %s23, 1
    %p67 = por %p65, %p66
    %p69 = scmp.ne.s32.totalorder %s54, %s68
    %p70 = scmp.eq.s32.totalorder %s23, 0
    %p71 = por %p69, %p70
    %s73 = sadd.s32 %s72, 1
    %p76 = scmp.eq.s32.totalorder %s17, 1
    %p77 = scmp.ne.s32.totalorder %s72, %s74
    %p78 = scmp.eq.s32.totalorder %s17, 0
    %p79 = por %p77, %p78
    %p80 = scmp.ne.s32.totalorder %s72, %s74
    %p81 = scmp.eq.s32.totalorder %s22, 1
    %p82 = por %p80, %p81
    %p83 = scmp.ne.s32.totalorder %s74, %s75
    %p84 = scmp.eq.s32.totalorder %s22, 0
    %p85 = por %p83, %p84
    %p86 = scmp.ne.s32.totalorder %s74, %s75
    %p87 = scmp.eq.s32.totalorder %s23, 1
    %p88 = por %p86, %p87
    %p90 = scmp.ne.s32.totalorder %s75, %s89
    %p91 = scmp.eq.s32.totalorder %s23, 0
    %p92 = por %p90, %p91
    %s94 = sadd.s32 %s93, 1
    %p97 = scmp.eq.s32.totalorder %s17, 1
    %p98 = scmp.ne.s32.totalorder %s93, %s95
    %p99 = scmp.eq.s32.totalorder %s17, 0
    %p100 = por %p98, %p99
    %p101 = scmp.ne.s32.totalorder %s93, %s95
    %p102 = scmp.eq.s32.totalorder %s22, 1
    %p103 = por %p101, %p102
    %p104 = scmp.ne.s32.totalorder %s95, %s96
    %p105 = scmp.eq.s32.totalorder %s22, 0
    %p106 = por %p104, %p105
    %p107 = scmp.ne.s32.totalorder %s95, %s96
    %p108 = scmp.eq.s32.totalorder %s23, 1
    %p109 = por %p107, %p108
    %p111 = scmp.ne.s32.totalorder %s96, %s110
    %p112 = scmp.eq.s32.totalorder %s23, 0
    %p113 = por %p111, %p112
    %s115 = sadd.s32 %s114, 1
    %p118 = scmp.eq.s32.totalorder %s17, 1
    %p119 = scmp.ne.s32.totalorder %s114, %s116
    %p120 = scmp.eq.s32.totalorder %s17, 0
    %p121 = por %p119, %p120
    %p122 = scmp.ne.s32.totalorder %s114, %s116
    %p123 = scmp.eq.s32.totalorder %s22, 1
    %p124 = por %p122, %p123
    %p125 = scmp.ne.s32.totalorder %s116, %s117
    %p126 = scmp.eq.s32.totalorder %s22, 0
    %p127 = por %p125, %p126
    %p128 = scmp.ne.s32.totalorder %s116, %s117
    %p129 = scmp.eq.s32.totalorder %s23, 1
    %p130 = por %p128, %p129
    %p132 = scmp.ne.s32.totalorder %s117, %s131
    %p133 = scmp.eq.s32.totalorder %s23, 0
    %p134 = por %p132, %p133
    %s136 = sadd.s32 %s135, 1
    %p139 = scmp.eq.s32.totalorder %s17, 1
    %p140 = scmp.ne.s32.totalorder %s135, %s137
    %p141 = scmp.eq.s32.totalorder %s17, 0
    %p142 = por %p140, %p141
    %p143 = scmp.ne.s32.totalorder %s135, %s137
    %p144 = scmp.eq.s32.totalorder %s22, 1
    %p145 = por %p143, %p144
    %p146 = scmp.ne.s32.totalorder %s137, %s138
    %p147 = scmp.eq.s32.totalorder %s22, 0
    %p148 = por %p146, %p147
    %p149 = scmp.ne.s32.totalorder %s137, %s138
    %p150 = scmp.eq.s32.totalorder %s23, 1
    %p151 = por %p149, %p150
    %p153 = scmp.ne.s32.totalorder %s138, %s152
    %p154 = scmp.eq.s32.totalorder %s23, 0
    %p155 = por %p153, %p154
    %s157 = sadd.s32 %s156, 1
    %p160 = scmp.eq.s32.totalorder %s17, 1
    %p161 = scmp.ne.s32.totalorder %s156, %s158
    %p162 = scmp.eq.s32.totalorder %s17, 0
    %p163 = por %p161, %p162
    %p164 = scmp.ne.s32.totalorder %s156, %s158
    %p165 = scmp.eq.s32.totalorder %s22, 1
    %p166 = por %p164, %p165
    %p167 = scmp.ne.s32.totalorder %s158, %s159
    %p168 = scmp.eq.s32.totalorder %s22, 0
    %p169 = por %p167, %p168
    %p170 = scmp.ne.s32.totalorder %s158, %s159
    %p171 = scmp.eq.s32.totalorder %s23, 1
    %p172 = por %p170, %p171
    %p174 = scmp.ne.s32.totalorder %s159, %s173
    %p175 = scmp.eq.s32.totalorder %s23, 0
    %p176 = por %p174, %p175
    %s178 = sadd.s32 %s177, 1
    %p181 = scmp.eq.s32.totalorder %s17, 1
    %p182 = scmp.ne.s32.totalorder %s177, %s179
    %p183 = scmp.eq.s32.totalorder %s17, 0
    %p184 = por %p182, %p183
    %p185 = scmp.ne.s32.totalorder %s177, %s179
    %p186 = scmp.eq.s32.totalorder %s22, 1
    %p187 = por %p185, %p186
    %p188 = scmp.ne.s32.totalorder %s179, %s180
    %p189 = scmp.eq.s32.totalorder %s22, 0
    %p190 = por %p188, %p189
    %p191 = scmp.ne.s32.totalorder %s179, %s180
    %p192 = scmp.eq.s32.totalorder %s23, 1
    %p193 = por %p191, %p192
    %p195 = scmp.ne.s32.totalorder %s180, %s194
    %p196 = scmp.eq.s32.totalorder %s23, 0
    %p197 = por %p195, %p196
    %s199 = sadd.s32 %s198, 1
    %p202 = scmp.eq.s32.totalorder %s17, 1
    %p203 = scmp.ne.s32.totalorder %s198, %s200
    %p204 = scmp.eq.s32.totalorder %s17, 0
    %p205 = por %p203, %p204
    %p206 = scmp.ne.s32.totalorder %s198, %s200
    %p207 = scmp.eq.s32.totalorder %s22, 1
    %p208 = por %p206, %p207
    %p209 = scmp.ne.s32.totalorder %s200, %s201
    %p210 = scmp.eq.s32.totalorder %s22, 0
    %p211 = por %p209, %p210
    %p212 = scmp.ne.s32.totalorder %s200, %s201
    %p213 = scmp.eq.s32.totalorder %s23, 1
    %p214 = por %p212, %p213
    %p216 = scmp.ne.s32.totalorder %s201, %s215
    %p217 = scmp.eq.s32.totalorder %s23, 0
    %p218 = por %p216, %p217
    %s220 = sadd.s32 %s219, 1
    %p223 = scmp.eq.s32.totalorder %s17, 1
    %p224 = scmp.ne.s32.totalorder %s219, %s221
    %p225 = scmp.eq.s32.totalorder %s17, 0
    %p226 = por %p224, %p225
    %p227 = scmp.ne.s32.totalorder %s219, %s221
    %p228 = scmp.eq.s32.totalorder %s22, 1
    %p229 = por %p227, %p228
    %p230 = scmp.ne.s32.totalorder %s221, %s222
    %p231 = scmp.eq.s32.totalorder %s22, 0
    %p232 = por %p230, %p231
    %p233 = scmp.ne.s32.totalorder %s221, %s222
    %p234 = scmp.eq.s32.totalorder %s23, 1
    %p235 = por %p233, %p234
    %p237 = scmp.ne.s32.totalorder %s222, %s236
    %p238 = scmp.eq.s32.totalorder %s23, 0
    %p239 = por %p237, %p238
    %s241 = sadd.s32 %s240, 1
    %p244 = scmp.eq.s32.totalorder %s17, 1
    %p245 = scmp.ne.s32.totalorder %s240, %s242
    %p246 = scmp.eq.s32.totalorder %s17, 0
    %p247 = por %p245, %p246
    %p248 = scmp.ne.s32.totalorder %s240, %s242
    %p249 = scmp.eq.s32.totalorder %s22, 1
    %p250 = por %p248, %p249
    %p251 = scmp.ne.s32.totalorder %s242, %s243
    %p252 = scmp.eq.s32.totalorder %s22, 0
    %p253 = por %p251, %p252
    %p254 = scmp.ne.s32.totalorder %s242, %s243
    %p255 = scmp.eq.s32.totalorder %s23, 1
    %p256 = por %p254, %p255
    %p258 = scmp.ne.s32.totalorder %s243, %s257
    %p259 = scmp.eq.s32.totalorder %s23, 0
    %p260 = por %p258, %p259
    %s261 = ssub.s32 %s17, %s24
    %p262 = scmp.eq.s32.totalorder %s261, 0
    %s264 = sadd.s32 %s263, 1
    %s265 = scalar_select %p262, %s263, %s264
    %p268 = pneg %p262
    %p269 = scmp.eq.s32.totalorder %s17, 1
    %p270 = por %p268, %p269
    %p271 = scmp.ne.s32.totalorder %s263, %s266
    %p272 = scmp.eq.s32.totalorder %s17, 0
    %p273 = por %p271, %p272
    %p274 = scmp.ne.s32.totalorder %s263, %s266
    %p275 = scmp.eq.s32.totalorder %s22, 1
    %p276 = por %p274, %p275
    %p277 = scmp.ne.s32.totalorder %s266, %s267
    %p278 = scmp.eq.s32.totalorder %s22, 0
    %p279 = por %p277, %p278
    %p280 = scmp.ne.s32.totalorder %s266, %s267
    %p281 = scmp.eq.s32.totalorder %s23, 1
    %p282 = por %p280, %p281
    %p284 = scmp.ne.s32.totalorder %s267, %s283
    %p285 = scmp.eq.s32.totalorder %s23, 0
    %p286 = por %p284, %p285
    %p287 = scmp.le.s32.totalorder 1, %s17
    %p288 = scmp.lt.s32.totalorder %s17, 3
    %p289 = pnand %p287, %p288
    %p290 = pneg %p289
    // Predicated region
    $region9: #{net_forward.1} parent=5 // pred_check
      _
    $region10: #{net_forward.1} parent=5 // pred_check_branch
      %292 = sbr.rel (%p289) target = $region12
    $region11: #{net_forward.1} parent=5 // pred_region
      %s293 = ssub.s32 %s17, 1
      // Predicated region
      $region13: #{net_forward.1} parent=11 // pred_check
        %p294 = pneg %p64
      $region14: #{net_forward.1} parent=11 // pred_check_branch
        %296 = sbr.rel (%p294) target = $region16
      $region15: #{net_forward.1} parent=11 // pred_region
        _
      $region16: #{net_forward.1} parent=11 // pred_fallthru
        _
      // Predicated region
      $region17: #{net_forward.1} parent=11 // pred_check
        %p297 = pneg %p85
      $region18: #{net_forward.1} parent=11 // pred_check_branch
        %299 = sbr.rel (%p297) target = $region20
      $region19: #{net_forward.1} parent=11 // pred_region
        _
      $region20: #{net_forward.1} parent=11 // pred_fallthru
        _
      // Predicated region
      $region21: #{net_forward.1} parent=11 // pred_check
        %p300 = pneg %p106
      $region22: #{net_forward.1} parent=11 // pred_check_branch
        %302 = sbr.rel (%p300) target = $region24
      $region23: #{net_forward.1} parent=11 // pred_region
        _
      $region24: #{net_forward.1} parent=11 // pred_fallthru
        _
      // Predicated region
      $region25: #{net_forward.1} parent=11 // pred_check
        %p303 = pneg %p127
      $region26: #{net_forward.1} parent=11 // pred_check_branch
        %305 = sbr.rel (%p303) target = $region28
      $region27: #{net_forward.1} parent=11 // pred_region
        _
      $region28: #{net_forward.1} parent=11 // pred_fallthru
        _
      // Predicated region
      $region29: #{net_forward.1} parent=11 // pred_check
        %p306 = pneg %p148
      $region30: #{net_forward.1} parent=11 // pred_check_branch
        %308 = sbr.rel (%p306) target = $region32
      $region31: #{net_forward.1} parent=11 // pred_region
        _
      $region32: #{net_forward.1} parent=11 // pred_fallthru
        _
      // Predicated region
      $region33: #{net_forward.1} parent=11 // pred_check
        %p309 = pneg %p169
      $region34: #{net_forward.1} parent=11 // pred_check_branch
        %311 = sbr.rel (%p309) target = $region36
      $region35: #{net_forward.1} parent=11 // pred_region
        _
      $region36: #{net_forward.1} parent=11 // pred_fallthru
        _
      // Predicated region
      $region37: #{net_forward.1} parent=11 // pred_check
        %p312 = pneg %p190
      $region38: #{net_forward.1} parent=11 // pred_check_branch
        %314 = sbr.rel (%p312) target = $region40
      $region39: #{net_forward.1} parent=11 // pred_region
        _
      $region40: #{net_forward.1} parent=11 // pred_fallthru
        _
      // Predicated region
      $region41: #{net_forward.1} parent=11 // pred_check
        %p315 = pneg %p211
      $region42: #{net_forward.1} parent=11 // pred_check_branch
        %317 = sbr.rel (%p315) target = $region44
      $region43: #{net_forward.1} parent=11 // pred_region
        _
      $region44: #{net_forward.1} parent=11 // pred_fallthru
        _
      // Predicated region
      $region45: #{net_forward.1} parent=11 // pred_check
        %p318 = pneg %p232
      $region46: #{net_forward.1} parent=11 // pred_check_branch
        %320 = sbr.rel (%p318) target = $region48
      $region47: #{net_forward.1} parent=11 // pred_region
        _
      $region48: #{net_forward.1} parent=11 // pred_fallthru
        _
      // Predicated region
      $region49: #{net_forward.1} parent=11 // pred_check
        %p321 = pneg %p253
      $region50: #{net_forward.1} parent=11 // pred_check_branch
        %323 = sbr.rel (%p321) target = $region52
      $region51: #{net_forward.1} parent=11 // pred_region
        _
      $region52: #{net_forward.1} parent=11 // pred_fallthru
        _
    $region12: #{net_forward.1} parent=5 // pred_fallthru
      _
    %p324 = scmp.lt.s32.totalorder %s17, 2
    // Predicated region
    $region53: #{net_forward.1} parent=5 // pred_check
      %p325 = pneg %p324
    $region54: #{net_forward.1} parent=5 // pred_check_branch
      %327 = sbr.rel (%p325) target = $region56
    $region55: #{net_forward.1} parent=5 // pred_region
      // Predicated region
      $region57: #{net_forward.1} parent=55 // pred_check
        %p328 = pneg %p37
      $region58: #{net_forward.1} parent=55 // pred_check_branch
        %330 = sbr.rel (%p328) target = $region60
      $region59: #{net_forward.1} parent=55 // pred_region
        %p331 = scmp.lt.s32.totalorder %s17, 1
        %s332 = scalar_select %p331, %s17, 1
        %s333 = smul.addr %s332, 128
        %s334 = smul.addr %s333, 4
        %s335 = scalar_lea.vmem %s0, %s334
      $region60: #{net_forward.1} parent=55 // pred_fallthru
        _
    $region56: #{net_forward.1} parent=5 // pred_fallthru
      _
    %p336 = scmp.le.s32.totalorder 1, %s17
    %p337 = scmp.lt.s32.totalorder %s17, 3
    %p338 = pnand %p336, %p337
    %p339 = pneg %p338
    // Predicated region
    $region61: #{net_forward.1} parent=5 // pred_check
      _
    $region62: #{net_forward.1} parent=5 // pred_check_branch
      %341 = sbr.rel (%p338) target = $region64
    $region63: #{net_forward.1} parent=5 // pred_region
      %s342 = ssub.s32 %s17, 1
      %p343 = scmp.lt.s32.totalorder %s22, 1
      %s344 = scalar_select %p343, %s22, 1
      %s345 = smul.addr %s344, 128
      %s346 = smul.addr %s345, 4
      %s347 = scalar_lea.vmem %s0, %s346
      %p348 = pneg %p43
      %p349 = pneg %p40
      %p350 = pneg %p64
      %p351 = pneg %p61
      %p352 = pneg %p85
      %p353 = pneg %p82
      %p354 = pneg %p106
      %p355 = pneg %p103
      %p356 = pneg %p127
      %p357 = pneg %p124
      %p358 = pneg %p148
      %p359 = pneg %p145
      %p360 = pneg %p169
      %p361 = pneg %p166
      %p362 = pneg %p190
      %p363 = pneg %p187
      %p364 = pneg %p211
      %p365 = pneg %p208
      %p366 = pneg %p232
      %p367 = pneg %p229
      %p368 = pneg %p253
      %p369 = pneg %p250
      %p370 = pneg %p279
      %p371 = pneg %p276
      %p372 = scmp.lt.s32.totalorder %s22, 1
      %s373 = scalar_select %p372, %s22, 1
      %s374 = smul.addr %s373, 8
      %s375 = scalar_lea.vmem %s11, %s374
      %p376 = scmp.lt.s32.totalorder %s22, 1
      %s377 = scalar_select %p376, %s22, 1
      %s378 = smul.addr %s377, 128
      %s379 = smul.addr %s378, 4
      %s380 = scalar_lea.vmem %s0, %s379
      %p381 = scmp.lt.s32.totalorder %s22, 1
      %s382 = scalar_select %p381, %s22, 1
      %s383 = smul.addr %s382, 8
      %s384 = scalar_lea.vmem %s11, %s383
      %v388 = vld [vmem:[%s380] sm:$0xf]
      %v389 = vld [vmem:[%s380 + $0x4] sm:$0xf]
      %v390 = vld [vmem:[%s380 + $0x8] sm:$0xf]
      %v391 = vld [vmem:[%s380 + $0xc] sm:$0xf]
      %v392 = vld [vmem:[%s380 + $0x10] sm:$0xf]
      %v393 = vld [vmem:[%s380 + $0x14] sm:$0xf]
      %v394 = vld [vmem:[%s380 + $0x18] sm:$0xf]
      %v395 = vld [vmem:[%s380 + $0x1c] sm:$0xf]
      %v396 = vld [vmem:[%s380 + $0x20] sm:$0xf]
      %v397 = vld [vmem:[%s380 + $0x24] sm:$0xf]
      %v398 = vld [vmem:[%s380 + $0x28] sm:$0xf]
      %v399 = vld [vmem:[%s380 + $0x2c] sm:$0xf]
      %v400 = vld [vmem:[%s380 + $0x30] sm:$0xf]
      %v401 = vld [vmem:[%s380 + $0x34] sm:$0xf]
      %v402 = vld [vmem:[%s380 + $0x38] sm:$0xf]
      %v403 = vld [vmem:[%s380 + $0x3c] sm:$0xf]
      %v404 = vld [vmem:[%s380 + $0x40] sm:$0xf]
      %v405 = vld [vmem:[%s380 + $0x44] sm:$0xf]
      %v406 = vld [vmem:[%s380 + $0x48] sm:$0xf]
      %v407 = vld [vmem:[%s380 + $0x4c] sm:$0xf]
      %v408 = vld [vmem:[%s380 + $0x50] sm:$0xf]
      %v409 = vld [vmem:[%s380 + $0x54] sm:$0xf]
      %v410 = vld [vmem:[%s380 + $0x58] sm:$0xf]
      %v411 = vld [vmem:[%s380 + $0x5c] sm:$0xf]
      %v412 = vld [vmem:[%s380 + $0x60] sm:$0xf]
      %v413 = vld [vmem:[%s380 + $0x64] sm:$0xf]
      %v414 = vld [vmem:[%s380 + $0x68] sm:$0xf]
      %v415 = vld [vmem:[%s380 + $0x6c] sm:$0xf]
      %v416 = vld [vmem:[%s380 + $0x70] sm:$0xf]
      %v417 = vld [vmem:[%s380 + $0x74] sm:$0xf]
      %v418 = vld [vmem:[%s380 + $0x78] sm:$0xf]
      %v419 = vld [vmem:[%s380 + $0x7c] sm:$0xf]
      %v420 = vld [vmem:[%s380 + $0x80] sm:$0xf]
      %v421 = vld [vmem:[%s380 + $0x84] sm:$0xf]
      %v422 = vld [vmem:[%s380 + $0x88] sm:$0xf]
      %v423 = vld [vmem:[%s380 + $0x8c] sm:$0xf]
      %v424 = vld [vmem:[%s380 + $0x90] sm:$0xf]
      %v425 = vld [vmem:[%s380 + $0x94] sm:$0xf]
      %v426 = vld [vmem:[%s380 + $0x98] sm:$0xf]
      %v427 = vld [vmem:[%s380 + $0x9c] sm:$0xf]
      %v428 = vld [vmem:[%s380 + $0xa0] sm:$0xf]
      %v429 = vld [vmem:[%s380 + $0xa4] sm:$0xf]
      %v430 = vld [vmem:[%s380 + $0xa8] sm:$0xf]
      %v431 = vld [vmem:[%s380 + $0xac] sm:$0xf]
      %v432 = vld [vmem:[%s380 + $0xb0] sm:$0xf]
      %v433 = vld [vmem:[%s380 + $0xb4] sm:$0xf]
      %v434 = vld [vmem:[%s380 + $0xb8] sm:$0xf]
      %v435 = vld [vmem:[%s380 + $0xbc] sm:$0xf]
      %v436 = vld [vmem:[%s380 + $0xc0] sm:$0xf]
      %v437 = vld [vmem:[%s380 + $0xc4] sm:$0xf]
      %v438 = vld [vmem:[%s380 + $0xc8] sm:$0xf]
      %v439 = vld [vmem:[%s380 + $0xcc] sm:$0xf]
      %v440 = vld [vmem:[%s380 + $0xd0] sm:$0xf]
      %v441 = vld [vmem:[%s380 + $0xd4] sm:$0xf]
      %v442 = vld [vmem:[%s380 + $0xd8] sm:$0xf]
      %v443 = vld [vmem:[%s380 + $0xdc] sm:$0xf]
      %v444 = vld [vmem:[%s380 + $0xe0] sm:$0xf]
      %v445 = vld [vmem:[%s380 + $0xe4] sm:$0xf]
      %v446 = vld [vmem:[%s380 + $0xe8] sm:$0xf]
      %v447 = vld [vmem:[%s380 + $0xec] sm:$0xf]
      %v448 = vld [vmem:[%s380 + $0xf0] sm:$0xf]
      %v449 = vld [vmem:[%s380 + $0xf4] sm:$0xf]
      %v450 = vld [vmem:[%s380 + $0xf8] sm:$0xf]
      %v451 = vld [vmem:[%s380 + $0xfc] sm:$0xf]
      %v452 = vld [vmem:[%s380 + $0x100] sm:$0xf]
      %v453 = vld [vmem:[%s380 + $0x104] sm:$0xf]
      %v454 = vld [vmem:[%s380 + $0x108] sm:$0xf]
      %v455 = vld [vmem:[%s380 + $0x10c] sm:$0xf]
      %v456 = vld [vmem:[%s380 + $0x110] sm:$0xf]
      %v457 = vld [vmem:[%s380 + $0x114] sm:$0xf]
      %v458 = vld [vmem:[%s380 + $0x118] sm:$0xf]
      %v459 = vld [vmem:[%s380 + $0x11c] sm:$0xf]
      %v460 = vld [vmem:[%s380 + $0x120] sm:$0xf]
      %v461 = vld [vmem:[%s380 + $0x124] sm:$0xf]
      %v462 = vld [vmem:[%s380 + $0x128] sm:$0xf]
      %v463 = vld [vmem:[%s380 + $0x12c] sm:$0xf]
      %v464 = vld [vmem:[%s380 + $0x130] sm:$0xf]
      %v465 = vld [vmem:[%s380 + $0x134] sm:$0xf]
      %v466 = vld [vmem:[%s380 + $0x138] sm:$0xf]
      %v467 = vld [vmem:[%s380 + $0x13c] sm:$0xf]
      %v468 = vld [vmem:[%s380 + $0x140] sm:$0xf]
      %v469 = vld [vmem:[%s380 + $0x144] sm:$0xf]
      %v470 = vld [vmem:[%s380 + $0x148] sm:$0xf]
      %v471 = vld [vmem:[%s380 + $0x14c] sm:$0xf]
      %v472 = vld [vmem:[%s380 + $0x150] sm:$0xf]
      %v473 = vld [vmem:[%s380 + $0x154] sm:$0xf]
      %v474 = vld [vmem:[%s380 + $0x158] sm:$0xf]
      %v475 = vld [vmem:[%s380 + $0x15c] sm:$0xf]
      %v476 = vld [vmem:[%s380 + $0x160] sm:$0xf]
      %v477 = vld [vmem:[%s380 + $0x164] sm:$0xf]
      %v478 = vld [vmem:[%s380 + $0x168] sm:$0xf]
      %v479 = vld [vmem:[%s380 + $0x16c] sm:$0xf]
      %v480 = vld [vmem:[%s380 + $0x170] sm:$0xf]
      %v481 = vld [vmem:[%s380 + $0x174] sm:$0xf]
      %v482 = vld [vmem:[%s380 + $0x178] sm:$0xf]
      %v483 = vld [vmem:[%s380 + $0x17c] sm:$0xf]
      %v484 = vld [vmem:[%s380 + $0x180] sm:$0xf]
      %v485 = vld [vmem:[%s380 + $0x184] sm:$0xf]
      %v486 = vld [vmem:[%s380 + $0x188] sm:$0xf]
      %v487 = vld [vmem:[%s380 + $0x18c] sm:$0xf]
      %v488 = vld [vmem:[%s380 + $0x190] sm:$0xf]
      %v489 = vld [vmem:[%s380 + $0x194] sm:$0xf]
      %v490 = vld [vmem:[%s380 + $0x198] sm:$0xf]
      %v491 = vld [vmem:[%s380 + $0x19c] sm:$0xf]
      %v492 = vld [vmem:[%s380 + $0x1a0] sm:$0xf]
      %v493 = vld [vmem:[%s380 + $0x1a4] sm:$0xf]
      %v494 = vld [vmem:[%s380 + $0x1a8] sm:$0xf]
      %v495 = vld [vmem:[%s380 + $0x1ac] sm:$0xf]
      %v496 = vld [vmem:[%s380 + $0x1b0] sm:$0xf]
      %v497 = vld [vmem:[%s380 + $0x1b4] sm:$0xf]
      %v498 = vld [vmem:[%s380 + $0x1b8] sm:$0xf]
      %v499 = vld [vmem:[%s380 + $0x1bc] sm:$0xf]
      %v500 = vld [vmem:[%s380 + $0x1c0] sm:$0xf]
      %v501 = vld [vmem:[%s380 + $0x1c4] sm:$0xf]
      %v502 = vld [vmem:[%s380 + $0x1c8] sm:$0xf]
      %v503 = vld [vmem:[%s380 + $0x1cc] sm:$0xf]
      %v504 = vld [vmem:[%s380 + $0x1d0] sm:$0xf]
      %v505 = vld [vmem:[%s380 + $0x1d4] sm:$0xf]
      %v506 = vld [vmem:[%s380 + $0x1d8] sm:$0xf]
      %v507 = vld [vmem:[%s380 + $0x1dc] sm:$0xf]
      %v508 = vld [vmem:[%s380 + $0x1e0] sm:$0xf]
      %v509 = vld [vmem:[%s380 + $0x1e4] sm:$0xf]
      %v510 = vld [vmem:[%s380 + $0x1e8] sm:$0xf]
      %v511 = vld [vmem:[%s380 + $0x1ec] sm:$0xf]
      %v512 = vld [vmem:[%s380 + $0x1f0] sm:$0xf]
      %v513 = vld [vmem:[%s380 + $0x1f4] sm:$0xf]
      %v514 = vld [vmem:[%s380 + $0x1f8] sm:$0xf]
      %v515 = vld [vmem:[%s380 + $0x1fc] sm:$0xf]
      %v516 = vld [vmem:[%s1] sm:$0xf]
      %v517 = vld [vmem:[%s1 + $0x4] sm:$0xf]
      %v518 = vld [vmem:[%s1 + $0x8] sm:$0xf]
      %v519 = vld [vmem:[%s1 + $0xc] sm:$0xf]
      %v520 = vld [vmem:[%s1 + $0x10] sm:$0xf]
      %v521 = vld [vmem:[%s1 + $0x14] sm:$0xf]
      %v522 = vld [vmem:[%s1 + $0x18] sm:$0xf]
      %v523 = vld [vmem:[%s1 + $0x1c] sm:$0xf]
      %v524 = vld [vmem:[%s1 + $0x20] sm:$0xf]
      %v525 = vld [vmem:[%s1 + $0x24] sm:$0xf]
      %v526 = vld [vmem:[%s2] sm:$0x1]
      %v528 = vlaneseq
      %v529 = vshrl.u32 %v528, 7
      %v530 = vsub.s32 0, %v529
      %v531 = vrot.slane %v526, %v530
      %v661 = vunpack.c.l.b16 %v388
      %v662 = vunpack.c.l.b16 %v389
      %v663 = vunpack.c.l.b16 %v390
      %v664 = vunpack.c.l.b16 %v391
      %v665 = vunpack.c.l.b16 %v392
      %v666 = vunpack.c.l.b16 %v393
      %v667 = vunpack.c.l.b16 %v394
      %v668 = vunpack.c.l.b16 %v395
      %v669 = vunpack.c.l.b16 %v396
      %v670 = vunpack.c.l.b16 %v397
      %v671 = vunpack.c.l.b16 %v398
      %v672 = vunpack.c.l.b16 %v399
      %v673 = vunpack.c.l.b16 %v400
      %v674 = vunpack.c.l.b16 %v401
      %v675 = vunpack.c.l.b16 %v402
      %v676 = vunpack.c.l.b16 %v403
      %v677 = vunpack.c.l.b16 %v404
      %v678 = vunpack.c.l.b16 %v405
      %v679 = vunpack.c.l.b16 %v406
      %v680 = vunpack.c.l.b16 %v407
      %v681 = vunpack.c.l.b16 %v408
      %v682 = vunpack.c.l.b16 %v409
      %v683 = vunpack.c.l.b16 %v410
      %v684 = vunpack.c.l.b16 %v411
      %v685 = vunpack.c.l.b16 %v412
      %v686 = vunpack.c.l.b16 %v413
      %v687 = vunpack.c.l.b16 %v414
      %v688 = vunpack.c.l.b16 %v415
      %v689 = vunpack.c.l.b16 %v416
      %v690 = vunpack.c.l.b16 %v417
      %v691 = vunpack.c.l.b16 %v418
      %v692 = vunpack.c.l.b16 %v419
      %v693 = vunpack.c.l.b16 %v420
      %v694 = vunpack.c.l.b16 %v421
      %v695 = vunpack.c.l.b16 %v422
      %v696 = vunpack.c.l.b16 %v423
      %v697 = vunpack.c.l.b16 %v424
      %v698 = vunpack.c.l.b16 %v425
      %v699 = vunpack.c.l.b16 %v426
      %v700 = vunpack.c.l.b16 %v427
      %v701 = vunpack.c.l.b16 %v428
      %v702 = vunpack.c.l.b16 %v429
      %v703 = vunpack.c.l.b16 %v430
      %v704 = vunpack.c.l.b16 %v431
      %v705 = vunpack.c.l.b16 %v432
      %v706 = vunpack.c.l.b16 %v433
      %v707 = vunpack.c.l.b16 %v434
      %v708 = vunpack.c.l.b16 %v435
      %v709 = vunpack.c.l.b16 %v436
      %v710 = vunpack.c.l.b16 %v437
      %v711 = vunpack.c.l.b16 %v438
      %v712 = vunpack.c.l.b16 %v439
      %v713 = vunpack.c.l.b16 %v440
      %v714 = vunpack.c.l.b16 %v441
      %v715 = vunpack.c.l.b16 %v442
      %v716 = vunpack.c.l.b16 %v443
      %v717 = vunpack.c.l.b16 %v444
      %v718 = vunpack.c.l.b16 %v445
      %v719 = vunpack.c.l.b16 %v446
      %v720 = vunpack.c.l.b16 %v447
      %v721 = vunpack.c.l.b16 %v448
      %v722 = vunpack.c.l.b16 %v449
      %v723 = vunpack.c.l.b16 %v450
      %v724 = vunpack.c.l.b16 %v451
      %v725 = vunpack.c.l.b16 %v452
      %v726 = vunpack.c.l.b16 %v453
      %v727 = vunpack.c.l.b16 %v454
      %v728 = vunpack.c.l.b16 %v455
      %v729 = vunpack.c.l.b16 %v456
      %v730 = vunpack.c.l.b16 %v457
      %v731 = vunpack.c.l.b16 %v458
      %v732 = vunpack.c.l.b16 %v459
      %v733 = vunpack.c.l.b16 %v460
      %v734 = vunpack.c.l.b16 %v461
      %v735 = vunpack.c.l.b16 %v462
      %v736 = vunpack.c.l.b16 %v463
      %v737 = vunpack.c.l.b16 %v464
      %v738 = vunpack.c.l.b16 %v465
      %v739 = vunpack.c.l.b16 %v466
      %v740 = vunpack.c.l.b16 %v467
      %v741 = vunpack.c.l.b16 %v468
      %v742 = vunpack.c.l.b16 %v469
      %v743 = vunpack.c.l.b16 %v470
      %v744 = vunpack.c.l.b16 %v471
      %v745 = vunpack.c.l.b16 %v472
      %v746 = vunpack.c.l.b16 %v473
      %v747 = vunpack.c.l.b16 %v474
      %v748 = vunpack.c.l.b16 %v475
      %v749 = vunpack.c.l.b16 %v476
      %v750 = vunpack.c.l.b16 %v477
      %v751 = vunpack.c.l.b16 %v478
      %v752 = vunpack.c.l.b16 %v479
      %v753 = vunpack.c.l.b16 %v480
      %v754 = vunpack.c.l.b16 %v481
      %v755 = vunpack.c.l.b16 %v482
      %v756 = vunpack.c.l.b16 %v483
      %v757 = vunpack.c.l.b16 %v484
      %v758 = vunpack.c.l.b16 %v485
      %v759 = vunpack.c.l.b16 %v486
      %v760 = vunpack.c.l.b16 %v487
      %v761 = vunpack.c.l.b16 %v488
      %v762 = vunpack.c.l.b16 %v489
      %v763 = vunpack.c.l.b16 %v490
      %v764 = vunpack.c.l.b16 %v491
      %v765 = vunpack.c.l.b16 %v492
      %v766 = vunpack.c.l.b16 %v493
      %v767 = vunpack.c.l.b16 %v494
      %v768 = vunpack.c.l.b16 %v495
      %v769 = vunpack.c.l.b16 %v496
      %v770 = vunpack.c.l.b16 %v497
      %v771 = vunpack.c.l.b16 %v498
      %v772 = vunpack.c.l.b16 %v499
      %v773 = vunpack.c.l.b16 %v500
      %v774 = vunpack.c.l.b16 %v501
      %v775 = vunpack.c.l.b16 %v502
      %v776 = vunpack.c.l.b16 %v503
      %v777 = vunpack.c.l.b16 %v504
      %v778 = vunpack.c.l.b16 %v505
      %v779 = vunpack.c.l.b16 %v506
      %v780 = vunpack.c.l.b16 %v507
      %v781 = vunpack.c.l.b16 %v508
      %v782 = vunpack.c.l.b16 %v509
      %v783 = vunpack.c.l.b16 %v510
      %v784 = vunpack.c.l.b16 %v511
      %v785 = vunpack.c.l.b16 %v512
      %v786 = vunpack.c.l.b16 %v513
      %v787 = vunpack.c.l.b16 %v514
      %v788 = vunpack.c.l.b16 %v515
      %v789 = vpack.c.b16 %v662, %v661
      %v790 = vpack.c.b16 %v664, %v663
      %v791 = vpack.c.b16 %v666, %v665
      %v792 = vpack.c.b16 %v668, %v667
      %v793 = vpack.c.b16 %v670, %v669
      %v794 = vpack.c.b16 %v672, %v671
      %v795 = vpack.c.b16 %v674, %v673
      %v796 = vpack.c.b16 %v676, %v675
      %v797 = vpack.c.b16 %v678, %v677
      %v798 = vpack.c.b16 %v680, %v679
      %v799 = vpack.c.b16 %v682, %v681
      %v800 = vpack.c.b16 %v684, %v683
      %v801 = vpack.c.b16 %v686, %v685
      %v802 = vpack.c.b16 %v688, %v687
      %v803 = vpack.c.b16 %v690, %v689
      %v804 = vpack.c.b16 %v692, %v691
      %v805 = vpack.c.b16 %v694, %v693
      %v806 = vpack.c.b16 %v696, %v695
      %v807 = vpack.c.b16 %v698, %v697
      %v808 = vpack.c.b16 %v700, %v699
      %v809 = vpack.c.b16 %v702, %v701
      %v810 = vpack.c.b16 %v704, %v703
      %v811 = vpack.c.b16 %v706, %v705
      %v812 = vpack.c.b16 %v708, %v707
      %v813 = vpack.c.b16 %v710, %v709
      %v814 = vpack.c.b16 %v712, %v711
      %v815 = vpack.c.b16 %v714, %v713
      %v816 = vpack.c.b16 %v716, %v715
      %v817 = vpack.c.b16 %v718, %v717
      %v818 = vpack.c.b16 %v720, %v719
      %v819 = vpack.c.b16 %v722, %v721
      %v820 = vpack.c.b16 %v724, %v723
      %v821 = vpack.c.b16 %v726, %v725
      %v822 = vpack.c.b16 %v728, %v727
      %v823 = vpack.c.b16 %v730, %v729
      %v824 = vpack.c.b16 %v732, %v731
      %v825 = vpack.c.b16 %v734, %v733
      %v826 = vpack.c.b16 %v736, %v735
      %v827 = vpack.c.b16 %v738, %v737
      %v828 = vpack.c.b16 %v740, %v739
      %v829 = vpack.c.b16 %v742, %v741
      %v830 = vpack.c.b16 %v744, %v743
      %v831 = vpack.c.b16 %v746, %v745
      %v832 = vpack.c.b16 %v748, %v747
      %v833 = vpack.c.b16 %v750, %v749
      %v834 = vpack.c.b16 %v752, %v751
      %v835 = vpack.c.b16 %v754, %v753
      %v836 = vpack.c.b16 %v756, %v755
      %v837 = vpack.c.b16 %v758, %v757
      %v838 = vpack.c.b16 %v760, %v759
      %v839 = vpack.c.b16 %v762, %v761
      %v840 = vpack.c.b16 %v764, %v763
      %v841 = vpack.c.b16 %v766, %v765
      %v842 = vpack.c.b16 %v768, %v767
      %v843 = vpack.c.b16 %v770, %v769
      %v844 = vpack.c.b16 %v772, %v771
      %v845 = vpack.c.b16 %v774, %v773
      %v846 = vpack.c.b16 %v776, %v775
      %v847 = vpack.c.b16 %v778, %v777
      %v848 = vpack.c.b16 %v780, %v779
      %v849 = vpack.c.b16 %v782, %v781
      %v850 = vpack.c.b16 %v784, %v783
      %v851 = vpack.c.b16 %v786, %v785
      %v852 = vpack.c.b16 %v788, %v787
      %v863 = vunpack.c.l.b16 %v516
      %v864 = vunpack.c.l.b16 %v517
      %v865 = vunpack.c.l.b16 %v518
      %v866 = vunpack.c.l.b16 %v519
      %v867 = vunpack.c.l.b16 %v520
      %v868 = vunpack.c.l.b16 %v521
      %v869 = vunpack.c.l.b16 %v522
      %v870 = vunpack.c.l.b16 %v523
      %v871 = vunpack.c.l.b16 %v524
      %v872 = vunpack.c.l.b16 %v525
      %v873 = vpack.c.b16 %v864, %v863
      %v874 = vpack.c.b16 %v866, %v865
      %v875 = vpack.c.b16 %v868, %v867
      %v876 = vpack.c.b16 %v870, %v869
      %v877 = vpack.c.b16 %v872, %v871
      %vm883 = vcmask 654336
      %v885 = vsel %vm883, %v789, 0
      %v888 = vsel %vm883, %v790, 0
      %v891 = vsel %vm883, %v791, 0
      %v894 = vsel %vm883, %v792, 0
      %v897 = vsel %vm883, %v793, 0
      %v900 = vsel %vm883, %v794, 0
      %v903 = vsel %vm883, %v795, 0
      %v906 = vsel %vm883, %v796, 0
      %v909 = vsel %vm883, %v797, 0
      %v912 = vsel %vm883, %v798, 0
      %v915 = vsel %vm883, %v799, 0
      %v918 = vsel %vm883, %v800, 0
      %v921 = vsel %vm883, %v801, 0
      %v924 = vsel %vm883, %v802, 0
      %v927 = vsel %vm883, %v803, 0
      %v930 = vsel %vm883, %v804, 0
      %v933 = vsel %vm883, %v805, 0
      %v936 = vsel %vm883, %v806, 0
      %v939 = vsel %vm883, %v807, 0
      %v942 = vsel %vm883, %v808, 0
      %v945 = vsel %vm883, %v809, 0
      %v948 = vsel %vm883, %v810, 0
      %v951 = vsel %vm883, %v811, 0
      %v954 = vsel %vm883, %v812, 0
      %v957 = vsel %vm883, %v813, 0
      %v960 = vsel %vm883, %v814, 0
      %v963 = vsel %vm883, %v815, 0
      %v966 = vsel %vm883, %v816, 0
      %v969 = vsel %vm883, %v817, 0
      %v972 = vsel %vm883, %v818, 0
      %v975 = vsel %vm883, %v819, 0
      %v978 = vsel %vm883, %v820, 0
      %v981 = vsel %vm883, %v821, 0
      %v984 = vsel %vm883, %v822, 0
      %v987 = vsel %vm883, %v823, 0
      %v990 = vsel %vm883, %v824, 0
      %v993 = vsel %vm883, %v825, 0
      %v996 = vsel %vm883, %v826, 0
      %v999 = vsel %vm883, %v827, 0
      %v1002 = vsel %vm883, %v828, 0
      %v1005 = vsel %vm883, %v829, 0
      %v1008 = vsel %vm883, %v830, 0
      %v1011 = vsel %vm883, %v831, 0
      %v1014 = vsel %vm883, %v832, 0
      %v1017 = vsel %vm883, %v833, 0
      %v1020 = vsel %vm883, %v834, 0
      %v1023 = vsel %vm883, %v835, 0
      %v1026 = vsel %vm883, %v836, 0
      %v1029 = vsel %vm883, %v837, 0
      %v1032 = vsel %vm883, %v838, 0
      %v1035 = vsel %vm883, %v839, 0
      %v1038 = vsel %vm883, %v840, 0
      %v1041 = vsel %vm883, %v841, 0
      %v1044 = vsel %vm883, %v842, 0
      %v1047 = vsel %vm883, %v843, 0
      %v1050 = vsel %vm883, %v844, 0
      %v1053 = vsel %vm883, %v845, 0
      %v1056 = vsel %vm883, %v846, 0
      %v1059 = vsel %vm883, %v847, 0
      %v1062 = vsel %vm883, %v848, 0
      %v1065 = vsel %vm883, %v849, 0
      %v1068 = vsel %vm883, %v850, 0
      %v1071 = vsel %vm883, %v851, 0
      %v1074 = vsel %vm883, %v852, 0
      %1076 = vmatprep.subr.bf16.mxu0 0
      %1077 = vmatpush1.bf16.msra.mxu0 %v873
      %1078 = vmatprep.subr.bf16.mxu0 0
      %1079 = vmatpush1.bf16.msra.mxu0 %v874
      %1080 = vmatprep.subr.bf16.mxu0 0
      %1081 = vmatpush1.bf16.msra.mxu0 %v875
      %1082 = vmatprep.subr.bf16.mxu0 0
      %1083 = vmatpush1.bf16.msra.mxu0 %v876
      %1084 = vmatprep.subr.bf16.mxu0 0
      %1085 = vmatpush1.bf16.msra.mxu0 %v877
      %1086 = vmatprep.subr.bf16.mxu0 0
      %1087 = vmatpush1.bf16.msra.mxu0 0
      %1088 = vmatprep.subr.bf16.mxu0 0
      %1089 = vmatpush1.bf16.msra.mxu0 0
      %1090 = vmatprep.subr.bf16.mxu0 0
      %1091 = vmatpush1.bf16.msra.mxu0 0
      %1092 = vmatprep.subr.bf16.mxu0 0
      %1093 = vmatpush1.bf16.msra.mxu0 0
      %1094 = vmatprep.subr.bf16.mxu0 0
      %1095 = vmatpush1.bf16.msra.mxu0 0
      %1096 = vmatprep.subr.bf16.mxu0 0
      %1097 = vmatpush1.bf16.msra.mxu0 0
      %1098 = vmatprep.subr.bf16.mxu0 0
      %1099 = vmatpush1.bf16.msra.mxu0 0
      %1100 = vmatprep.subr.bf16.mxu0 0
      %1101 = vmatpush1.bf16.msra.mxu0 0
      %1102 = vmatprep.subr.bf16.mxu0 0
      %1103 = vmatpush1.bf16.msra.mxu0 0
      %1104 = vmatprep.subr.bf16.mxu0 0
      %1105 = vmatpush1.bf16.msra.mxu0 0
      %1106 = vmatprep.subr.bf16.mxu0 0
      %1107 = vmatpush1.bf16.msra.mxu0 0
      %1108 = vmatprep.mubr.bf16.mxu0 0
      %1109 = vmatmul.mubr.bf16.gmra.mrb[0].mxu0 %v885
      %v1110 = vpop.f32.mrb[0].mxu0
      %v1111 = vadd.f32 %v531, %v1110
      %v1112 = vpop.f32.mrb[0].mxu0
      %v1113 = vpop.f32.mrb[0].mxu0
      %v1114 = vadd.f32 %v531, %v1113
      %v1115 = vpop.f32.mrb[0].mxu0
      %1116 = vmatprep.mubr.bf16.mxu0 0
      %1117 = vmatmul.mubr.bf16.gmra.mrb[0].mxu0 %v888
      %v1118 = vpop.f32.mrb[0].mxu0
      %v1119 = vadd.f32 %v531, %v1118
      %v1120 = vpop.f32.mrb[0].mxu0
      %v1121 = vpop.f32.mrb[0].mxu0
      %v1122 = vadd.f32 %v531, %v1121
      %v1123 = vpop.f32.mrb[0].mxu0
      %1124 = vmatprep.mubr.bf16.mxu0 0
      %1125 = vmatmul.mubr.bf16.gmra.mrb[0].mxu0 %v891
      %v1126 = vpop.f32.mrb[0].mxu0
      %v1127 = vadd.f32 %v531, %v1126
      %v1128 = vpop.f32.mrb[0].mxu0
      %v1129 = vpop.f32.mrb[0].mxu0
      %v1130 = vadd.f32 %v531, %v1129
      %v1131 = vpop.f32.mrb[0].mxu0
      %1132 = vmatprep.mubr.bf16.mxu0 0
      %1133 = vmatmul.mubr.bf16.gmra.mrb[0].mxu0 %v894
      %v1134 = vpop.f32.mrb[0].mxu0
      %v1135 = vadd.f32 %v531, %v1134
      %v1136 = vpop.f32.mrb[0].mxu0
      %v1137 = vpop.f32.mrb[0].mxu0
      %v1138 = vadd.f32 %v531, %v1137
      %v1139 = vpop.f32.mrb[0].mxu0
      %1140 = vmatprep.mubr.bf16.mxu0 0
      %1141 = vmatmul.mubr.bf16.gmra.mrb[0].mxu0 %v897
      %v1142 = vpop.f32.mrb[0].mxu0
      %v1143 = vadd.f32 %v531, %v1142
      %v1144 = vpop.f32.mrb[0].mxu0
      %v1145 = vpop.f32.mrb[0].mxu0
      %v1146 = vadd.f32 %v531, %v1145
      %v1147 = vpop.f32.mrb[0].mxu0
      %1148 = vmatprep.mubr.bf16.mxu0 0
      %1149 = vmatmul.mubr.bf16.gmra.mrb[0].mxu0 %v900
      %v1150 = vpop.f32.mrb[0].mxu0
      %v1151 = vadd.f32 %v531, %v1150
      %v1152 = vpop.f32.mrb[0].mxu0
      %v1153 = vpop.f32.mrb[0].mxu0
      %v1154 = vadd.f32 %v531, %v1153
      %v1155 = vpop.f32.mrb[0].mxu0
      %1156 = vmatprep.mubr.bf16.mxu0 0
      %1157 = vmatmul.mubr.bf16.gmra.mrb[0].mxu0 %v903
      %v1158 = vpop.f32.mrb[0].mxu0
      %v1159 = vadd.f32 %v531, %v1158
      %v1160 = vpop.f32.mrb[0].mxu0
      %v1161 = vpop.f32.mrb[0].mxu0
      %v1162 = vadd.f32 %v531, %v1161
      %v1163 = vpop.f32.mrb[0].mxu0
      %1164 = vmatprep.mubr.bf16.mxu0 0
      %1165 = vmatmul.mubr.bf16.gmra.mrb[0].mxu0 %v906
      %v1166 = vpop.f32.mrb[0].mxu0
      %v1167 = vadd.f32 %v531, %v1166
      %v1168 = vpop.f32.mrb[0].mxu0
      %v1169 = vpop.f32.mrb[0].mxu0
      %v1170 = vadd.f32 %v531, %v1169
      %v1171 = vpop.f32.mrb[0].mxu0
      %1172 = vmatprep.mubr.bf16.mxu0 0
      %1173 = vmatmul.mubr.bf16.gmra.mrb[0].mxu0 %v909
      %v1174 = vpop.f32.mrb[0].mxu0
      %v1175 = vadd.f32 %v531, %v1174
      %v1176 = vpop.f32.mrb[0].mxu0
      %v1177 = vpop.f32.mrb[0].mxu0
      %v1178 = vadd.f32 %v531, %v1177
      %v1179 = vpop.f32.mrb[0].mxu0
      %1180 = vmatprep.mubr.bf16.mxu0 0
      %1181 = vmatmul.mubr.bf16.gmra.mrb[0].mxu0 %v912
      %v1182 = vpop.f32.mrb[0].mxu0
      %v1183 = vadd.f32 %v531, %v1182
      %v1184 = vpop.f32.mrb[0].mxu0
      %v1185 = vpop.f32.mrb[0].mxu0
      %v1186 = vadd.f32 %v531, %v1185
      %v1187 = vpop.f32.mrb[0].mxu0
      %1188 = vmatprep.mubr.bf16.mxu0 0
      %1189 = vmatmul.mubr.bf16.gmra.mrb[0].mxu0 %v915
      %v1190 = vpop.f32.mrb[0].mxu0
      %v1191 = vadd.f32 %v531, %v1190
      %v1192 = vpop.f32.mrb[0].mxu0
      %v1193 = vpop.f32.mrb[0].mxu0
      %v1194 = vadd.f32 %v531, %v1193
      %v1195 = vpop.f32.mrb[0].mxu0
      %1196 = vmatprep.mubr.bf16.mxu0 0
      %1197 = vmatmul.mubr.bf16.gmra.mrb[0].mxu0 %v918
      %v1198 = vpop.f32.mrb[0].mxu0
      %v1199 = vadd.f32 %v531, %v1198
      %v1200 = vpop.f32.mrb[0].mxu0
      %v1201 = vpop.f32.mrb[0].mxu0
      %v1202 = vadd.f32 %v531, %v1201
      %v1203 = vpop.f32.mrb[0].mxu0
      %1204 = vmatprep.mubr.bf16.mxu0 0
      %1205 = vmatmul.mubr.bf16.gmra.mrb[0].mxu0 %v921
      %v1206 = vpop.f32.mrb[0].mxu0
      %v1207 = vadd.f32 %v531, %v1206
      %v1208 = vpop.f32.mrb[0].mxu0
      %v1209 = vpop.f32.mrb[0].mxu0
      %v1210 = vadd.f32 %v531, %v1209
      %v1211 = vpop.f32.mrb[0].mxu0
      %1212 = vmatprep.mubr.bf16.mxu0 0
      %1213 = vmatmul.mubr.bf16.gmra.mrb[0].mxu0 %v924
      %v1214 = vpop.f32.mrb[0].mxu0
      %v1215 = vadd.f32 %v531, %v1214
      %v1216 = vpop.f32.mrb[0].mxu0
      %v1217 = vpop.f32.mrb[0].mxu0
      %v1218 = vadd.f32 %v531, %v1217
      %v1219 = vpop.f32.mrb[0].mxu0
      %1220 = vmatprep.mubr.bf16.mxu0 0
      %1221 = vmatmul.mubr.bf16.gmra.mrb[0].mxu0 %v927
      %v1222 = vpop.f32.mrb[0].mxu0
      %v1223 = vadd.f32 %v531, %v1222
      %v1224 = vpop.f32.mrb[0].mxu0
      %v1225 = vpop.f32.mrb[0].mxu0
      %v1226 = vadd.f32 %v531, %v1225
      %v1227 = vpop.f32.mrb[0].mxu0
      %1228 = vmatprep.mubr.bf16.mxu0 0
      %1229 = vmatmul.mubr.bf16.gmra.mrb[0].mxu0 %v930
      %v1230 = vpop.f32.mrb[0].mxu0
      %v1231 = vpop.f32.mrb[0].mxu0
      %v1232 = vpop.f32.mrb[0].mxu0
      %v1233 = vpop.f32.mrb[0].mxu0
      %1234 = vmatprep.mubr.bf16.mxu0 0
      %1235 = vmatmul.mubr.bf16.gmra.mrb[0].mxu0 %v933
      %v1236 = vpop.f32.mrb[0].mxu0
      %v1237 = vadd.f32 %v531, %v1236
      %v1238 = vpop.f32.mrb[0].mxu0
      %v1239 = vpop.f32.mrb[0].mxu0
      %v1240 = vadd.f32 %v531, %v1239
      %v1241 = vpop.f32.mrb[0].mxu0
      %1242 = vmatprep.mubr.bf16.mxu0 0
      %1243 = vmatmul.mubr.bf16.gmra.mrb[0].mxu0 %v936
      %v1244 = vpop.f32.mrb[0].mxu0
      %v1245 = vadd.f32 %v531, %v1244
      %v1246 = vpop.f32.mrb[0].mxu0
      %v1247 = vpop.f32.mrb[0].mxu0
      %v1248 = vadd.f32 %v531, %v1247
      %v1249 = vpop.f32.mrb[0].mxu0
      %1250 = vmatprep.mubr.bf16.mxu0 0
      %1251 = vmatmul.mubr.bf16.gmra.mrb[0].mxu0 %v939
      %v1252 = vpop.f32.mrb[0].mxu0
      %v1253 = vadd.f32 %v531, %v1252
      %v1254 = vpop.f32.mrb[0].mxu0
      %v1255 = vpop.f32.mrb[0].mxu0
      %v1256 = vadd.f32 %v531, %v1255
      %v1257 = vpop.f32.mrb[0].mxu0
      %1258 = vmatprep.mubr.bf16.mxu0 0
      %1259 = vmatmul.mubr.bf16.gmra.mrb[0].mxu0 %v942
      %v1260 = vpop.f32.mrb[0].mxu0
      %v1261 = vadd.f32 %v531, %v1260
      %v1262 = vpop.f32.mrb[0].mxu0
      %v1263 = vpop.f32.mrb[0].mxu0
      %v1264 = vadd.f32 %v531, %v1263
      %v1265 = vpop.f32.mrb[0].mxu0
      %1266 = vmatprep.mubr.bf16.mxu0 0
      %1267 = vmatmul.mubr.bf16.gmra.mrb[0].mxu0 %v945
      %v1268 = vpop.f32.mrb[0].mxu0
      %v1269 = vadd.f32 %v531, %v1268
      %v1270 = vpop.f32.mrb[0].mxu0
      %v1271 = vpop.f32.mrb[0].mxu0
      %v1272 = vadd.f32 %v531, %v1271
      %v1273 = vpop.f32.mrb[0].mxu0
      %1274 = vmatprep.mubr.bf16.mxu0 0
      %1275 = vmatmul.mubr.bf16.gmra.mrb[0].mxu0 %v948
      %v1276 = vpop.f32.mrb[0].mxu0
      %v1277 = vadd.f32 %v531, %v1276
      %v1278 = vpop.f32.mrb[0].mxu0
      %v1279 = vpop.f32.mrb[0].mxu0
      %v1280 = vadd.f32 %v531, %v1279
      %v1281 = vpop.f32.mrb[0].mxu0
      %1282 = vmatprep.mubr.bf16.mxu0 0
      %1283 = vmatmul.mubr.bf16.gmra.mrb[0].mxu0 %v951
      %v1284 = vpop.f32.mrb[0].mxu0
      %v1285 = vadd.f32 %v531, %v1284
      %v1286 = vpop.f32.mrb[0].mxu0
      %v1287 = vpop.f32.mrb[0].mxu0
      %v1288 = vadd.f32 %v531, %v1287
      %v1289 = vpop.f32.mrb[0].mxu0
      %1290 = vmatprep.mubr.bf16.mxu0 0
      %1291 = vmatmul.mubr.bf16.gmra.mrb[0].mxu0 %v954
      %v1292 = vpop.f32.mrb[0].mxu0
      %v1293 = vadd.f32 %v531, %v1292
      %v1294 = vpop.f32.mrb[0].mxu0
      %v1295 = vpop.f32.mrb[0].mxu0
      %v1296 = vadd.f32 %v531, %v1295
      %v1297 = vpop.f32.mrb[0].mxu0
      %1298 = vmatprep.mubr.bf16.mxu0 0
      %1299 = vmatmul.mubr.bf16.gmra.mrb[0].mxu0 %v957
      %v1300 = vpop.f32.mrb[0].mxu0
      %v1301 = vadd.f32 %v531, %v1300
      %v1302 = vpop.f32.mrb[0].mxu0
      %v1303 = vpop.f32.mrb[0].mxu0
      %v1304 = vadd.f32 %v531, %v1303
      %v1305 = vpop.f32.mrb[0].mxu0
      %1306 = vmatprep.mubr.bf16.mxu0 0
      %1307 = vmatmul.mubr.bf16.gmra.mrb[0].mxu0 %v960
      %v1308 = vpop.f32.mrb[0].mxu0
      %v1309 = vadd.f32 %v531, %v1308
      %v1310 = vpop.f32.mrb[0].mxu0
      %v1311 = vpop.f32.mrb[0].mxu0
      %v1312 = vadd.f32 %v531, %v1311
      %v1313 = vpop.f32.mrb[0].mxu0
      %1314 = vmatprep.mubr.bf16.mxu0 0
      %1315 = vmatmul.mubr.bf16.gmra.mrb[0].mxu0 %v963
      %v1316 = vpop.f32.mrb[0].mxu0
      %v1317 = vadd.f32 %v531, %v1316
      %v1318 = vpop.f32.mrb[0].mxu0
      %v1319 = vpop.f32.mrb[0].mxu0
      %v1320 = vadd.f32 %v531, %v1319
      %v1321 = vpop.f32.mrb[0].mxu0
      %1322 = vmatprep.mubr.bf16.mxu0 0
      %1323 = vmatmul.mubr.bf16.gmra.mrb[0].mxu0 %v966
      %v1324 = vpop.f32.mrb[0].mxu0
      %v1325 = vadd.f32 %v531, %v1324
      %v1326 = vpop.f32.mrb[0].mxu0
      %v1327 = vpop.f32.mrb[0].mxu0
      %v1328 = vadd.f32 %v531, %v1327
      %v1329 = vpop.f32.mrb[0].mxu0
      %1330 = vmatprep.mubr.bf16.mxu0 0
      %1331 = vmatmul.mubr.bf16.gmra.mrb[0].mxu0 %v969
      %v1332 = vpop.f32.mrb[0].mxu0
      %v1333 = vadd.f32 %v531, %v1332
      %v1334 = vpop.f32.mrb[0].mxu0
      %v1335 = vpop.f32.mrb[0].mxu0
      %v1336 = vadd.f32 %v531, %v1335
      %v1337 = vpop.f32.mrb[0].mxu0
      %1338 = vmatprep.mubr.bf16.mxu0 0
      %1339 = vmatmul.mubr.bf16.gmra.mrb[0].mxu0 %v972
      %v1340 = vpop.f32.mrb[0].mxu0
      %v1341 = vadd.f32 %v531, %v1340
      %v1342 = vpop.f32.mrb[0].mxu0
      %v1343 = vpop.f32.mrb[0].mxu0
      %v1344 = vadd.f32 %v531, %v1343
      %v1345 = vpop.f32.mrb[0].mxu0
      %1346 = vmatprep.mubr.bf16.mxu0 0
      %1347 = vmatmul.mubr.bf16.gmra.mrb[0].mxu0 %v975
      %v1348 = vpop.f32.mrb[0].mxu0
      %v1349 = vadd.f32 %v531, %v1348
      %v1350 = vpop.f32.mrb[0].mxu0
      %v1351 = vpop.f32.mrb[0].mxu0
      %v1352 = vadd.f32 %v531, %v1351
      %v1353 = vpop.f32.mrb[0].mxu0
      %1354 = vmatprep.mubr.bf16.mxu0 0
      %1355 = vmatmul.mubr.bf16.gmra.mrb[0].mxu0 %v978
      %v1356 = vpop.f32.mrb[0].mxu0
      %v1357 = vpop.f32.mrb[0].mxu0
      %v1358 = vpop.f32.mrb[0].mxu0
      %v1359 = vpop.f32.mrb[0].mxu0
      %1360 = vmatprep.mubr.bf16.mxu0 0
      %1361 = vmatmul.mubr.bf16.gmra.mrb[0].mxu0 %v981
      %v1362 = vpop.f32.mrb[0].mxu0
      %v1363 = vadd.f32 %v531, %v1362
      %v1364 = vpop.f32.mrb[0].mxu0
      %v1365 = vpop.f32.mrb[0].mxu0
      %v1366 = vadd.f32 %v531, %v1365
      %v1367 = vpop.f32.mrb[0].mxu0
      %1368 = vmatprep.mubr.bf16.mxu0 0
      %1369 = vmatmul.mubr.bf16.gmra.mrb[0].mxu0 %v984
      %v1370 = vpop.f32.mrb[0].mxu0
      %v1371 = vadd.f32 %v531, %v1370
      %v1372 = vpop.f32.mrb[0].mxu0
      %v1373 = vpop.f32.mrb[0].mxu0
      %v1374 = vadd.f32 %v531, %v1373
      %v1375 = vpop.f32.mrb[0].mxu0
      %1376 = vmatprep.mubr.bf16.mxu0 0
      %1377 = vmatmul.mubr.bf16.gmra.mrb[0].mxu0 %v987
      %v1378 = vpop.f32.mrb[0].mxu0
      %v1379 = vadd.f32 %v531, %v1378
      %v1380 = vpop.f32.mrb[0].mxu0
      %v1381 = vpop.f32.mrb[0].mxu0
      %v1382 = vadd.f32 %v531, %v1381
      %v1383 = vpop.f32.mrb[0].mxu0
      %1384 = vmatprep.mubr.bf16.mxu0 0
      %1385 = vmatmul.mubr.bf16.gmra.mrb[0].mxu0 %v990
      %v1386 = vpop.f32.mrb[0].mxu0
      %v1387 = vadd.f32 %v531, %v1386
      %v1388 = vpop.f32.mrb[0].mxu0
      %v1389 = vpop.f32.mrb[0].mxu0
      %v1390 = vadd.f32 %v531, %v1389
      %v1391 = vpop.f32.mrb[0].mxu0
      %1392 = vmatprep.mubr.bf16.mxu0 0
      %1393 = vmatmul.mubr.bf16.gmra.mrb[0].mxu0 %v993
      %v1394 = vpop.f32.mrb[0].mxu0
      %v1395 = vadd.f32 %v531, %v1394
      %v1396 = vpop.f32.mrb[0].mxu0
      %v1397 = vpop.f32.mrb[0].mxu0
      %v1398 = vadd.f32 %v531, %v1397
      %v1399 = vpop.f32.mrb[0].mxu0
      %1400 = vmatprep.mubr.bf16.mxu0 0
      %1401 = vmatmul.mubr.bf16.gmra.mrb[0].mxu0 %v996
      %v1402 = vpop.f32.mrb[0].mxu0
      %v1403 = vadd.f32 %v531, %v1402
      %v1404 = vpop.f32.mrb[0].mxu0
      %v1405 = vpop.f32.mrb[0].mxu0
      %v1406 = vadd.f32 %v531, %v1405
      %v1407 = vpop.f32.mrb[0].mxu0
      %1408 = vmatprep.mubr.bf16.mxu0 0
      %1409 = vmatmul.mubr.bf16.gmra.mrb[0].mxu0 %v999
      %v1410 = vpop.f32.mrb[0].mxu0
      %v1411 = vadd.f32 %v531, %v1410
      %v1412 = vpop.f32.mrb[0].mxu0
      %v1413 = vpop.f32.mrb[0].mxu0
      %v1414 = vadd.f32 %v531, %v1413
      %v1415 = vpop.f32.mrb[0].mxu0
      %1416 = vmatprep.mubr.bf16.mxu0 0
      %1417 = vmatmul.mubr.bf16.gmra.mrb[0].mxu0 %v1002
      %v1418 = vpop.f32.mrb[0].mxu0
      %v1419 = vadd.f32 %v531, %v1418
      %v1420 = vpop.f32.mrb[0].mxu0
      %v1421 = vpop.f32.mrb[0].mxu0
      %v1422 = vadd.f32 %v531, %v1421
      %v1423 = vpop.f32.mrb[0].mxu0
      %1424 = vmatprep.mubr.bf16.mxu0 0
      %1425 = vmatmul.mubr.bf16.gmra.mrb[0].mxu0 %v1005
      %v1426 = vpop.f32.mrb[0].mxu0
      %v1427 = vadd.f32 %v531, %v1426
      %v1428 = vpop.f32.mrb[0].mxu0
      %v1429 = vpop.f32.mrb[0].mxu0
      %v1430 = vadd.f32 %v531, %v1429
      %v1431 = vpop.f32.mrb[0].mxu0
      %1432 = vmatprep.mubr.bf16.mxu0 0
      %1433 = vmatmul.mubr.bf16.gmra.mrb[0].mxu0 %v1008
      %v1434 = vpop.f32.mrb[0].mxu0
      %v1435 = vadd.f32 %v531, %v1434
      %v1436 = vpop.f32.mrb[0].mxu0
      %v1437 = vpop.f32.mrb[0].mxu0
      %v1438 = vadd.f32 %v531, %v1437
      %v1439 = vpop.f32.mrb[0].mxu0
      %1440 = vmatprep.mubr.bf16.mxu0 0
      %1441 = vmatmul.mubr.bf16.gmra.mrb[0].mxu0 %v1011
      %v1442 = vpop.f32.mrb[0].mxu0
      %v1443 = vadd.f32 %v531, %v1442
      %v1444 = vpop.f32.mrb[0].mxu0
      %v1445 = vpop.f32.mrb[0].mxu0
      %v1446 = vadd.f32 %v531, %v1445
      %v1447 = vpop.f32.mrb[0].mxu0
      %1448 = vmatprep.mubr.bf16.mxu0 0
      %1449 = vmatmul.mubr.bf16.gmra.mrb[0].mxu0 %v1014
      %v1450 = vpop.f32.mrb[0].mxu0
      %v1451 = vadd.f32 %v531, %v1450
      %v1452 = vpop.f32.mrb[0].mxu0
      %v1453 = vpop.f32.mrb[0].mxu0
      %v1454 = vadd.f32 %v531, %v1453
      %v1455 = vpop.f32.mrb[0].mxu0
      %1456 = vmatprep.mubr.bf16.mxu0 0
      %1457 = vmatmul.mubr.bf16.gmra.mrb[0].mxu0 %v1017
      %v1458 = vpop.f32.mrb[0].mxu0
      %v1459 = vadd.f32 %v531, %v1458
      %v1460 = vpop.f32.mrb[0].mxu0
      %v1461 = vpop.f32.mrb[0].mxu0
      %v1462 = vadd.f32 %v531, %v1461
      %v1463 = vpop.f32.mrb[0].mxu0
      %1464 = vmatprep.mubr.bf16.mxu0 0
      %1465 = vmatmul.mubr.bf16.gmra.mrb[0].mxu0 %v1020
      %v1466 = vpop.f32.mrb[0].mxu0
      %v1467 = vadd.f32 %v531, %v1466
      %v1468 = vpop.f32.mrb[0].mxu0
      %v1469 = vpop.f32.mrb[0].mxu0
      %v1470 = vadd.f32 %v531, %v1469
      %v1471 = vpop.f32.mrb[0].mxu0
      %1472 = vmatprep.mubr.bf16.mxu0 0
      %1473 = vmatmul.mubr.bf16.gmra.mrb[0].mxu0 %v1023
      %v1474 = vpop.f32.mrb[0].mxu0
      %v1475 = vadd.f32 %v531, %v1474
      %v1476 = vpop.f32.mrb[0].mxu0
      %v1477 = vpop.f32.mrb[0].mxu0
      %v1478 = vadd.f32 %v531, %v1477
      %v1479 = vpop.f32.mrb[0].mxu0
      %1480 = vmatprep.mubr.bf16.mxu0 0
      %1481 = vmatmul.mubr.bf16.gmra.mrb[0].mxu0 %v1026
      %v1482 = vpop.f32.mrb[0].mxu0
      %v1483 = vpop.f32.mrb[0].mxu0
      %v1484 = vpop.f32.mrb[0].mxu0
      %v1485 = vpop.f32.mrb[0].mxu0
      %1486 = vmatprep.mubr.bf16.mxu0 0
      %1487 = vmatmul.mubr.bf16.gmra.mrb[0].mxu0 %v1029
      %v1488 = vpop.f32.mrb[0].mxu0
      %v1489 = vadd.f32 %v531, %v1488
      %v1490 = vpop.f32.mrb[0].mxu0
      %v1491 = vpop.f32.mrb[0].mxu0
      %v1492 = vadd.f32 %v531, %v1491
      %v1493 = vpop.f32.mrb[0].mxu0
      %1494 = vmatprep.mubr.bf16.mxu0 0
      %1495 = vmatmul.mubr.bf16.gmra.mrb[0].mxu0 %v1032
      %v1496 = vpop.f32.mrb[0].mxu0
      %v1497 = vadd.f32 %v531, %v1496
      %v1498 = vpop.f32.mrb[0].mxu0
      %v1499 = vpop.f32.mrb[0].mxu0
      %v1500 = vadd.f32 %v531, %v1499
      %v1501 = vpop.f32.mrb[0].mxu0
      %1502 = vmatprep.mubr.bf16.mxu0 0
      %1503 = vmatmul.mubr.bf16.gmra.mrb[0].mxu0 %v1035
      %v1504 = vpop.f32.mrb[0].mxu0
      %v1505 = vadd.f32 %v531, %v1504
      %v1506 = vpop.f32.mrb[0].mxu0
      %v1507 = vpop.f32.mrb[0].mxu0
      %v1508 = vadd.f32 %v531, %v1507
      %v1509 = vpop.f32.mrb[0].mxu0
      %1510 = vmatprep.mubr.bf16.mxu0 0
      %1511 = vmatmul.mubr.bf16.gmra.mrb[0].mxu0 %v1038
      %v1512 = vpop.f32.mrb[0].mxu0
      %v1513 = vadd.f32 %v531, %v1512
      %v1514 = vpop.f32.mrb[0].mxu0
      %v1515 = vpop.f32.mrb[0].mxu0
      %v1516 = vadd.f32 %v531, %v1515
      %v1517 = vpop.f32.mrb[0].mxu0
      %1518 = vmatprep.mubr.bf16.mxu0 0
      %1519 = vmatmul.mubr.bf16.gmra.mrb[0].mxu0 %v1041
      %v1520 = vpop.f32.mrb[0].mxu0
      %v1521 = vadd.f32 %v531, %v1520
      %v1522 = vpop.f32.mrb[0].mxu0
      %v1523 = vpop.f32.mrb[0].mxu0
      %v1524 = vadd.f32 %v531, %v1523
      %v1525 = vpop.f32.mrb[0].mxu0
      %1526 = vmatprep.mubr.bf16.mxu0 0
      %1527 = vmatmul.mubr.bf16.gmra.mrb[0].mxu0 %v1044
      %v1528 = vpop.f32.mrb[0].mxu0
      %v1529 = vadd.f32 %v531, %v1528
      %v1530 = vpop.f32.mrb[0].mxu0
      %v1531 = vpop.f32.mrb[0].mxu0
      %v1532 = vadd.f32 %v531, %v1531
      %v1533 = vpop.f32.mrb[0].mxu0
      %1534 = vmatprep.mubr.bf16.mxu0 0
      %1535 = vmatmul.mubr.bf16.gmra.mrb[0].mxu0 %v1047
      %v1536 = vpop.f32.mrb[0].mxu0
      %v1537 = vadd.f32 %v531, %v1536
      %v1538 = vpop.f32.mrb[0].mxu0
      %v1539 = vpop.f32.mrb[0].mxu0
      %v1540 = vadd.f32 %v531, %v1539
      %v1541 = vpop.f32.mrb[0].mxu0
      %1542 = vmatprep.mubr.bf16.mxu0 0
      %1543 = vmatmul.mubr.bf16.gmra.mrb[0].mxu0 %v1050
      %v1544 = vpop.f32.mrb[0].mxu0
      %v1545 = vadd.f32 %v531, %v1544
      %v1546 = vpop.f32.mrb[0].mxu0
      %v1547 = vpop.f32.mrb[0].mxu0
      %v1548 = vadd.f32 %v531, %v1547
      %v1549 = vpop.f32.mrb[0].mxu0
      %1550 = vmatprep.mubr.bf16.mxu0 0
      %1551 = vmatmul.mubr.bf16.gmra.mrb[0].mxu0 %v1053
      %v1552 = vpop.f32.mrb[0].mxu0
      %v1553 = vadd.f32 %v531, %v1552
      %v1554 = vpop.f32.mrb[0].mxu0
      %v1555 = vpop.f32.mrb[0].mxu0
      %v1556 = vadd.f32 %v531, %v1555
      %v1557 = vpop.f32.mrb[0].mxu0
      %1558 = vmatprep.mubr.bf16.mxu0 0
      %1559 = vmatmul.mubr.bf16.gmra.mrb[0].mxu0 %v1056
      %v1560 = vpop.f32.mrb[0].mxu0
      %v1561 = vadd.f32 %v531, %v1560
      %v1562 = vpop.f32.mrb[0].mxu0
      %v1563 = vpop.f32.mrb[0].mxu0
      %v1564 = vadd.f32 %v531, %v1563
      %v1565 = vpop.f32.mrb[0].mxu0
      %1566 = vmatprep.mubr.bf16.mxu0 0
      %1567 = vmatmul.mubr.bf16.gmra.mrb[0].mxu0 %v1059
      %v1568 = vpop.f32.mrb[0].mxu0
      %v1569 = vadd.f32 %v531, %v1568
      %v1570 = vpop.f32.mrb[0].mxu0
      %v1571 = vpop.f32.mrb[0].mxu0
      %v1572 = vadd.f32 %v531, %v1571
      %v1573 = vpop.f32.mrb[0].mxu0
      %1574 = vmatprep.mubr.bf16.mxu0 0
      %1575 = vmatmul.mubr.bf16.gmra.mrb[0].mxu0 %v1062
      %v1576 = vpop.f32.mrb[0].mxu0
      %v1577 = vadd.f32 %v531, %v1576
      %v1578 = vpop.f32.mrb[0].mxu0
      %v1579 = vpop.f32.mrb[0].mxu0
      %v1580 = vadd.f32 %v531, %v1579
      %v1581 = vpop.f32.mrb[0].mxu0
      %1582 = vmatprep.mubr.bf16.mxu0 0
      %1583 = vmatmul.mubr.bf16.gmra.mrb[0].mxu0 %v1065
      %v1584 = vpop.f32.mrb[0].mxu0
      %v1585 = vadd.f32 %v531, %v1584
      %v1586 = vpop.f32.mrb[0].mxu0
      %v1587 = vpop.f32.mrb[0].mxu0
      %v1588 = vadd.f32 %v531, %v1587
      %v1589 = vpop.f32.mrb[0].mxu0
      %1590 = vmatprep.mubr.bf16.mxu0 0
      %1591 = vmatmul.mubr.bf16.gmra.mrb[0].mxu0 %v1068
      %v1592 = vpop.f32.mrb[0].mxu0
      %v1593 = vadd.f32 %v531, %v1592
      %v1594 = vpop.f32.mrb[0].mxu0
      %v1595 = vpop.f32.mrb[0].mxu0
      %v1596 = vadd.f32 %v531, %v1595
      %v1597 = vpop.f32.mrb[0].mxu0
      %1598 = vmatprep.mubr.bf16.mxu0 0
      %1599 = vmatmul.mubr.bf16.gmra.mrb[0].mxu0 %v1071
      %v1600 = vpop.f32.mrb[0].mxu0
      %v1601 = vadd.f32 %v531, %v1600
      %v1602 = vpop.f32.mrb[0].mxu0
      %v1603 = vpop.f32.mrb[0].mxu0
      %v1604 = vadd.f32 %v531, %v1603
      %v1605 = vpop.f32.mrb[0].mxu0
      %1606 = vmatprep.mubr.bf16.mxu0 0
      %1607 = vmatmul.mubr.bf16.gmra.mrb[0].mxu0 %v1074
      %v1608 = vpop.f32.mrb[0].mxu0
      %v1609 = vpop.f32.mrb[0].mxu0
      %v1610 = vpop.f32.mrb[0].mxu0
      %v1611 = vpop.f32.mrb[0].mxu0
      %1612 = vdwg.mxu0
      %v1613 = vmax.f32 %v1111, 0.0
      %v1614 = vmax.f32 %v1114, 0.0
      %v1615 = vmax.f32 %v1119, 0.0
      %v1616 = vmax.f32 %v1122, 0.0
      %v1617 = vmax.f32 %v1127, 0.0
      %v1618 = vmax.f32 %v1130, 0.0
      %v1619 = vmax.f32 %v1135, 0.0
      %v1620 = vmax.f32 %v1138, 0.0
      %v1621 = vmax.f32 %v1143, 0.0
      %v1622 = vmax.f32 %v1146, 0.0
      %v1623 = vmax.f32 %v1151, 0.0
      %v1624 = vmax.f32 %v1154, 0.0
      %v1625 = vmax.f32 %v1159, 0.0
      %v1626 = vmax.f32 %v1162, 0.0
      %v1627 = vmax.f32 %v1167, 0.0
      %v1628 = vmax.f32 %v1170, 0.0
      %v1629 = vmax.f32 %v1175, 0.0
      %v1630 = vmax.f32 %v1178, 0.0
      %v1631 = vmax.f32 %v1183, 0.0
      %v1632 = vmax.f32 %v1186, 0.0
      %v1633 = vmax.f32 %v1191, 0.0
      %v1634 = vmax.f32 %v1194, 0.0
      %v1635 = vmax.f32 %v1199, 0.0
      %v1636 = vmax.f32 %v1202, 0.0
      %v1637 = vmax.f32 %v1207, 0.0
      %v1638 = vmax.f32 %v1210, 0.0
      %v1639 = vmax.f32 %v1215, 0.0
      %v1640 = vmax.f32 %v1218, 0.0
      %v1641 = vmax.f32 %v1223, 0.0
      %v1642 = vmax.f32 %v1226, 0.0
      %v1643 = vmax.f32 %v1237, 0.0
      %v1644 = vmax.f32 %v1240, 0.0
      %v1645 = vmax.f32 %v1245, 0.0
      %v1646 = vmax.f32 %v1248, 0.0
      %v1647 = vmax.f32 %v1253, 0.0
      %v1648 = vmax.f32 %v1256, 0.0
      %v1649 = vmax.f32 %v1261, 0.0
      %v1650 = vmax.f32 %v1264, 0.0
      %v1651 = vmax.f32 %v1269, 0.0
      %v1652 = vmax.f32 %v1272, 0.0
      %v1653 = vmax.f32 %v1277, 0.0
      %v1654 = vmax.f32 %v1280, 0.0
      %v1655 = vmax.f32 %v1285, 0.0
      %v1656 = vmax.f32 %v1288, 0.0
      %v1657 = vmax.f32 %v1293, 0.0
      %v1658 = vmax.f32 %v1296, 0.0
      %v1659 = vmax.f32 %v1301, 0.0
      %v1660 = vmax.f32 %v1304, 0.0
      %v1661 = vmax.f32 %v1309, 0.0
      %v1662 = vmax.f32 %v1312, 0.0
      %v1663 = vmax.f32 %v1317, 0.0
      %v1664 = vmax.f32 %v1320, 0.0
      %v1665 = vmax.f32 %v1325, 0.0
      %v1666 = vmax.f32 %v1328, 0.0
      %v1667 = vmax.f32 %v1333, 0.0
      %v1668 = vmax.f32 %v1336, 0.0
      %v1669 = vmax.f32 %v1341, 0.0
      %v1670 = vmax.f32 %v1344, 0.0
      %v1671 = vmax.f32 %v1349, 0.0
      %v1672 = vmax.f32 %v1352, 0.0
      %v1673 = vmax.f32 %v1363, 0.0
      %v1674 = vmax.f32 %v1366, 0.0
      %v1675 = vmax.f32 %v1371, 0.0
      %v1676 = vmax.f32 %v1374, 0.0
      %v1677 = vmax.f32 %v1379, 0.0
      %v1678 = vmax.f32 %v1382, 0.0
      %v1679 = vmax.f32 %v1387, 0.0
      %v1680 = vmax.f32 %v1390, 0.0
      %v1681 = vmax.f32 %v1395, 0.0
      %v1682 = vmax.f32 %v1398, 0.0
      %v1683 = vmax.f32 %v1403, 0.0
      %v1684 = vmax.f32 %v1406, 0.0
      %v1685 = vmax.f32 %v1411, 0.0
      %v1686 = vmax.f32 %v1414, 0.0
      %v1687 = vmax.f32 %v1419, 0.0
      %v1688 = vmax.f32 %v1422, 0.0
      %v1689 = vmax.f32 %v1427, 0.0
      %v1690 = vmax.f32 %v1430, 0.0
      %v1691 = vmax.f32 %v1435, 0.0
      %v1692 = vmax.f32 %v1438, 0.0
      %v1693 = vmax.f32 %v1443, 0.0
      %v1694 = vmax.f32 %v1446, 0.0
      %v1695 = vmax.f32 %v1451, 0.0
      %v1696 = vmax.f32 %v1454, 0.0
      %v1697 = vmax.f32 %v1459, 0.0
      %v1698 = vmax.f32 %v1462, 0.0
      %v1699 = vmax.f32 %v1467, 0.0
      %v1700 = vmax.f32 %v1470, 0.0
      %v1701 = vmax.f32 %v1475, 0.0
      %v1702 = vmax.f32 %v1478, 0.0
      %v1703 = vmax.f32 %v1489, 0.0
      %v1704 = vmax.f32 %v1492, 0.0
      %v1705 = vmax.f32 %v1497, 0.0
      %v1706 = vmax.f32 %v1500, 0.0
      %v1707 = vmax.f32 %v1505, 0.0
      %v1708 = vmax.f32 %v1508, 0.0
      %v1709 = vmax.f32 %v1513, 0.0
      %v1710 = vmax.f32 %v1516, 0.0
      %v1711 = vmax.f32 %v1521, 0.0
      %v1712 = vmax.f32 %v1524, 0.0
      %v1713 = vmax.f32 %v1529, 0.0
      %v1714 = vmax.f32 %v1532, 0.0
      %v1715 = vmax.f32 %v1537, 0.0
      %v1716 = vmax.f32 %v1540, 0.0
      %v1717 = vmax.f32 %v1545, 0.0
      %v1718 = vmax.f32 %v1548, 0.0
      %v1719 = vmax.f32 %v1553, 0.0
      %v1720 = vmax.f32 %v1556, 0.0
      %v1721 = vmax.f32 %v1561, 0.0
      %v1722 = vmax.f32 %v1564, 0.0
      %v1723 = vmax.f32 %v1569, 0.0
      %v1724 = vmax.f32 %v1572, 0.0
      %v1725 = vmax.f32 %v1577, 0.0
      %v1726 = vmax.f32 %v1580, 0.0
      %v1727 = vmax.f32 %v1585, 0.0
      %v1728 = vmax.f32 %v1588, 0.0
      %v1729 = vmax.f32 %v1593, 0.0
      %v1730 = vmax.f32 %v1596, 0.0
      %v1731 = vmax.f32 %v1601, 0.0
      %v1732 = vmax.f32 %v1604, 0.0
      %v1733 = vpack.c.bf16 %v1614, %v1613
      %v1734 = vpack.c.bf16 %v1616, %v1615
      %v1735 = vpack.c.bf16 %v1618, %v1617
      %v1736 = vpack.c.bf16 %v1620, %v1619
      %v1737 = vpack.c.bf16 %v1622, %v1621
      %v1738 = vpack.c.bf16 %v1624, %v1623
      %v1739 = vpack.c.bf16 %v1626, %v1625
      %v1740 = vpack.c.bf16 %v1628, %v1627
      %v1741 = vpack.c.bf16 %v1630, %v1629
      %v1742 = vpack.c.bf16 %v1632, %v1631
      %v1743 = vpack.c.bf16 %v1634, %v1633
      %v1744 = vpack.c.bf16 %v1636, %v1635
      %v1745 = vpack.c.bf16 %v1638, %v1637
      %v1746 = vpack.c.bf16 %v1640, %v1639
      %v1747 = vpack.c.bf16 %v1642, %v1641
      %v1748 = vpack.c.bf16 %v1644, %v1643
      %v1749 = vpack.c.bf16 %v1646, %v1645
      %v1750 = vpack.c.bf16 %v1648, %v1647
      %v1751 = vpack.c.bf16 %v1650, %v1649
      %v1752 = vpack.c.bf16 %v1652, %v1651
      %v1753 = vpack.c.bf16 %v1654, %v1653
      %v1754 = vpack.c.bf16 %v1656, %v1655
      %v1755 = vpack.c.bf16 %v1658, %v1657
      %v1756 = vpack.c.bf16 %v1660, %v1659
      %v1757 = vpack.c.bf16 %v1662, %v1661
      %v1758 = vpack.c.bf16 %v1664, %v1663
      %v1759 = vpack.c.bf16 %v1666, %v1665
      %v1760 = vpack.c.bf16 %v1668, %v1667
      %v1761 = vpack.c.bf16 %v1670, %v1669
      %v1762 = vpack.c.bf16 %v1672, %v1671
      %v1763 = vpack.c.bf16 %v1674, %v1673
      %v1764 = vpack.c.bf16 %v1676, %v1675
      %v1765 = vpack.c.bf16 %v1678, %v1677
      %v1766 = vpack.c.bf16 %v1680, %v1679
      %v1767 = vpack.c.bf16 %v1682, %v1681
      %v1768 = vpack.c.bf16 %v1684, %v1683
      %v1769 = vpack.c.bf16 %v1686, %v1685
      %v1770 = vpack.c.bf16 %v1688, %v1687
      %v1771 = vpack.c.bf16 %v1690, %v1689
      %v1772 = vpack.c.bf16 %v1692, %v1691
      %v1773 = vpack.c.bf16 %v1694, %v1693
      %v1774 = vpack.c.bf16 %v1696, %v1695
      %v1775 = vpack.c.bf16 %v1698, %v1697
      %v1776 = vpack.c.bf16 %v1700, %v1699
      %v1777 = vpack.c.bf16 %v1702, %v1701
      %v1778 = vpack.c.bf16 %v1704, %v1703
      %v1779 = vpack.c.bf16 %v1706, %v1705
      %v1780 = vpack.c.bf16 %v1708, %v1707
      %v1781 = vpack.c.bf16 %v1710, %v1709
      %v1782 = vpack.c.bf16 %v1712, %v1711
      %v1783 = vpack.c.bf16 %v1714, %v1713
      %v1784 = vpack.c.bf16 %v1716, %v1715
      %v1785 = vpack.c.bf16 %v1718, %v1717
      %v1786 = vpack.c.bf16 %v1720, %v1719
      %v1787 = vpack.c.bf16 %v1722, %v1721
      %v1788 = vpack.c.bf16 %v1724, %v1723
      %v1789 = vpack.c.bf16 %v1726, %v1725
      %v1790 = vpack.c.bf16 %v1728, %v1727
      %v1791 = vpack.c.bf16 %v1730, %v1729
      %v1792 = vpack.c.bf16 %v1732, %v1731
      %v1793 = vmax.bf16 %v1733, %v1748
      %v1794 = vmax.bf16 %v1734, %v1749
      %v1795 = vmax.bf16 %v1735, %v1750
      %v1796 = vmax.bf16 %v1736, %v1751
      %v1797 = vmax.bf16 %v1737, %v1752
      %v1798 = vmax.bf16 %v1738, %v1753
      %v1799 = vmax.bf16 %v1739, %v1754
      %v1800 = vmax.bf16 %v1740, %v1755
      %v1801 = vmax.bf16 %v1741, %v1756
      %v1802 = vmax.bf16 %v1742, %v1757
      %v1803 = vmax.bf16 %v1743, %v1758
      %v1804 = vmax.bf16 %v1744, %v1759
      %v1805 = vmax.bf16 %v1745, %v1760
      %v1806 = vmax.bf16 %v1746, %v1761
      %v1807 = vmax.bf16 %v1747, %v1762
      %v1808 = vmax.bf16 %v1763, %v1778
      %v1809 = vmax.bf16 %v1764, %v1779
      %v1810 = vmax.bf16 %v1765, %v1780
      %v1811 = vmax.bf16 %v1766, %v1781
      %v1812 = vmax.bf16 %v1767, %v1782
      %v1813 = vmax.bf16 %v1768, %v1783
      %v1814 = vmax.bf16 %v1769, %v1784
      %v1815 = vmax.bf16 %v1770, %v1785
      %v1816 = vmax.bf16 %v1771, %v1786
      %v1817 = vmax.bf16 %v1772, %v1787
      %v1818 = vmax.bf16 %v1773, %v1788
      %v1819 = vmax.bf16 %v1774, %v1789
      %v1820 = vmax.bf16 %v1775, %v1790
      %v1821 = vmax.bf16 %v1776, %v1791
      %v1822 = vmax.bf16 %v1777, %v1792
      %v1823 = vmax.bf16 %v1793, %v1808
      %v1824 = vmax.bf16 %v1794, %v1809
      %v1825 = vmax.bf16 %v1795, %v1810
      %v1826 = vmax.bf16 %v1796, %v1811
      %v1827 = vmax.bf16 %v1797, %v1812
      %v1828 = vmax.bf16 %v1798, %v1813
      %v1829 = vmax.bf16 %v1799, %v1814
      %v1830 = vmax.bf16 %v1800, %v1815
      %v1831 = vmax.bf16 %v1801, %v1816
      %v1832 = vmax.bf16 %v1802, %v1817
      %v1833 = vmax.bf16 %v1803, %v1818
      %v1834 = vmax.bf16 %v1804, %v1819
      %v1835 = vmax.bf16 %v1805, %v1820
      %v1836 = vmax.bf16 %v1806, %v1821
      %v1837 = vmax.bf16 %v1807, %v1822
      %v1838 = vlaneseq
      %v1839 = vand.u32 %v1838, 127
      %vm1840 = vcmp.ge.s32.totalorder %v1839, 0
      %vm1841 = vcmp.lt.s32.totalorder %v1839, 6
      %vm1842 = vmand %vm1840, %vm1841
      %v1843 = vsel %vm1842, 1, 0
      %vm1844 = vcmp.eq.s32.totalorder %v1843, 1
      %vm1845 = vmpackc.low %vm1844, %vm1844
      %v1846 = vsel %vm1845, 65537, 0
      %v1847 = vlaneseq
      %v1848 = vshrl.u32 %v1847, 7
      %v1849 = vsub.s32 0, %v1848
      %v1850 = vrot.slane %v1846, %v1849
      %vm1851 = vcmp.ne.s16.totalorder %v1850, 0
      %v1852 = vsel %vm1851, %v1823, 0
      %v1853 = vsel %vm1851, %v1824, 0
      %v1854 = vsel %vm1851, %v1825, 0
      %v1855 = vsel %vm1851, %v1826, 0
      %v1856 = vsel %vm1851, %v1827, 0
      %v1857 = vsel %vm1851, %v1828, 0
      %v1858 = vsel %vm1851, %v1829, 0
      %v1859 = vsel %vm1851, %v1830, 0
      %v1860 = vsel %vm1851, %v1831, 0
      %v1861 = vsel %vm1851, %v1832, 0
      %v1862 = vsel %vm1851, %v1833, 0
      %v1863 = vsel %vm1851, %v1834, 0
      %v1864 = vsel %vm1851, %v1835, 0
      %v1865 = vsel %vm1851, %v1836, 0
      %v1866 = vsel %vm1851, %v1837, 0
      %v1867 = vadd.bf16 %v1852, 0
      %v1868 = vadd.bf16 %v1853, 0
      %v1869 = vadd.bf16 %v1854, 0
      %v1870 = vadd.bf16 %v1855, 0
      %v1871 = vadd.bf16 %v1856, 0
      %v1872 = vadd.bf16 %v1857, 0
      %v1873 = vadd.bf16 %v1858, 0
      %v1874 = vadd.bf16 %v1859, 0
      %v1875 = vadd.bf16 %v1860, 0
      %v1876 = vadd.bf16 %v1861, 0
      %v1877 = vadd.bf16 %v1862, 0
      %v1878 = vadd.bf16 %v1863, 0
      %v1879 = vadd.bf16 %v1864, 0
      %v1880 = vadd.bf16 %v1865, 0
      %v1881 = vadd.bf16 %v1866, 0
      %vm1882 = vcmp.ge.s32.totalorder %v1839, 6
      %vm1883 = vcmp.lt.s32.totalorder %v1839, 12
      %vm1884 = vmand %vm1882, %vm1883
      %v1885 = vsel %vm1884, 1, 0
      %vm1886 = vcmp.eq.s32.totalorder %v1885, 1
      %vm1887 = vmpackc.low %vm1886, %vm1886
      %v1888 = vsel %vm1887, 65537, 0
      %v1889 = vlaneseq
      %v1890 = vshrl.u32 %v1889, 7
      %v1891 = vsub.s32 0, %v1890
      %v1892 = vrot.slane %v1888, %v1891
      %vm1893 = vcmp.ne.s16.totalorder %v1892, 0
      %v1894 = vsel %vm1893, %v1823, 0
      %v1895 = vsel %vm1893, %v1824, 0
      %v1896 = vsel %vm1893, %v1825, 0
      %v1897 = vsel %vm1893, %v1826, 0
      %v1898 = vsel %vm1893, %v1827, 0
      %v1899 = vsel %vm1893, %v1828, 0
      %v1900 = vsel %vm1893, %v1829, 0
      %v1901 = vsel %vm1893, %v1830, 0
      %v1902 = vsel %vm1893, %v1831, 0
      %v1903 = vsel %vm1893, %v1832, 0
      %v1904 = vsel %vm1893, %v1833, 0
      %v1905 = vsel %vm1893, %v1834, 0
      %v1906 = vsel %vm1893, %v1835, 0
      %v1907 = vsel %vm1893, %v1836, 0
      %v1908 = vsel %vm1893, %v1837, 0
      %vm1909 = vsmask.f32 7424
      %v1911 = vshrl.u32 %v1894, 16
      %v1913 = vshll.u32 %v1894, 16
      %v1915 = vrot.slane %v1913, 1
      %v1916 = vor.u32 %v1911, %v1915
      %v1918 = vshll.u32 %v1895, 16
      %v1920 = vrot.slane %v1918, 1
      %v1921 = vsel %vm1909, %v1916, %v1920
      %v1922 = vshrl.u32 %v1895, 16
      %v1924 = vor.u32 %v1922, %v1920
      %v1926 = vshll.u32 %v1896, 16
      %v1928 = vrot.slane %v1926, 1
      %v1929 = vsel %vm1909, %v1924, %v1928
      %v1930 = vshrl.u32 %v1896, 16
      %v1932 = vor.u32 %v1930, %v1928
      %v1934 = vshll.u32 %v1897, 16
      %v1936 = vrot.slane %v1934, 1
      %v1937 = vsel %vm1909, %v1932, %v1936
      %v1938 = vshrl.u32 %v1897, 16
      %v1940 = vor.u32 %v1938, %v1936
      %v1942 = vshll.u32 %v1898, 16
      %v1944 = vrot.slane %v1942, 1
      %v1945 = vsel %vm1909, %v1940, %v1944
      %v1946 = vshrl.u32 %v1898, 16
      %v1948 = vor.u32 %v1946, %v1944
      %v1950 = vshll.u32 %v1899, 16
      %v1952 = vrot.slane %v1950, 1
      %v1953 = vsel %vm1909, %v1948, %v1952
      %v1954 = vshrl.u32 %v1899, 16
      %v1956 = vor.u32 %v1954, %v1952
      %v1958 = vshll.u32 %v1900, 16
      %v1960 = vrot.slane %v1958, 1
      %v1961 = vsel %vm1909, %v1956, %v1960
      %v1962 = vshrl.u32 %v1900, 16
      %v1964 = vor.u32 %v1962, %v1960
      %v1966 = vshll.u32 %v1901, 16
      %v1968 = vrot.slane %v1966, 1
      %v1969 = vsel %vm1909, %v1964, %v1968
      %v1970 = vshrl.u32 %v1901, 16
      %v1972 = vor.u32 %v1970, %v1968
      %v1974 = vshll.u32 %v1902, 16
      %v1976 = vrot.slane %v1974, 1
      %v1977 = vsel %vm1909, %v1972, %v1976
      %v1978 = vshrl.u32 %v1902, 16
      %v1980 = vor.u32 %v1978, %v1976
      %v1982 = vshll.u32 %v1903, 16
      %v1984 = vrot.slane %v1982, 1
      %v1985 = vsel %vm1909, %v1980, %v1984
      %v1986 = vshrl.u32 %v1903, 16
      %v1988 = vor.u32 %v1986, %v1984
      %v1990 = vshll.u32 %v1904, 16
      %v1992 = vrot.slane %v1990, 1
      %v1993 = vsel %vm1909, %v1988, %v1992
      %v1994 = vshrl.u32 %v1904, 16
      %v1996 = vor.u32 %v1994, %v1992
      %v1998 = vshll.u32 %v1905, 16
      %v2000 = vrot.slane %v1998, 1
      %v2001 = vsel %vm1909, %v1996, %v2000
      %v2002 = vshrl.u32 %v1905, 16
      %v2004 = vor.u32 %v2002, %v2000
      %v2006 = vshll.u32 %v1906, 16
      %v2008 = vrot.slane %v2006, 1
      %v2009 = vsel %vm1909, %v2004, %v2008
      %v2010 = vshrl.u32 %v1906, 16
      %v2012 = vor.u32 %v2010, %v2008
      %v2014 = vshll.u32 %v1907, 16
      %v2016 = vrot.slane %v2014, 1
      %v2017 = vsel %vm1909, %v2012, %v2016
      %v2018 = vshrl.u32 %v1907, 16
      %v2020 = vor.u32 %v2018, %v2016
      %v2022 = vshll.u32 %v1908, 16
      %v2024 = vrot.slane %v2022, 1
      %v2025 = vsel %vm1909, %v2020, %v2024
      %v2026 = vshrl.u32 %v1908, 16
      %v2028 = vor.u32 %v2026, %v2024
      %v2044 = vadd.bf16 %v1867, %v1921
      %v2045 = vadd.bf16 %v1868, %v1929
      %v2046 = vadd.bf16 %v1869, %v1937
      %v2047 = vadd.bf16 %v1870, %v1945
      %v2048 = vadd.bf16 %v1871, %v1953
      %v2049 = vadd.bf16 %v1872, %v1961
      %v2050 = vadd.bf16 %v1873, %v1969
      %v2051 = vadd.bf16 %v1874, %v1977
      %v2052 = vadd.bf16 %v1875, %v1985
      %v2053 = vadd.bf16 %v1876, %v1993
      %v2054 = vadd.bf16 %v1877, %v2001
      %v2055 = vadd.bf16 %v1878, %v2009
      %v2056 = vadd.bf16 %v1879, %v2017
      %v2057 = vadd.bf16 %v1880, %v2025
      %v2058 = vadd.bf16 %v1881, %v2028
      %vm2059 = vcmp.ge.s32.totalorder %v1839, 12
      %vm2060 = vcmp.lt.s32.totalorder %v1839, 18
      %vm2061 = vmand %vm2059, %vm2060
      %v2062 = vsel %vm2061, 1, 0
      %vm2063 = vcmp.eq.s32.totalorder %v2062, 1
      %vm2064 = vmpackc.low %vm2063, %vm2063
      %v2065 = vsel %vm2064, 65537, 0
      %v2066 = vlaneseq
      %v2067 = vshrl.u32 %v2066, 7
      %v2068 = vsub.s32 0, %v2067
      %v2069 = vrot.slane %v2065, %v2068
      %vm2070 = vcmp.ne.s16.totalorder %v2069, 0
      %v2071 = vsel %vm2070, %v1823, 0
      %v2072 = vsel %vm2070, %v1824, 0
      %v2073 = vsel %vm2070, %v1825, 0
      %v2074 = vsel %vm2070, %v1826, 0
      %v2075 = vsel %vm2070, %v1827, 0
      %v2076 = vsel %vm2070, %v1828, 0
      %v2077 = vsel %vm2070, %v1829, 0
      %v2078 = vsel %vm2070, %v1830, 0
      %v2079 = vsel %vm2070, %v1831, 0
      %v2080 = vsel %vm2070, %v1832, 0
      %v2081 = vsel %vm2070, %v1833, 0
      %v2082 = vsel %vm2070, %v1834, 0
      %v2083 = vsel %vm2070, %v1835, 0
      %v2084 = vsel %vm2070, %v1836, 0
      %v2085 = vsel %vm2070, %v1837, 0
      %vm2101 = vcmask 1046528
      %v2102 = vrot.slane %v2071, 1
      %v2103 = vrot.slane %v2072, 1
      %v2104 = vsel %vm2101, %v2102, %v2103
      %v2105 = vrot.slane %v2073, 1
      %v2106 = vsel %vm2101, %v2103, %v2105
      %v2107 = vrot.slane %v2074, 1
      %v2108 = vsel %vm2101, %v2105, %v2107
      %v2109 = vrot.slane %v2075, 1
      %v2110 = vsel %vm2101, %v2107, %v2109
      %v2111 = vrot.slane %v2076, 1
      %v2112 = vsel %vm2101, %v2109, %v2111
      %v2113 = vrot.slane %v2077, 1
      %v2114 = vsel %vm2101, %v2111, %v2113
      %v2115 = vrot.slane %v2078, 1
      %v2116 = vsel %vm2101, %v2113, %v2115
      %v2117 = vrot.slane %v2079, 1
      %v2118 = vsel %vm2101, %v2115, %v2117
      %v2119 = vrot.slane %v2080, 1
      %v2120 = vsel %vm2101, %v2117, %v2119
      %v2121 = vrot.slane %v2081, 1
      %v2122 = vsel %vm2101, %v2119, %v2121
      %v2123 = vrot.slane %v2082, 1
      %v2124 = vsel %vm2101, %v2121, %v2123
      %v2125 = vrot.slane %v2083, 1
      %v2126 = vsel %vm2101, %v2123, %v2125
      %v2127 = vrot.slane %v2084, 1
      %v2128 = vsel %vm2101, %v2125, %v2127
      %v2129 = vrot.slane %v2085, 1
      %v2130 = vsel %vm2101, %v2127, %v2129
      %v2146 = vadd.bf16 %v2044, %v2104
      %v2147 = vadd.bf16 %v2045, %v2106
      %v2148 = vadd.bf16 %v2046, %v2108
      %v2149 = vadd.bf16 %v2047, %v2110
      %v2150 = vadd.bf16 %v2048, %v2112
      %v2151 = vadd.bf16 %v2049, %v2114
      %v2152 = vadd.bf16 %v2050, %v2116
      %v2153 = vadd.bf16 %v2051, %v2118
      %v2154 = vadd.bf16 %v2052, %v2120
      %v2155 = vadd.bf16 %v2053, %v2122
      %v2156 = vadd.bf16 %v2054, %v2124
      %v2157 = vadd.bf16 %v2055, %v2126
      %v2158 = vadd.bf16 %v2056, %v2128
      %v2159 = vadd.bf16 %v2057, %v2130
      %v2160 = vadd.bf16 %v2058, %v2129
      %vm2161 = vcmp.ge.s32.totalorder %v1839, 18
      %vm2162 = vcmp.lt.s32.totalorder %v1839, 24
      %vm2163 = vmand %vm2161, %vm2162
      %v2164 = vsel %vm2163, 1, 0
      %vm2165 = vcmp.eq.s32.totalorder %v2164, 1
      %vm2166 = vmpackc.low %vm2165, %vm2165
      %v2167 = vsel %vm2166, 65537, 0
      %v2168 = vlaneseq
      %v2169 = vshrl.u32 %v2168, 7
      %v2170 = vsub.s32 0, %v2169
      %v2171 = vrot.slane %v2167, %v2170
      %vm2172 = vcmp.ne.s16.totalorder %v2171, 0
      %v2173 = vsel %vm2172, %v1823, 0
      %v2174 = vsel %vm2172, %v1824, 0
      %v2175 = vsel %vm2172, %v1825, 0
      %v2176 = vsel %vm2172, %v1826, 0
      %v2177 = vsel %vm2172, %v1827, 0
      %v2178 = vsel %vm2172, %v1828, 0
      %v2179 = vsel %vm2172, %v1829, 0
      %v2180 = vsel %vm2172, %v1830, 0
      %v2181 = vsel %vm2172, %v1831, 0
      %v2182 = vsel %vm2172, %v1832, 0
      %v2183 = vsel %vm2172, %v1833, 0
      %v2184 = vsel %vm2172, %v1834, 0
      %v2185 = vsel %vm2172, %v1835, 0
      %v2186 = vsel %vm2172, %v1836, 0
      %v2187 = vsel %vm2172, %v1837, 0
      %vm2188 = vsmask.f32 6400
      %v2190 = vshrl.u32 %v2173, 16
      %v2192 = vrot.slane %v2190, 1
      %v2193 = vshll.u32 %v2173, 16
      %v2195 = vrot.slane %v2193, 2
      %v2196 = vor.u32 %v2192, %v2195
      %v2198 = vshrl.u32 %v2174, 16
      %v2200 = vrot.slane %v2198, 1
      %v2201 = vshll.u32 %v2174, 16
      %v2203 = vrot.slane %v2201, 2
      %v2204 = vor.u32 %v2200, %v2203
      %v2205 = vsel %vm2188, %v2196, %v2204
      %v2207 = vshrl.u32 %v2175, 16
      %v2209 = vrot.slane %v2207, 1
      %v2210 = vshll.u32 %v2175, 16
      %v2212 = vrot.slane %v2210, 2
      %v2213 = vor.u32 %v2209, %v2212
      %v2214 = vsel %vm2188, %v2204, %v2213
      %v2216 = vshrl.u32 %v2176, 16
      %v2218 = vrot.slane %v2216, 1
      %v2219 = vshll.u32 %v2176, 16
      %v2221 = vrot.slane %v2219, 2
      %v2222 = vor.u32 %v2218, %v2221
      %v2223 = vsel %vm2188, %v2213, %v2222
      %v2225 = vshrl.u32 %v2177, 16
      %v2227 = vrot.slane %v2225, 1
      %v2228 = vshll.u32 %v2177, 16
      %v2230 = vrot.slane %v2228, 2
      %v2231 = vor.u32 %v2227, %v2230
      %v2232 = vsel %vm2188, %v2222, %v2231
      %v2234 = vshrl.u32 %v2178, 16
      %v2236 = vrot.slane %v2234, 1
      %v2237 = vshll.u32 %v2178, 16
      %v2239 = vrot.slane %v2237, 2
      %v2240 = vor.u32 %v2236, %v2239
      %v2241 = vsel %vm2188, %v2231, %v2240
      %v2243 = vshrl.u32 %v2179, 16
      %v2245 = vrot.slane %v2243, 1
      %v2246 = vshll.u32 %v2179, 16
      %v2248 = vrot.slane %v2246, 2
      %v2249 = vor.u32 %v2245, %v2248
      %v2250 = vsel %vm2188, %v2240, %v2249
      %v2252 = vshrl.u32 %v2180, 16
      %v2254 = vrot.slane %v2252, 1
      %v2255 = vshll.u32 %v2180, 16
      %v2257 = vrot.slane %v2255, 2
      %v2258 = vor.u32 %v2254, %v2257
      %v2259 = vsel %vm2188, %v2249, %v2258
      %v2261 = vshrl.u32 %v2181, 16
      %v2263 = vrot.slane %v2261, 1
      %v2264 = vshll.u32 %v2181, 16
      %v2266 = vrot.slane %v2264, 2
      %v2267 = vor.u32 %v2263, %v2266
      %v2268 = vsel %vm2188, %v2258, %v2267
      %v2270 = vshrl.u32 %v2182, 16
      %v2272 = vrot.slane %v2270, 1
      %v2273 = vshll.u32 %v2182, 16
      %v2275 = vrot.slane %v2273, 2
      %v2276 = vor.u32 %v2272, %v2275
      %v2277 = vsel %vm2188, %v2267, %v2276
      %v2279 = vshrl.u32 %v2183, 16
      %v2281 = vrot.slane %v2279, 1
      %v2282 = vshll.u32 %v2183, 16
      %v2284 = vrot.slane %v2282, 2
      %v2285 = vor.u32 %v2281, %v2284
      %v2286 = vsel %vm2188, %v2276, %v2285
      %v2288 = vshrl.u32 %v2184, 16
      %v2290 = vrot.slane %v2288, 1
      %v2291 = vshll.u32 %v2184, 16
      %v2293 = vrot.slane %v2291, 2
      %v2294 = vor.u32 %v2290, %v2293
      %v2295 = vsel %vm2188, %v2285, %v2294
      %v2297 = vshrl.u32 %v2185, 16
      %v2299 = vrot.slane %v2297, 1
      %v2300 = vshll.u32 %v2185, 16
      %v2302 = vrot.slane %v2300, 2
      %v2303 = vor.u32 %v2299, %v2302
      %v2304 = vsel %vm2188, %v2294, %v2303
      %v2306 = vshrl.u32 %v2186, 16
      %v2308 = vrot.slane %v2306, 1
      %v2309 = vshll.u32 %v2186, 16
      %v2311 = vrot.slane %v2309, 2
      %v2312 = vor.u32 %v2308, %v2311
      %v2313 = vsel %vm2188, %v2303, %v2312
      %v2315 = vshrl.u32 %v2187, 16
      %v2317 = vrot.slane %v2315, 1
      %v2318 = vshll.u32 %v2187, 16
      %v2320 = vrot.slane %v2318, 2
      %v2321 = vor.u32 %v2317, %v2320
      %v2322 = vsel %vm2188, %v2312, %v2321
      %v2338 = vadd.bf16 %v2146, %v2205
      %v2339 = vadd.bf16 %v2147, %v2214
      %v2340 = vadd.bf16 %v2148, %v2223
      %v2341 = vadd.bf16 %v2149, %v2232
      %v2342 = vadd.bf16 %v2150, %v2241
      %v2343 = vadd.bf16 %v2151, %v2250
      %v2344 = vadd.bf16 %v2152, %v2259
      %v2345 = vadd.bf16 %v2153, %v2268
      %v2346 = vadd.bf16 %v2154, %v2277
      %v2347 = vadd.bf16 %v2155, %v2286
      %v2348 = vadd.bf16 %v2156, %v2295
      %v2349 = vadd.bf16 %v2157, %v2304
      %v2350 = vadd.bf16 %v2158, %v2313
      %v2351 = vadd.bf16 %v2159, %v2322
      %v2352 = vadd.bf16 %v2160, %v2321
      %vm2353 = vcmp.ge.s32.totalorder %v1839, 24
      %vm2354 = vcmp.lt.s32.totalorder %v1839, 30
      %vm2355 = vmand %vm2353, %vm2354
      %v2356 = vsel %vm2355, 1, 0
      %vm2357 = vcmp.eq.s32.totalorder %v2356, 1
      %vm2358 = vmpackc.low %vm2357, %vm2357
      %v2359 = vsel %vm2358, 65537, 0
      %v2360 = vlaneseq
      %v2361 = vshrl.u32 %v2360, 7
      %v2362 = vsub.s32 0, %v2361
      %v2363 = vrot.slane %v2359, %v2362
      %vm2364 = vcmp.ne.s16.totalorder %v2363, 0
      %v2365 = vsel %vm2364, %v1823, 0
      %v2366 = vsel %vm2364, %v1824, 0
      %v2367 = vsel %vm2364, %v1825, 0
      %v2368 = vsel %vm2364, %v1826, 0
      %v2369 = vsel %vm2364, %v1827, 0
      %v2370 = vsel %vm2364, %v1828, 0
      %v2371 = vsel %vm2364, %v1829, 0
      %v2372 = vsel %vm2364, %v1830, 0
      %v2373 = vsel %vm2364, %v1831, 0
      %v2374 = vsel %vm2364, %v1832, 0
      %v2375 = vsel %vm2364, %v1833, 0
      %v2376 = vsel %vm2364, %v1834, 0
      %v2377 = vsel %vm2364, %v1835, 0
      %v2378 = vsel %vm2364, %v1836, 0
      %v2379 = vsel %vm2364, %v1837, 0
      %vm2395 = vcmask 1045504
      %v2396 = vrot.slane %v2365, 2
      %v2397 = vrot.slane %v2366, 2
      %v2398 = vsel %vm2395, %v2396, %v2397
      %v2399 = vrot.slane %v2367, 2
      %v2400 = vsel %vm2395, %v2397, %v2399
      %v2401 = vrot.slane %v2368, 2
      %v2402 = vsel %vm2395, %v2399, %v2401
      %v2403 = vrot.slane %v2369, 2
      %v2404 = vsel %vm2395, %v2401, %v2403
      %v2405 = vrot.slane %v2370, 2
      %v2406 = vsel %vm2395, %v2403, %v2405
      %v2407 = vrot.slane %v2371, 2
      %v2408 = vsel %vm2395, %v2405, %v2407
      %v2409 = vrot.slane %v2372, 2
      %v2410 = vsel %vm2395, %v2407, %v2409
      %v2411 = vrot.slane %v2373, 2
      %v2412 = vsel %vm2395, %v2409, %v2411
      %v2413 = vrot.slane %v2374, 2
      %v2414 = vsel %vm2395, %v2411, %v2413
      %v2415 = vrot.slane %v2375, 2
      %v2416 = vsel %vm2395, %v2413, %v2415
      %v2417 = vrot.slane %v2376, 2
      %v2418 = vsel %vm2395, %v2415, %v2417
      %v2419 = vrot.slane %v2377, 2
      %v2420 = vsel %vm2395, %v2417, %v2419
      %v2421 = vrot.slane %v2378, 2
      %v2422 = vsel %vm2395, %v2419, %v2421
      %v2423 = vrot.slane %v2379, 2
      %v2424 = vsel %vm2395, %v2421, %v2423
      %v2440 = vadd.bf16 %v2338, %v2398
      %v2441 = vadd.bf16 %v2339, %v2400
      %v2442 = vadd.bf16 %v2340, %v2402
      %v2443 = vadd.bf16 %v2341, %v2404
      %v2444 = vadd.bf16 %v2342, %v2406
      %v2445 = vadd.bf16 %v2343, %v2408
      %v2446 = vadd.bf16 %v2344, %v2410
      %v2447 = vadd.bf16 %v2345, %v2412
      %v2448 = vadd.bf16 %v2346, %v2414
      %v2449 = vadd.bf16 %v2347, %v2416
      %v2450 = vadd.bf16 %v2348, %v2418
      %v2451 = vadd.bf16 %v2349, %v2420
      %v2452 = vadd.bf16 %v2350, %v2422
      %v2453 = vadd.bf16 %v2351, %v2424
      %v2454 = vadd.bf16 %v2352, %v2423
      %v2455 = vld [vmem:[%s3] sm:$0xf]
      %v2456 = vld [vmem:[%s3 + $0x4] sm:$0xf]
      %v2457 = vld [vmem:[%s3 + $0x8] sm:$0xf]
      %v2458 = vld [vmem:[%s3 + $0xc] sm:$0xf]
      %s2459 = scalar_lea.vmem %s3, 16
      %v2460 = vld [vmem:[%s2459] sm:$0xf]
      %v2461 = vld [vmem:[%s2459 + $0x4] sm:$0xf]
      %v2462 = vld [vmem:[%s2459 + $0x8] sm:$0xf]
      %v2463 = vld [vmem:[%s2459 + $0xc] sm:$0xf]
      %v2468 = vunpack.c.l.b16 %v2460
      %v2469 = vunpack.c.l.b16 %v2461
      %v2470 = vunpack.c.l.b16 %v2462
      %v2471 = vunpack.c.l.b16 %v2463
      %v2472 = vpack.c.b16 %v2469, %v2468
      %v2473 = vpack.c.b16 %v2471, %v2470
      %vm2476 = vcmask 261120
      %v2478 = vsel %vm2476, %v2441, 0
      %v2481 = vsel %vm2476, %v2442, 0
      %v2484 = vsel %vm2476, %v2443, 0
      %v2487 = vsel %vm2476, %v2444, 0
      %v2490 = vsel %vm2476, %v2445, 0
      %v2493 = vsel %vm2476, %v2446, 0
      %v2496 = vsel %vm2476, %v2447, 0
      %v2499 = vsel %vm2476, %v2448, 0
      %v2502 = vsel %vm2476, %v2449, 0
      %v2505 = vsel %vm2476, %v2450, 0
      %v2508 = vsel %vm2476, %v2451, 0
      %2510 = vmatprep.subr.bf16.mxu0 0
      %2511 = vmatpush1.bf16.msra.mxu0 %v2472
      %2512 = vmatprep.subr.bf16.mxu0 0
      %2513 = vmatpush1.bf16.msra.mxu0 %v2473
      %2514 = vmatprep.subr.bf16.mxu0 0
      %2515 = vmatpush1.bf16.msra.mxu0 0
      %2516 = vmatprep.subr.bf16.mxu0 0
      %2517 = vmatpush1.bf16.msra.mxu0 0
      %2518 = vmatprep.subr.bf16.mxu0 0
      %2519 = vmatpush1.bf16.msra.mxu0 0
      %2520 = vmatprep.subr.bf16.mxu0 0
      %2521 = vmatpush1.bf16.msra.mxu0 0
      %2522 = vmatprep.subr.bf16.mxu0 0
      %2523 = vmatpush1.bf16.msra.mxu0 0
      %2524 = vmatprep.subr.bf16.mxu0 0
      %2525 = vmatpush1.bf16.msra.mxu0 0
      %2526 = vmatprep.subr.bf16.mxu0 0
      %2527 = vmatpush1.bf16.msra.mxu0 0
      %2528 = vmatprep.subr.bf16.mxu0 0
      %2529 = vmatpush1.bf16.msra.mxu0 0
      %2530 = vmatprep.subr.bf16.mxu0 0
      %2531 = vmatpush1.bf16.msra.mxu0 0
      %2532 = vmatprep.subr.bf16.mxu0 0
      %2533 = vmatpush1.bf16.msra.mxu0 0
      %2534 = vmatprep.subr.bf16.mxu0 0
      %2535 = vmatpush1.bf16.msra.mxu0 0
      %2536 = vmatprep.subr.bf16.mxu0 0
      %2537 = vmatpush1.bf16.msra.mxu0 0
      %2538 = vmatprep.subr.bf16.mxu0 0
      %2539 = vmatpush1.bf16.msra.mxu0 0
      %2540 = vmatprep.subr.bf16.mxu0 0
      %2541 = vmatpush1.bf16.msra.mxu0 0
      %2542 = vmatprep.mubr.bf16.mxu0 0
      %2543 = vmatmul.mubr.bf16.gmra.mrb[0].mxu0 %v2478
      %v2544 = vpop.f32.mrb[0].mxu0
      %v2545 = vadd.f32 0.0, %v2544
      %v2546 = vpop.f32.mrb[0].mxu0
      %v2547 = vpop.f32.mrb[0].mxu0
      %v2548 = vadd.f32 0.0, %v2547
      %v2549 = vpop.f32.mrb[0].mxu0
      %2550 = vmatprep.mubr.bf16.mxu0 0
      %2551 = vmatmul.mubr.bf16.gmra.mrb[0].mxu0 %v2481
      %v2552 = vpop.f32.mrb[0].mxu0
      %v2553 = vadd.f32 0.0, %v2552
      %v2554 = vpop.f32.mrb[0].mxu0
      %v2555 = vpop.f32.mrb[0].mxu0
      %v2556 = vadd.f32 0.0, %v2555
      %v2557 = vpop.f32.mrb[0].mxu0
      %2558 = vmatprep.mubr.bf16.mxu0 0
      %2559 = vmatmul.mubr.bf16.gmra.mrb[0].mxu0 %v2484
      %v2560 = vpop.f32.mrb[0].mxu0
      %v2561 = vadd.f32 0.0, %v2560
      %v2562 = vpop.f32.mrb[0].mxu0
      %v2563 = vpop.f32.mrb[0].mxu0
      %v2564 = vadd.f32 0.0, %v2563
      %v2565 = vpop.f32.mrb[0].mxu0
      %2566 = vmatprep.mubr.bf16.mxu0 0
      %2567 = vmatmul.mubr.bf16.gmra.mrb[0].mxu0 %v2487
      %v2568 = vpop.f32.mrb[0].mxu0
      %v2569 = vadd.f32 0.0, %v2568
      %v2570 = vpop.f32.mrb[0].mxu0
      %v2571 = vpop.f32.mrb[0].mxu0
      %v2572 = vadd.f32 0.0, %v2571
      %v2573 = vpop.f32.mrb[0].mxu0
      %2574 = vmatprep.mubr.bf16.mxu0 0
      %2575 = vmatmul.mubr.bf16.gmra.mrb[0].mxu0 %v2490
      %v2576 = vpop.f32.mrb[0].mxu0
      %v2577 = vadd.f32 0.0, %v2576
      %v2578 = vpop.f32.mrb[0].mxu0
      %v2579 = vpop.f32.mrb[0].mxu0
      %v2580 = vadd.f32 0.0, %v2579
      %v2581 = vpop.f32.mrb[0].mxu0
      %2582 = vmatprep.mubr.bf16.mxu0 0
      %2583 = vmatmul.mubr.bf16.gmra.mrb[0].mxu0 %v2493
      %v2584 = vpop.f32.mrb[0].mxu0
      %v2585 = vadd.f32 0.0, %v2584
      %v2586 = vpop.f32.mrb[0].mxu0
      %v2587 = vpop.f32.mrb[0].mxu0
      %v2588 = vadd.f32 0.0, %v2587
      %v2589 = vpop.f32.mrb[0].mxu0
      %2590 = vmatprep.mubr.bf16.mxu0 0
      %2591 = vmatmul.mubr.bf16.gmra.mrb[0].mxu0 %v2496
      %v2592 = vpop.f32.mrb[0].mxu0
      %v2593 = vadd.f32 0.0, %v2592
      %v2594 = vpop.f32.mrb[0].mxu0
      %v2595 = vpop.f32.mrb[0].mxu0
      %v2596 = vadd.f32 0.0, %v2595
      %v2597 = vpop.f32.mrb[0].mxu0
      %2598 = vmatprep.mubr.bf16.mxu0 0
      %2599 = vmatmul.mubr.bf16.gmra.mrb[0].mxu0 %v2499
      %v2600 = vpop.f32.mrb[0].mxu0
      %v2601 = vadd.f32 0.0, %v2600
      %v2602 = vpop.f32.mrb[0].mxu0
      %v2603 = vpop.f32.mrb[0].mxu0
      %v2604 = vadd.f32 0.0, %v2603
      %v2605 = vpop.f32.mrb[0].mxu0
      %2606 = vmatprep.mubr.bf16.mxu0 0
      %2607 = vmatmul.mubr.bf16.gmra.mrb[0].mxu0 %v2502
      %v2608 = vpop.f32.mrb[0].mxu0
      %v2609 = vadd.f32 0.0, %v2608
      %v2610 = vpop.f32.mrb[0].mxu0
      %v2611 = vpop.f32.mrb[0].mxu0
      %v2612 = vadd.f32 0.0, %v2611
      %v2613 = vpop.f32.mrb[0].mxu0
      %2614 = vmatprep.mubr.bf16.mxu0 0
      %2615 = vmatmul.mubr.bf16.gmra.mrb[0].mxu0 %v2505
      %v2616 = vpop.f32.mrb[0].mxu0
      %v2617 = vadd.f32 0.0, %v2616
      %v2618 = vpop.f32.mrb[0].mxu0
      %v2619 = vpop.f32.mrb[0].mxu0
      %v2620 = vadd.f32 0.0, %v2619
      %v2621 = vpop.f32.mrb[0].mxu0
      %2622 = vmatprep.mubr.bf16.mxu0 0
      %2623 = vmatmul.mubr.bf16.gmra.mrb[0].mxu0 %v2508
      %v2624 = vpop.f32.mrb[0].mxu0
      %v2625 = vadd.f32 0.0, %v2624
      %v2626 = vpop.f32.mrb[0].mxu0
      %v2627 = vpop.f32.mrb[0].mxu0
      %v2628 = vpop.f32.mrb[0].mxu0
      %2629 = vdwg.mxu0
      %v2634 = vunpack.c.l.b16 %v2455
      %v2635 = vunpack.c.l.b16 %v2456
      %v2636 = vunpack.c.l.b16 %v2457
      %v2637 = vunpack.c.l.b16 %v2458
      %v2638 = vpack.c.b16 %v2635, %v2634
      %v2639 = vpack.c.b16 %v2637, %v2636
      %v2643 = vsel %vm2476, %v2440, 0
      %2645 = vmatprep.subr.bf16.mxu0 0
      %2646 = vmatpush1.bf16.msra.mxu0 %v2638
      %2647 = vmatprep.subr.bf16.mxu0 0
      %2648 = vmatpush1.bf16.msra.mxu0 %v2639
      %2649 = vmatprep.subr.bf16.mxu0 0
      %2650 = vmatpush1.bf16.msra.mxu0 0
      %2651 = vmatprep.subr.bf16.mxu0 0
      %2652 = vmatpush1.bf16.msra.mxu0 0
      %2653 = vmatprep.subr.bf16.mxu0 0
      %2654 = vmatpush1.bf16.msra.mxu0 0
      %2655 = vmatprep.subr.bf16.mxu0 0
      %2656 = vmatpush1.bf16.msra.mxu0 0
      %2657 = vmatprep.subr.bf16.mxu0 0
      %2658 = vmatpush1.bf16.msra.mxu0 0
      %2659 = vmatprep.subr.bf16.mxu0 0
      %2660 = vmatpush1.bf16.msra.mxu0 0
      %2661 = vmatprep.subr.bf16.mxu0 0
      %2662 = vmatpush1.bf16.msra.mxu0 0
      %2663 = vmatprep.subr.bf16.mxu0 0
      %2664 = vmatpush1.bf16.msra.mxu0 0
      %2665 = vmatprep.subr.bf16.mxu0 0
      %2666 = vmatpush1.bf16.msra.mxu0 0
      %2667 = vmatprep.subr.bf16.mxu0 0
      %2668 = vmatpush1.bf16.msra.mxu0 0
      %2669 = vmatprep.subr.bf16.mxu0 0
      %2670 = vmatpush1.bf16.msra.mxu0 0
      %2671 = vmatprep.subr.bf16.mxu0 0
      %2672 = vmatpush1.bf16.msra.mxu0 0
      %2673 = vmatprep.subr.bf16.mxu0 0
      %2674 = vmatpush1.bf16.msra.mxu0 0
      %2675 = vmatprep.subr.bf16.mxu0 0
      %2676 = vmatpush1.bf16.msra.mxu0 0
      %2677 = vmatprep.mubr.bf16.mxu0 0
      %2678 = vmatmul.mubr.bf16.gmra.mrb[0].mxu0 %v2643
      %v2679 = vpop.f32.mrb[0].mxu0
      %v2680 = vadd.f32 %v2545, %v2679
      %v2681 = vpop.f32.mrb[0].mxu0
      %v2682 = vpop.f32.mrb[0].mxu0
      %v2683 = vadd.f32 %v2548, %v2682
      %v2684 = vpop.f32.mrb[0].mxu0
      %2685 = vmatprep.mubr.bf16.mxu0 0
      %2686 = vmatmul.mubr.bf16.gmra.mrb[0].mxu0 %v2478
      %v2687 = vpop.f32.mrb[0].mxu0
      %v2688 = vadd.f32 %v2553, %v2687
      %v2689 = vpop.f32.mrb[0].mxu0
      %v2690 = vpop.f32.mrb[0].mxu0
      %v2691 = vadd.f32 %v2556, %v2690
      %v2692 = vpop.f32.mrb[0].mxu0
      %2693 = vmatprep.mubr.bf16.mxu0 0
      %2694 = vmatmul.mubr.bf16.gmra.mrb[0].mxu0 %v2481
      %v2695 = vpop.f32.mrb[0].mxu0
      %v2696 = vadd.f32 %v2561, %v2695
      %v2697 = vpop.f32.mrb[0].mxu0
      %v2698 = vpop.f32.mrb[0].mxu0
      %v2699 = vadd.f32 %v2564, %v2698
      %v2700 = vpop.f32.mrb[0].mxu0
      %2701 = vmatprep.mubr.bf16.mxu0 0
      %2702 = vmatmul.mubr.bf16.gmra.mrb[0].mxu0 %v2484
      %v2703 = vpop.f32.mrb[0].mxu0
      %v2704 = vadd.f32 %v2569, %v2703
      %v2705 = vpop.f32.mrb[0].mxu0
      %v2706 = vpop.f32.mrb[0].mxu0
      %v2707 = vadd.f32 %v2572, %v2706
      %v2708 = vpop.f32.mrb[0].mxu0
      %2709 = vmatprep.mubr.bf16.mxu0 0
      %2710 = vmatmul.mubr.bf16.gmra.mrb[0].mxu0 %v2487
      %v2711 = vpop.f32.mrb[0].mxu0
      %v2712 = vadd.f32 %v2577, %v2711
      %v2713 = vpop.f32.mrb[0].mxu0
      %v2714 = vpop.f32.mrb[0].mxu0
      %v2715 = vadd.f32 %v2580, %v2714
      %v2716 = vpop.f32.mrb[0].mxu0
      %2717 = vmatprep.mubr.bf16.mxu0 0
      %2718 = vmatmul.mubr.bf16.gmra.mrb[0].mxu0 %v2490
      %v2719 = vpop.f32.mrb[0].mxu0
      %v2720 = vadd.f32 %v2585, %v2719
      %v2721 = vpop.f32.mrb[0].mxu0
      %v2722 = vpop.f32.mrb[0].mxu0
      %v2723 = vadd.f32 %v2588, %v2722
      %v2724 = vpop.f32.mrb[0].mxu0
      %2725 = vmatprep.mubr.bf16.mxu0 0
      %2726 = vmatmul.mubr.bf16.gmra.mrb[0].mxu0 %v2493
      %v2727 = vpop.f32.mrb[0].mxu0
      %v2728 = vadd.f32 %v2593, %v2727
      %v2729 = vpop.f32.mrb[0].mxu0
      %v2730 = vpop.f32.mrb[0].mxu0
      %v2731 = vadd.f32 %v2596, %v2730
      %v2732 = vpop.f32.mrb[0].mxu0
      %2733 = vmatprep.mubr.bf16.mxu0 0
      %2734 = vmatmul.mubr.bf16.gmra.mrb[0].mxu0 %v2496
      %v2735 = vpop.f32.mrb[0].mxu0
      %v2736 = vadd.f32 %v2601, %v2735
      %v2737 = vpop.f32.mrb[0].mxu0
      %v2738 = vpop.f32.mrb[0].mxu0
      %v2739 = vadd.f32 %v2604, %v2738
      %v2740 = vpop.f32.mrb[0].mxu0
      %2741 = vmatprep.mubr.bf16.mxu0 0
      %2742 = vmatmul.mubr.bf16.gmra.mrb[0].mxu0 %v2499
      %v2743 = vpop.f32.mrb[0].mxu0
      %v2744 = vadd.f32 %v2609, %v2743
      %v2745 = vpop.f32.mrb[0].mxu0
      %v2746 = vpop.f32.mrb[0].mxu0
      %v2747 = vadd.f32 %v2612, %v2746
      %v2748 = vpop.f32.mrb[0].mxu0
      %2749 = vmatprep.mubr.bf16.mxu0 0
      %2750 = vmatmul.mubr.bf16.gmra.mrb[0].mxu0 %v2502
      %v2751 = vpop.f32.mrb[0].mxu0
      %v2752 = vadd.f32 %v2617, %v2751
      %v2753 = vpop.f32.mrb[0].mxu0
      %v2754 = vpop.f32.mrb[0].mxu0
      %v2755 = vadd.f32 %v2620, %v2754
      %v2756 = vpop.f32.mrb[0].mxu0
      %2757 = vmatprep.mubr.bf16.mxu0 0
      %2758 = vmatmul.mubr.bf16.gmra.mrb[0].mxu0 %v2505
      %v2759 = vpop.f32.mrb[0].mxu0
      %v2760 = vadd.f32 %v2625, %v2759
      %v2761 = vpop.f32.mrb[0].mxu0
      %v2762 = vpop.f32.mrb[0].mxu0
      %v2763 = vpop.f32.mrb[0].mxu0
      %2764 = vdwg.mxu0
      %s2765 = scalar_lea.vmem %s3, 32
      %v2766 = vld [vmem:[%s2765] sm:$0xf]
      %v2767 = vld [vmem:[%s2765 + $0x4] sm:$0xf]
      %v2768 = vld [vmem:[%s2765 + $0x8] sm:$0xf]
      %v2769 = vld [vmem:[%s2765 + $0xc] sm:$0xf]
      %v2774 = vunpack.c.l.b16 %v2766
      %v2775 = vunpack.c.l.b16 %v2767
      %v2776 = vunpack.c.l.b16 %v2768
      %v2777 = vunpack.c.l.b16 %v2769
      %v2778 = vpack.c.b16 %v2775, %v2774
      %v2779 = vpack.c.b16 %v2777, %v2776
      %v2783 = vsel %vm2476, %v2452, 0
      %2785 = vmatprep.subr.bf16.mxu0 0
      %2786 = vmatpush1.bf16.msra.mxu0 %v2778
      %2787 = vmatprep.subr.bf16.mxu0 0
      %2788 = vmatpush1.bf16.msra.mxu0 %v2779
      %2789 = vmatprep.subr.bf16.mxu0 0
      %2790 = vmatpush1.bf16.msra.mxu0 0
      %2791 = vmatprep.subr.bf16.mxu0 0
      %2792 = vmatpush1.bf16.msra.mxu0 0
      %2793 = vmatprep.subr.bf16.mxu0 0
      %2794 = vmatpush1.bf16.msra.mxu0 0
      %2795 = vmatprep.subr.bf16.mxu0 0
      %2796 = vmatpush1.bf16.msra.mxu0 0
      %2797 = vmatprep.subr.bf16.mxu0 0
      %2798 = vmatpush1.bf16.msra.mxu0 0
      %2799 = vmatprep.subr.bf16.mxu0 0
      %2800 = vmatpush1.bf16.msra.mxu0 0
      %2801 = vmatprep.subr.bf16.mxu0 0
      %2802 = vmatpush1.bf16.msra.mxu0 0
      %2803 = vmatprep.subr.bf16.mxu0 0
      %2804 = vmatpush1.bf16.msra.mxu0 0
      %2805 = vmatprep.subr.bf16.mxu0 0
      %2806 = vmatpush1.bf16.msra.mxu0 0
      %2807 = vmatprep.subr.bf16.mxu0 0
      %2808 = vmatpush1.bf16.msra.mxu0 0
      %2809 = vmatprep.subr.bf16.mxu0 0
      %2810 = vmatpush1.bf16.msra.mxu0 0
      %2811 = vmatprep.subr.bf16.mxu0 0
      %2812 = vmatpush1.bf16.msra.mxu0 0
      %2813 = vmatprep.subr.bf16.mxu0 0
      %2814 = vmatpush1.bf16.msra.mxu0 0
      %2815 = vmatprep.subr.bf16.mxu0 0
      %2816 = vmatpush1.bf16.msra.mxu0 0
      %2817 = vmatprep.mubr.bf16.mxu0 0
      %2818 = vmatmul.mubr.bf16.gmra.mrb[0].mxu0 %v2481
      %v2819 = vpop.f32.mrb[0].mxu0
      %v2820 = vadd.f32 0.0, %v2819
      %v2821 = vpop.f32.mrb[0].mxu0
      %v2822 = vpop.f32.mrb[0].mxu0
      %v2823 = vadd.f32 0.0, %v2822
      %v2824 = vpop.f32.mrb[0].mxu0
      %2825 = vmatprep.mubr.bf16.mxu0 0
      %2826 = vmatmul.mubr.bf16.gmra.mrb[0].mxu0 %v2484
      %v2827 = vpop.f32.mrb[0].mxu0
      %v2828 = vadd.f32 0.0, %v2827
      %v2829 = vpop.f32.mrb[0].mxu0
      %v2830 = vpop.f32.mrb[0].mxu0
      %v2831 = vadd.f32 0.0, %v2830
      %v2832 = vpop.f32.mrb[0].mxu0
      %2833 = vmatprep.mubr.bf16.mxu0 0
      %2834 = vmatmul.mubr.bf16.gmra.mrb[0].mxu0 %v2487
      %v2835 = vpop.f32.mrb[0].mxu0
      %v2836 = vadd.f32 0.0, %v2835
      %v2837 = vpop.f32.mrb[0].mxu0
      %v2838 = vpop.f32.mrb[0].mxu0
      %v2839 = vadd.f32 0.0, %v2838
      %v2840 = vpop.f32.mrb[0].mxu0
      %2841 = vmatprep.mubr.bf16.mxu0 0
      %2842 = vmatmul.mubr.bf16.gmra.mrb[0].mxu0 %v2490
      %v2843 = vpop.f32.mrb[0].mxu0
      %v2844 = vadd.f32 0.0, %v2843
      %v2845 = vpop.f32.mrb[0].mxu0
      %v2846 = vpop.f32.mrb[0].mxu0
      %v2847 = vadd.f32 0.0, %v2846
      %v2848 = vpop.f32.mrb[0].mxu0
      %2849 = vmatprep.mubr.bf16.mxu0 0
      %2850 = vmatmul.mubr.bf16.gmra.mrb[0].mxu0 %v2493
      %v2851 = vpop.f32.mrb[0].mxu0
      %v2852 = vadd.f32 0.0, %v2851
      %v2853 = vpop.f32.mrb[0].mxu0
      %v2854 = vpop.f32.mrb[0].mxu0
      %v2855 = vadd.f32 0.0, %v2854
      %v2856 = vpop.f32.mrb[0].mxu0
      %2857 = vmatprep.mubr.bf16.mxu0 0
      %2858 = vmatmul.mubr.bf16.gmra.mrb[0].mxu0 %v2496
      %v2859 = vpop.f32.mrb[0].mxu0
      %v2860 = vadd.f32 0.0, %v2859
      %v2861 = vpop.f32.mrb[0].mxu0
      %v2862 = vpop.f32.mrb[0].mxu0
      %v2863 = vadd.f32 0.0, %v2862
      %v2864 = vpop.f32.mrb[0].mxu0
      %2865 = vmatprep.mubr.bf16.mxu0 0
      %2866 = vmatmul.mubr.bf16.gmra.mrb[0].mxu0 %v2499
      %v2867 = vpop.f32.mrb[0].mxu0
      %v2868 = vadd.f32 0.0, %v2867
      %v2869 = vpop.f32.mrb[0].mxu0
      %v2870 = vpop.f32.mrb[0].mxu0
      %v2871 = vadd.f32 0.0, %v2870
      %v2872 = vpop.f32.mrb[0].mxu0
      %2873 = vmatprep.mubr.bf16.mxu0 0
      %2874 = vmatmul.mubr.bf16.gmra.mrb[0].mxu0 %v2502
      %v2875 = vpop.f32.mrb[0].mxu0
      %v2876 = vadd.f32 0.0, %v2875
      %v2877 = vpop.f32.mrb[0].mxu0
      %v2878 = vpop.f32.mrb[0].mxu0
      %v2879 = vadd.f32 0.0, %v2878
      %v2880 = vpop.f32.mrb[0].mxu0
      %2881 = vmatprep.mubr.bf16.mxu0 0
      %2882 = vmatmul.mubr.bf16.gmra.mrb[0].mxu0 %v2505
      %v2883 = vpop.f32.mrb[0].mxu0
      %v2884 = vadd.f32 0.0, %v2883
      %v2885 = vpop.f32.mrb[0].mxu0
      %v2886 = vpop.f32.mrb[0].mxu0
      %v2887 = vadd.f32 0.0, %v2886
      %v2888 = vpop.f32.mrb[0].mxu0
      %2889 = vmatprep.mubr.bf16.mxu0 0
      %2890 = vmatmul.mubr.bf16.gmra.mrb[0].mxu0 %v2508
      %v2891 = vpop.f32.mrb[0].mxu0
      %v2892 = vadd.f32 0.0, %v2891
      %v2893 = vpop.f32.mrb[0].mxu0
      %v2894 = vpop.f32.mrb[0].mxu0
      %v2895 = vadd.f32 0.0, %v2894
      %v2896 = vpop.f32.mrb[0].mxu0
      %2897 = vmatprep.mubr.bf16.mxu0 0
      %2898 = vmatmul.mubr.bf16.gmra.mrb[0].mxu0 %v2783
      %v2899 = vpop.f32.mrb[0].mxu0
      %v2900 = vadd.f32 0.0, %v2899
      %v2901 = vpop.f32.mrb[0].mxu0
      %v2902 = vpop.f32.mrb[0].mxu0
      %v2903 = vpop.f32.mrb[0].mxu0
      %2904 = vdwg.mxu0
      %v2905 = vadd.f32 %v2680, %v2820
      %v2906 = vadd.f32 %v2683, %v2823
      %v2907 = vadd.f32 %v2688, %v2828
      %v2908 = vadd.f32 %v2691, %v2831
      %v2909 = vadd.f32 %v2696, %v2836
      %v2910 = vadd.f32 %v2699, %v2839
      %v2911 = vadd.f32 %v2704, %v2844
      %v2912 = vadd.f32 %v2707, %v2847
      %v2913 = vadd.f32 %v2712, %v2852
      %v2914 = vadd.f32 %v2715, %v2855
      %v2915 = vadd.f32 %v2720, %v2860
      %v2916 = vadd.f32 %v2723, %v2863
      %v2917 = vadd.f32 %v2728, %v2868
      %v2918 = vadd.f32 %v2731, %v2871
      %v2919 = vadd.f32 %v2736, %v2876
      %v2920 = vadd.f32 %v2739, %v2879
      %v2921 = vadd.f32 %v2744, %v2884
      %v2922 = vadd.f32 %v2747, %v2887
      %v2923 = vadd.f32 %v2752, %v2892
      %v2924 = vadd.f32 %v2755, %v2895
      %v2925 = vadd.f32 %v2760, %v2900
      %s2926 = scalar_lea.vmem %s3, 48
      %v2927 = vld [vmem:[%s2926] sm:$0xf]
      %v2928 = vld [vmem:[%s2926 + $0x4] sm:$0xf]
      %v2929 = vld [vmem:[%s2926 + $0x8] sm:$0xf]
      %v2930 = vld [vmem:[%s2926 + $0xc] sm:$0xf]
      %v2935 = vunpack.c.l.b16 %v2927
      %v2936 = vunpack.c.l.b16 %v2928
      %v2937 = vunpack.c.l.b16 %v2929
      %v2938 = vunpack.c.l.b16 %v2930
      %v2939 = vpack.c.b16 %v2936, %v2935
      %v2940 = vpack.c.b16 %v2938, %v2937
      %v2944 = vsel %vm2476, %v2453, 0
      %2946 = vmatprep.subr.bf16.mxu0 0
      %2947 = vmatpush1.bf16.msra.mxu0 %v2939
      %2948 = vmatprep.subr.bf16.mxu0 0
      %2949 = vmatpush1.bf16.msra.mxu0 %v2940
      %2950 = vmatprep.subr.bf16.mxu0 0
      %2951 = vmatpush1.bf16.msra.mxu0 0
      %2952 = vmatprep.subr.bf16.mxu0 0
      %2953 = vmatpush1.bf16.msra.mxu0 0
      %2954 = vmatprep.subr.bf16.mxu0 0
      %2955 = vmatpush1.bf16.msra.mxu0 0
      %2956 = vmatprep.subr.bf16.mxu0 0
      %2957 = vmatpush1.bf16.msra.mxu0 0
      %2958 = vmatprep.subr.bf16.mxu0 0
      %2959 = vmatpush1.bf16.msra.mxu0 0
      %2960 = vmatprep.subr.bf16.mxu0 0
      %2961 = vmatpush1.bf16.msra.mxu0 0
      %2962 = vmatprep.subr.bf16.mxu0 0
      %2963 = vmatpush1.bf16.msra.mxu0 0
      %2964 = vmatprep.subr.bf16.mxu0 0
      %2965 = vmatpush1.bf16.msra.mxu0 0
      %2966 = vmatprep.subr.bf16.mxu0 0
      %2967 = vmatpush1.bf16.msra.mxu0 0
      %2968 = vmatprep.subr.bf16.mxu0 0
      %2969 = vmatpush1.bf16.msra.mxu0 0
      %2970 = vmatprep.subr.bf16.mxu0 0
      %2971 = vmatpush1.bf16.msra.mxu0 0
      %2972 = vmatprep.subr.bf16.mxu0 0
      %2973 = vmatpush1.bf16.msra.mxu0 0
      %2974 = vmatprep.subr.bf16.mxu0 0
      %2975 = vmatpush1.bf16.msra.mxu0 0
      %2976 = vmatprep.subr.bf16.mxu0 0
      %2977 = vmatpush1.bf16.msra.mxu0 0
      %2978 = vmatprep.mubr.bf16.mxu0 0
      %2979 = vmatmul.mubr.bf16.gmra.mrb[0].mxu0 %v2484
      %v2980 = vpop.f32.mrb[0].mxu0
      %v2981 = vadd.f32 0.0, %v2980
      %v2982 = vpop.f32.mrb[0].mxu0
      %v2983 = vpop.f32.mrb[0].mxu0
      %v2984 = vadd.f32 0.0, %v2983
      %v2985 = vpop.f32.mrb[0].mxu0
      %2986 = vmatprep.mubr.bf16.mxu0 0
      %2987 = vmatmul.mubr.bf16.gmra.mrb[0].mxu0 %v2487
      %v2988 = vpop.f32.mrb[0].mxu0
      %v2989 = vadd.f32 0.0, %v2988
      %v2990 = vpop.f32.mrb[0].mxu0
      %v2991 = vpop.f32.mrb[0].mxu0
      %v2992 = vadd.f32 0.0, %v2991
      %v2993 = vpop.f32.mrb[0].mxu0
      %2994 = vmatprep.mubr.bf16.mxu0 0
      %2995 = vmatmul.mubr.bf16.gmra.mrb[0].mxu0 %v2490
      %v2996 = vpop.f32.mrb[0].mxu0
      %v2997 = vadd.f32 0.0, %v2996
      %v2998 = vpop.f32.mrb[0].mxu0
      %v2999 = vpop.f32.mrb[0].mxu0
      %v3000 = vadd.f32 0.0, %v2999
      %v3001 = vpop.f32.mrb[0].mxu0
      %3002 = vmatprep.mubr.bf16.mxu0 0
      %3003 = vmatmul.mubr.bf16.gmra.mrb[0].mxu0 %v2493
      %v3004 = vpop.f32.mrb[0].mxu0
      %v3005 = vadd.f32 0.0, %v3004
      %v3006 = vpop.f32.mrb[0].mxu0
      %v3007 = vpop.f32.mrb[0].mxu0
      %v3008 = vadd.f32 0.0, %v3007
      %v3009 = vpop.f32.mrb[0].mxu0
      %3010 = vmatprep.mubr.bf16.mxu0 0
      %3011 = vmatmul.mubr.bf16.gmra.mrb[0].mxu0 %v2496
      %v3012 = vpop.f32.mrb[0].mxu0
      %v3013 = vadd.f32 0.0, %v3012
      %v3014 = vpop.f32.mrb[0].mxu0
      %v3015 = vpop.f32.mrb[0].mxu0
      %v3016 = vadd.f32 0.0, %v3015
      %v3017 = vpop.f32.mrb[0].mxu0
      %3018 = vmatprep.mubr.bf16.mxu0 0
      %3019 = vmatmul.mubr.bf16.gmra.mrb[0].mxu0 %v2499
      %v3020 = vpop.f32.mrb[0].mxu0
      %v3021 = vadd.f32 0.0, %v3020
      %v3022 = vpop.f32.mrb[0].mxu0
      %v3023 = vpop.f32.mrb[0].mxu0
      %v3024 = vadd.f32 0.0, %v3023
      %v3025 = vpop.f32.mrb[0].mxu0
      %3026 = vmatprep.mubr.bf16.mxu0 0
      %3027 = vmatmul.mubr.bf16.gmra.mrb[0].mxu0 %v2502
      %v3028 = vpop.f32.mrb[0].mxu0
      %v3029 = vadd.f32 0.0, %v3028
      %v3030 = vpop.f32.mrb[0].mxu0
      %v3031 = vpop.f32.mrb[0].mxu0
      %v3032 = vadd.f32 0.0, %v3031
      %v3033 = vpop.f32.mrb[0].mxu0
      %3034 = vmatprep.mubr.bf16.mxu0 0
      %3035 = vmatmul.mubr.bf16.gmra.mrb[0].mxu0 %v2505
      %v3036 = vpop.f32.mrb[0].mxu0
      %v3037 = vadd.f32 0.0, %v3036
      %v3038 = vpop.f32.mrb[0].mxu0
      %v3039 = vpop.f32.mrb[0].mxu0
      %v3040 = vadd.f32 0.0, %v3039
      %v3041 = vpop.f32.mrb[0].mxu0
      %3042 = vmatprep.mubr.bf16.mxu0 0
      %3043 = vmatmul.mubr.bf16.gmra.mrb[0].mxu0 %v2508
      %v3044 = vpop.f32.mrb[0].mxu0
      %v3045 = vadd.f32 0.0, %v3044
      %v3046 = vpop.f32.mrb[0].mxu0
      %v3047 = vpop.f32.mrb[0].mxu0
      %v3048 = vadd.f32 0.0, %v3047
      %v3049 = vpop.f32.mrb[0].mxu0
      %3050 = vmatprep.mubr.bf16.mxu0 0
      %3051 = vmatmul.mubr.bf16.gmra.mrb[0].mxu0 %v2783
      %v3052 = vpop.f32.mrb[0].mxu0
      %v3053 = vadd.f32 0.0, %v3052
      %v3054 = vpop.f32.mrb[0].mxu0
      %v3055 = vpop.f32.mrb[0].mxu0
      %v3056 = vadd.f32 0.0, %v3055
      %v3057 = vpop.f32.mrb[0].mxu0
      %3058 = vmatprep.mubr.bf16.mxu0 0
      %3059 = vmatmul.mubr.bf16.gmra.mrb[0].mxu0 %v2944
      %v3060 = vpop.f32.mrb[0].mxu0
      %v3061 = vadd.f32 0.0, %v3060
      %v3062 = vpop.f32.mrb[0].mxu0
      %v3063 = vpop.f32.mrb[0].mxu0
      %v3064 = vpop.f32.mrb[0].mxu0
      %3065 = vdwg.mxu0
      %v3066 = vadd.f32 %v2905, %v2981
      %v3067 = vadd.f32 %v2906, %v2984
      %v3068 = vadd.f32 %v2907, %v2989
      %v3069 = vadd.f32 %v2908, %v2992
      %v3070 = vadd.f32 %v2909, %v2997
      %v3071 = vadd.f32 %v2910, %v3000
      %v3072 = vadd.f32 %v2911, %v3005
      %v3073 = vadd.f32 %v2912, %v3008
      %v3074 = vadd.f32 %v2913, %v3013
      %v3075 = vadd.f32 %v2914, %v3016
      %v3076 = vadd.f32 %v2915, %v3021
      %v3077 = vadd.f32 %v2916, %v3024
      %v3078 = vadd.f32 %v2917, %v3029
      %v3079 = vadd.f32 %v2918, %v3032
      %v3080 = vadd.f32 %v2919, %v3037
      %v3081 = vadd.f32 %v2920, %v3040
      %v3082 = vadd.f32 %v2921, %v3045
      %v3083 = vadd.f32 %v2922, %v3048
      %v3084 = vadd.f32 %v2923, %v3053
      %v3085 = vadd.f32 %v2924, %v3056
      %v3086 = vadd.f32 %v2925, %v3061
      %s3087 = scalar_lea.vmem %s3, 64
      %v3088 = vld [vmem:[%s3087] sm:$0xf]
      %v3089 = vld [vmem:[%s3087 + $0x4] sm:$0xf]
      %v3090 = vld [vmem:[%s3087 + $0x8] sm:$0xf]
      %v3091 = vld [vmem:[%s3087 + $0xc] sm:$0xf]
      %v3096 = vunpack.c.l.b16 %v3088
      %v3097 = vunpack.c.l.b16 %v3089
      %v3098 = vunpack.c.l.b16 %v3090
      %v3099 = vunpack.c.l.b16 %v3091
      %v3100 = vpack.c.b16 %v3097, %v3096
      %v3101 = vpack.c.b16 %v3099, %v3098
      %v3105 = vsel %vm2476, %v2454, 0
      %3107 = vmatprep.subr.bf16.mxu0 0
      %3108 = vmatpush1.bf16.msra.mxu0 %v3100
      %3109 = vmatprep.subr.bf16.mxu0 0
      %3110 = vmatpush1.bf16.msra.mxu0 %v3101
      %3111 = vmatprep.subr.bf16.mxu0 0
      %3112 = vmatpush1.bf16.msra.mxu0 0
      %3113 = vmatprep.subr.bf16.mxu0 0
      %3114 = vmatpush1.bf16.msra.mxu0 0
      %3115 = vmatprep.subr.bf16.mxu0 0
      %3116 = vmatpush1.bf16.msra.mxu0 0
      %3117 = vmatprep.subr.bf16.mxu0 0
      %3118 = vmatpush1.bf16.msra.mxu0 0
      %3119 = vmatprep.subr.bf16.mxu0 0
      %3120 = vmatpush1.bf16.msra.mxu0 0
      %3121 = vmatprep.subr.bf16.mxu0 0
      %3122 = vmatpush1.bf16.msra.mxu0 0
      %3123 = vmatprep.subr.bf16.mxu0 0
      %3124 = vmatpush1.bf16.msra.mxu0 0
      %3125 = vmatprep.subr.bf16.mxu0 0
      %3126 = vmatpush1.bf16.msra.mxu0 0
      %3127 = vmatprep.subr.bf16.mxu0 0
      %3128 = vmatpush1.bf16.msra.mxu0 0
      %3129 = vmatprep.subr.bf16.mxu0 0
      %3130 = vmatpush1.bf16.msra.mxu0 0
      %3131 = vmatprep.subr.bf16.mxu0 0
      %3132 = vmatpush1.bf16.msra.mxu0 0
      %3133 = vmatprep.subr.bf16.mxu0 0
      %3134 = vmatpush1.bf16.msra.mxu0 0
      %3135 = vmatprep.subr.bf16.mxu0 0
      %3136 = vmatpush1.bf16.msra.mxu0 0
      %3137 = vmatprep.subr.bf16.mxu0 0
      %3138 = vmatpush1.bf16.msra.mxu0 0
      %3139 = vmatprep.mubr.bf16.mxu0 0
      %3140 = vmatmul.mubr.bf16.gmra.mrb[0].mxu0 %v2487
      %v3141 = vpop.f32.mrb[0].mxu0
      %v3142 = vadd.f32 0.0, %v3141
      %v3143 = vpop.f32.mrb[0].mxu0
      %v3144 = vpop.f32.mrb[0].mxu0
      %v3145 = vadd.f32 0.0, %v3144
      %v3146 = vpop.f32.mrb[0].mxu0
      %3147 = vmatprep.mubr.bf16.mxu0 0
      %3148 = vmatmul.mubr.bf16.gmra.mrb[0].mxu0 %v2490
      %v3149 = vpop.f32.mrb[0].mxu0
      %v3150 = vadd.f32 0.0, %v3149
      %v3151 = vpop.f32.mrb[0].mxu0
      %v3152 = vpop.f32.mrb[0].mxu0
      %v3153 = vadd.f32 0.0, %v3152
      %v3154 = vpop.f32.mrb[0].mxu0
      %3155 = vmatprep.mubr.bf16.mxu0 0
      %3156 = vmatmul.mubr.bf16.gmra.mrb[0].mxu0 %v2493
      %v3157 = vpop.f32.mrb[0].mxu0
      %v3158 = vadd.f32 0.0, %v3157
      %v3159 = vpop.f32.mrb[0].mxu0
      %v3160 = vpop.f32.mrb[0].mxu0
      %v3161 = vadd.f32 0.0, %v3160
      %v3162 = vpop.f32.mrb[0].mxu0
      %3163 = vmatprep.mubr.bf16.mxu0 0
      %3164 = vmatmul.mubr.bf16.gmra.mrb[0].mxu0 %v2496
      %v3165 = vpop.f32.mrb[0].mxu0
      %v3166 = vadd.f32 0.0, %v3165
      %v3167 = vpop.f32.mrb[0].mxu0
      %v3168 = vpop.f32.mrb[0].mxu0
      %v3169 = vadd.f32 0.0, %v3168
      %v3170 = vpop.f32.mrb[0].mxu0
      %3171 = vmatprep.mubr.bf16.mxu0 0
      %3172 = vmatmul.mubr.bf16.gmra.mrb[0].mxu0 %v2499
      %v3173 = vpop.f32.mrb[0].mxu0
      %v3174 = vadd.f32 0.0, %v3173
      %v3175 = vpop.f32.mrb[0].mxu0
      %v3176 = vpop.f32.mrb[0].mxu0
      %v3177 = vadd.f32 0.0, %v3176
      %v3178 = vpop.f32.mrb[0].mxu0
      %3179 = vmatprep.mubr.bf16.mxu0 0
      %3180 = vmatmul.mubr.bf16.gmra.mrb[0].mxu0 %v2502
      %v3181 = vpop.f32.mrb[0].mxu0
      %v3182 = vadd.f32 0.0, %v3181
      %v3183 = vpop.f32.mrb[0].mxu0
      %v3184 = vpop.f32.mrb[0].mxu0
      %v3185 = vadd.f32 0.0, %v3184
      %v3186 = vpop.f32.mrb[0].mxu0
      %3187 = vmatprep.mubr.bf16.mxu0 0
      %3188 = vmatmul.mubr.bf16.gmra.mrb[0].mxu0 %v2505
      %v3189 = vpop.f32.mrb[0].mxu0
      %v3190 = vadd.f32 0.0, %v3189
      %v3191 = vpop.f32.mrb[0].mxu0
      %v3192 = vpop.f32.mrb[0].mxu0
      %v3193 = vadd.f32 0.0, %v3192
      %v3194 = vpop.f32.mrb[0].mxu0
      %3195 = vmatprep.mubr.bf16.mxu0 0
      %3196 = vmatmul.mubr.bf16.gmra.mrb[0].mxu0 %v2508
      %v3197 = vpop.f32.mrb[0].mxu0
      %v3198 = vadd.f32 0.0, %v3197
      %v3199 = vpop.f32.mrb[0].mxu0
      %v3200 = vpop.f32.mrb[0].mxu0
      %v3201 = vadd.f32 0.0, %v3200
      %v3202 = vpop.f32.mrb[0].mxu0
      %3203 = vmatprep.mubr.bf16.mxu0 0
      %3204 = vmatmul.mubr.bf16.gmra.mrb[0].mxu0 %v2783
      %v3205 = vpop.f32.mrb[0].mxu0
      %v3206 = vadd.f32 0.0, %v3205
      %v3207 = vpop.f32.mrb[0].mxu0
      %v3208 = vpop.f32.mrb[0].mxu0
      %v3209 = vadd.f32 0.0, %v3208
      %v3210 = vpop.f32.mrb[0].mxu0
      %3211 = vmatprep.mubr.bf16.mxu0 0
      %3212 = vmatmul.mubr.bf16.gmra.mrb[0].mxu0 %v2944
      %v3213 = vpop.f32.mrb[0].mxu0
      %v3214 = vadd.f32 0.0, %v3213
      %v3215 = vpop.f32.mrb[0].mxu0
      %v3216 = vpop.f32.mrb[0].mxu0
      %v3217 = vadd.f32 0.0, %v3216
      %v3218 = vpop.f32.mrb[0].mxu0
      %3219 = vmatprep.mubr.bf16.mxu0 0
      %3220 = vmatmul.mubr.bf16.gmra.mrb[0].mxu0 %v3105
      %v3221 = vpop.f32.mrb[0].mxu0
      %v3222 = vadd.f32 0.0, %v3221
      %v3223 = vpop.f32.mrb[0].mxu0
      %v3224 = vpop.f32.mrb[0].mxu0
      %v3225 = vpop.f32.mrb[0].mxu0
      %3226 = vdwg.mxu0
      %v3227 = vadd.f32 %v3066, %v3142
      %v3228 = vadd.f32 %v3067, %v3145
      %v3229 = vadd.f32 %v3068, %v3150
      %v3230 = vadd.f32 %v3069, %v3153
      %v3231 = vadd.f32 %v3070, %v3158
      %v3232 = vadd.f32 %v3071, %v3161
      %v3233 = vadd.f32 %v3072, %v3166
      %v3234 = vadd.f32 %v3073, %v3169
      %v3235 = vadd.f32 %v3074, %v3174
      %v3236 = vadd.f32 %v3075, %v3177
      %v3237 = vadd.f32 %v3076, %v3182
      %v3238 = vadd.f32 %v3077, %v3185
      %v3239 = vadd.f32 %v3078, %v3190
      %v3240 = vadd.f32 %v3079, %v3193
      %v3241 = vadd.f32 %v3080, %v3198
      %v3242 = vadd.f32 %v3081, %v3201
      %v3243 = vadd.f32 %v3082, %v3206
      %v3244 = vadd.f32 %v3083, %v3209
      %v3245 = vadd.f32 %v3084, %v3214
      %v3246 = vadd.f32 %v3085, %v3217
      %v3247 = vadd.f32 %v3086, %v3222
      %v3248 = vld [vmem:[%s4] sm:$0x1]
      %v3250 = vlaneseq
      %v3251 = vshrl.u32 %v3250, 7
      %v3252 = vsub.s32 0, %v3251
      %v3253 = vrot.slane %v3248, %v3252
      %v3255 = vadd.f32 %v3227, %v3253
      %v3256 = vadd.f32 %v3228, %v3253
      %v3257 = vadd.f32 %v3229, %v3253
      %v3258 = vadd.f32 %v3230, %v3253
      %v3259 = vadd.f32 %v3231, %v3253
      %v3260 = vadd.f32 %v3232, %v3253
      %v3261 = vadd.f32 %v3233, %v3253
      %v3262 = vadd.f32 %v3234, %v3253
      %v3263 = vadd.f32 %v3235, %v3253
      %v3264 = vadd.f32 %v3236, %v3253
      %v3265 = vadd.f32 %v3237, %v3253
      %v3266 = vadd.f32 %v3238, %v3253
      %v3267 = vadd.f32 %v3239, %v3253
      %v3268 = vadd.f32 %v3240, %v3253
      %v3269 = vadd.f32 %v3241, %v3253
      %v3270 = vadd.f32 %v3242, %v3253
      %v3271 = vadd.f32 %v3243, %v3253
      %v3272 = vadd.f32 %v3244, %v3253
      %v3273 = vadd.f32 %v3245, %v3253
      %v3274 = vadd.f32 %v3246, %v3253
      %v3275 = vadd.f32 %v3247, %v3253
      %v3276 = vmax.f32 %v3255, 0.0
      %v3277 = vmax.f32 %v3256, 0.0
      %v3278 = vmax.f32 %v3257, 0.0
      %v3279 = vmax.f32 %v3258, 0.0
      %v3280 = vmax.f32 %v3259, 0.0
      %v3281 = vmax.f32 %v3260, 0.0
      %v3282 = vmax.f32 %v3261, 0.0
      %v3283 = vmax.f32 %v3262, 0.0
      %v3284 = vmax.f32 %v3263, 0.0
      %v3285 = vmax.f32 %v3264, 0.0
      %v3286 = vmax.f32 %v3265, 0.0
      %v3287 = vmax.f32 %v3266, 0.0
      %v3288 = vmax.f32 %v3267, 0.0
      %v3289 = vmax.f32 %v3268, 0.0
      %v3290 = vmax.f32 %v3269, 0.0
      %v3291 = vmax.f32 %v3270, 0.0
      %v3292 = vmax.f32 %v3271, 0.0
      %v3293 = vmax.f32 %v3272, 0.0
      %v3294 = vmax.f32 %v3273, 0.0
      %v3295 = vmax.f32 %v3274, 0.0
      %v3296 = vmax.f32 %v3275, 0.0
      %vm3312 = vcmask 1046528
      %v3313 = vrot.slane %v3276, 1
      %v3314 = vrot.slane %v3277, 1
      %v3315 = vsel %vm3312, %v3313, %v3314
      %v3316 = vrot.slane %v3278, 1
      %v3317 = vsel %vm3312, %v3314, %v3316
      %v3318 = vrot.slane %v3280, 1
      %v3319 = vrot.slane %v3281, 1
      %v3320 = vsel %vm3312, %v3318, %v3319
      %v3321 = vrot.slane %v3282, 1
      %v3322 = vsel %vm3312, %v3319, %v3321
      %v3323 = vrot.slane %v3284, 1
      %v3324 = vrot.slane %v3285, 1
      %v3325 = vsel %vm3312, %v3323, %v3324
      %v3326 = vrot.slane %v3286, 1
      %v3327 = vsel %vm3312, %v3324, %v3326
      %v3328 = vrot.slane %v3288, 1
      %v3329 = vrot.slane %v3289, 1
      %v3330 = vsel %vm3312, %v3328, %v3329
      %v3331 = vrot.slane %v3290, 1
      %v3332 = vsel %vm3312, %v3329, %v3331
      %v3333 = vrot.slane %v3292, 1
      %v3334 = vrot.slane %v3293, 1
      %v3335 = vsel %vm3312, %v3333, %v3334
      %v3336 = vrot.slane %v3294, 1
      %v3337 = vsel %vm3312, %v3334, %v3336
      %v3348 = vmax.f32 %v3276, %v3315
      %v3349 = vmax.f32 %v3277, %v3317
      %v3350 = vmax.f32 %v3280, %v3320
      %v3351 = vmax.f32 %v3281, %v3322
      %v3352 = vmax.f32 %v3284, %v3325
      %v3353 = vmax.f32 %v3285, %v3327
      %v3354 = vmax.f32 %v3288, %v3330
      %v3355 = vmax.f32 %v3289, %v3332
      %v3356 = vmax.f32 %v3292, %v3335
      %v3357 = vmax.f32 %v3293, %v3337
      %v3364 = vrot.slane %v3279, 1
      %v3365 = vsel %vm3312, %v3316, %v3364
      %v3366 = vsel %vm3312, %v3364, %v3318
      %v3367 = vrot.slane %v3283, 1
      %v3368 = vsel %vm3312, %v3321, %v3367
      %v3369 = vsel %vm3312, %v3367, %v3323
      %v3370 = vrot.slane %v3287, 1
      %v3371 = vsel %vm3312, %v3326, %v3370
      %v3372 = vsel %vm3312, %v3370, %v3328
      %v3373 = vrot.slane %v3291, 1
      %v3374 = vsel %vm3312, %v3331, %v3373
      %v3375 = vsel %vm3312, %v3373, %v3333
      %v3376 = vrot.slane %v3295, 1
      %v3377 = vsel %vm3312, %v3336, %v3376
      %v3378 = vrot.slane %v3296, 1
      %v3379 = vsel %vm3312, %v3376, %v3378
      %v3390 = vmax.f32 %v3278, %v3365
      %v3391 = vmax.f32 %v3279, %v3366
      %v3392 = vmax.f32 %v3282, %v3368
      %v3393 = vmax.f32 %v3283, %v3369
      %v3394 = vmax.f32 %v3286, %v3371
      %v3395 = vmax.f32 %v3287, %v3372
      %v3396 = vmax.f32 %v3290, %v3374
      %v3397 = vmax.f32 %v3291, %v3375
      %v3398 = vmax.f32 %v3294, %v3377
      %v3399 = vmax.f32 %v3295, %v3379
      %v3400 = vmax.f32 %v3348, %v3390
      %v3401 = vmax.f32 %v3349, %v3391
      %v3402 = vmax.f32 %v3350, %v3392
      %v3403 = vmax.f32 %v3351, %v3393
      %v3404 = vmax.f32 %v3352, %v3394
      %v3405 = vmax.f32 %v3353, %v3395
      %v3406 = vmax.f32 %v3354, %v3396
      %v3407 = vmax.f32 %v3355, %v3397
      %v3408 = vmax.f32 %v3356, %v3398
      %v3409 = vmax.f32 %v3357, %v3399
      %v3410 = vld [vmem:[%s5] sm:$0xff]
      %v3411 = vld [vmem:[%s5 + $0x8] sm:$0xff]
      %s3412 = scalar_lea.vmem %s5, 16
      %v3413 = vld [vmem:[%s3412] sm:$0xff]
      %v3414 = vld [vmem:[%s3412 + $0x8] sm:$0xff]
      %v3416 = vrot.slane %v3400, 2
      %vm3417 = vcmask 130048
      %v3418 = vsel %vm3417, %v3416, 0
      %3420 = vmatprep.subr.mxu0 0.0
      %3421 = vmatpush1.msra.mxu0 %v3413
      %3422 = vmatprep.subr.mxu0 0.0
      %3423 = vmatpush1.msra.mxu0 %v3414
      %3424 = vmatprep.subr.mxu0 0.0
      %3425 = vmatpush1.msra.mxu0 0.0
      %3426 = vmatprep.subr.mxu0 0.0
      %3427 = vmatpush1.msra.mxu0 0.0
      %3428 = vmatprep.subr.mxu0 0.0
      %3429 = vmatpush1.msra.mxu0 0.0
      %3430 = vmatprep.subr.mxu0 0.0
      %3431 = vmatpush1.msra.mxu0 0.0
      %3432 = vmatprep.subr.mxu0 0.0
      %3433 = vmatpush1.msra.mxu0 0.0
      %3434 = vmatprep.subr.mxu0 0.0
      %3435 = vmatpush1.msra.mxu0 0.0
      %3436 = vmatprep.subr.mxu0 0.0
      %3437 = vmatpush1.msra.mxu0 0.0
      %3438 = vmatprep.subr.mxu0 0.0
      %3439 = vmatpush1.msra.mxu0 0.0
      %3440 = vmatprep.subr.mxu0 0.0
      %3441 = vmatpush1.msra.mxu0 0.0
      %3442 = vmatprep.subr.mxu0 0.0
      %3443 = vmatpush1.msra.mxu0 0.0
      %3444 = vmatprep.subr.mxu0 0.0
      %3445 = vmatpush1.msra.mxu0 0.0
      %3446 = vmatprep.subr.mxu0 0.0
      %3447 = vmatpush1.msra.mxu0 0.0
      %3448 = vmatprep.subr.mxu0 0.0
      %3449 = vmatpush1.msra.mxu0 0.0
      %3450 = vmatprep.subr.mxu0 0.0
      %3451 = vmatpush1.msra.mxu0 0.0
      %3452 = vmatprep.subr.mxu0 0.0
      %3453 = vmatpush1.msra.mxu0 0.0
      %3454 = vmatprep.subr.mxu0 0.0
      %3455 = vmatpush1.msra.mxu0 0.0
      %3456 = vmatprep.subr.mxu0 0.0
      %3457 = vmatpush1.msra.mxu0 0.0
      %3458 = vmatprep.subr.mxu0 0.0
      %3459 = vmatpush1.msra.mxu0 0.0
      %3460 = vmatprep.subr.mxu0 0.0
      %3461 = vmatpush1.msra.mxu0 0.0
      %3462 = vmatprep.subr.mxu0 0.0
      %3463 = vmatpush1.msra.mxu0 0.0
      %3464 = vmatprep.subr.mxu0 0.0
      %3465 = vmatpush1.msra.mxu0 0.0
      %3466 = vmatprep.subr.mxu0 0.0
      %3467 = vmatpush1.msra.mxu0 0.0
      %3468 = vmatprep.subr.mxu0 0.0
      %3469 = vmatpush1.msra.mxu0 0.0
      %3470 = vmatprep.subr.mxu0 0.0
      %3471 = vmatpush1.msra.mxu0 0.0
      %3472 = vmatprep.subr.mxu0 0.0
      %3473 = vmatpush1.msra.mxu0 0.0
      %3474 = vmatprep.subr.mxu0 0.0
      %3475 = vmatpush1.msra.mxu0 0.0
      %3476 = vmatprep.subr.mxu0 0.0
      %3477 = vmatpush1.msra.mxu0 0.0
      %3478 = vmatprep.subr.mxu0 0.0
      %3479 = vmatpush1.msra.mxu0 0.0
      %3480 = vmatprep.subr.mxu0 0.0
      %3481 = vmatpush1.msra.mxu0 0.0
      %3482 = vmatprep.subr.mxu0 0.0
      %3483 = vmatpush1.msra.mxu0 0.0
      %3484 = vmatprep.mubr.f32.mxu0 0.0
      %3485 = vmatmul.mubr.f32.gmra.mrb[0].mxu0 %v3418
      %v3486 = vpop.f32.mrb[0].mxu0
      %v3487 = vadd.f32 0.0, %v3486
      %v3488 = vpop.f32.mrb[0].mxu0
      %3489 = vdwg.mxu0
      %v3490 = vsel %vm3417, %v3400, 0
      %3492 = vmatprep.subr.mxu0 0.0
      %3493 = vmatpush1.msra.mxu0 %v3410
      %3494 = vmatprep.subr.mxu0 0.0
      %3495 = vmatpush1.msra.mxu0 %v3411
      %3496 = vmatprep.subr.mxu0 0.0
      %3497 = vmatpush1.msra.mxu0 0.0
      %3498 = vmatprep.subr.mxu0 0.0
      %3499 = vmatpush1.msra.mxu0 0.0
      %3500 = vmatprep.subr.mxu0 0.0
      %3501 = vmatpush1.msra.mxu0 0.0
      %3502 = vmatprep.subr.mxu0 0.0
      %3503 = vmatpush1.msra.mxu0 0.0
      %3504 = vmatprep.subr.mxu0 0.0
      %3505 = vmatpush1.msra.mxu0 0.0
      %3506 = vmatprep.subr.mxu0 0.0
      %3507 = vmatpush1.msra.mxu0 0.0
      %3508 = vmatprep.subr.mxu0 0.0
      %3509 = vmatpush1.msra.mxu0 0.0
      %3510 = vmatprep.subr.mxu0 0.0
      %3511 = vmatpush1.msra.mxu0 0.0
      %3512 = vmatprep.subr.mxu0 0.0
      %3513 = vmatpush1.msra.mxu0 0.0
      %3514 = vmatprep.subr.mxu0 0.0
      %3515 = vmatpush1.msra.mxu0 0.0
      %3516 = vmatprep.subr.mxu0 0.0
      %3517 = vmatpush1.msra.mxu0 0.0
      %3518 = vmatprep.subr.mxu0 0.0
      %3519 = vmatpush1.msra.mxu0 0.0
      %3520 = vmatprep.subr.mxu0 0.0
      %3521 = vmatpush1.msra.mxu0 0.0
      %3522 = vmatprep.subr.mxu0 0.0
      %3523 = vmatpush1.msra.mxu0 0.0
      %3524 = vmatprep.subr.mxu0 0.0
      %3525 = vmatpush1.msra.mxu0 0.0
      %3526 = vmatprep.subr.mxu0 0.0
      %3527 = vmatpush1.msra.mxu0 0.0
      %3528 = vmatprep.subr.mxu0 0.0
      %3529 = vmatpush1.msra.mxu0 0.0
      %3530 = vmatprep.subr.mxu0 0.0
      %3531 = vmatpush1.msra.mxu0 0.0
      %3532 = vmatprep.subr.mxu0 0.0
      %3533 = vmatpush1.msra.mxu0 0.0
      %3534 = vmatprep.subr.mxu0 0.0
      %3535 = vmatpush1.msra.mxu0 0.0
      %3536 = vmatprep.subr.mxu0 0.0
      %3537 = vmatpush1.msra.mxu0 0.0
      %3538 = vmatprep.subr.mxu0 0.0
      %3539 = vmatpush1.msra.mxu0 0.0
      %3540 = vmatprep.subr.mxu0 0.0
      %3541 = vmatpush1.msra.mxu0 0.0
      %3542 = vmatprep.subr.mxu0 0.0
      %3543 = vmatpush1.msra.mxu0 0.0
      %3544 = vmatprep.subr.mxu0 0.0
      %3545 = vmatpush1.msra.mxu0 0.0
      %3546 = vmatprep.subr.mxu0 0.0
      %3547 = vmatpush1.msra.mxu0 0.0
      %3548 = vmatprep.subr.mxu0 0.0
      %3549 = vmatpush1.msra.mxu0 0.0
      %3550 = vmatprep.subr.mxu0 0.0
      %3551 = vmatpush1.msra.mxu0 0.0
      %3552 = vmatprep.subr.mxu0 0.0
      %3553 = vmatpush1.msra.mxu0 0.0
      %3554 = vmatprep.subr.mxu0 0.0
      %3555 = vmatpush1.msra.mxu0 0.0
      %3556 = vmatprep.mubr.f32.mxu0 0.0
      %3557 = vmatmul.mubr.f32.gmra.mrb[0].mxu0 %v3490
      %v3558 = vpop.f32.mrb[0].mxu0
      %v3559 = vadd.f32 %v3487, %v3558
      %v3560 = vpop.f32.mrb[0].mxu0
      %3561 = vdwg.mxu0
      %s3562 = scalar_lea.vmem %s5, 32
      %v3563 = vld [vmem:[%s3562] sm:$0xff]
      %v3564 = vld [vmem:[%s3562 + $0x8] sm:$0xff]
      %v3565 = vrot.slane %v3400, 4
      %v3566 = vsel %vm3417, %v3565, 0
      %3568 = vmatprep.subr.mxu0 0.0
      %3569 = vmatpush1.msra.mxu0 %v3563
      %3570 = vmatprep.subr.mxu0 0.0
      %3571 = vmatpush1.msra.mxu0 %v3564
      %3572 = vmatprep.subr.mxu0 0.0
      %3573 = vmatpush1.msra.mxu0 0.0
      %3574 = vmatprep.subr.mxu0 0.0
      %3575 = vmatpush1.msra.mxu0 0.0
      %3576 = vmatprep.subr.mxu0 0.0
      %3577 = vmatpush1.msra.mxu0 0.0
      %3578 = vmatprep.subr.mxu0 0.0
      %3579 = vmatpush1.msra.mxu0 0.0
      %3580 = vmatprep.subr.mxu0 0.0
      %3581 = vmatpush1.msra.mxu0 0.0
      %3582 = vmatprep.subr.mxu0 0.0
      %3583 = vmatpush1.msra.mxu0 0.0
      %3584 = vmatprep.subr.mxu0 0.0
      %3585 = vmatpush1.msra.mxu0 0.0
      %3586 = vmatprep.subr.mxu0 0.0
      %3587 = vmatpush1.msra.mxu0 0.0
      %3588 = vmatprep.subr.mxu0 0.0
      %3589 = vmatpush1.msra.mxu0 0.0
      %3590 = vmatprep.subr.mxu0 0.0
      %3591 = vmatpush1.msra.mxu0 0.0
      %3592 = vmatprep.subr.mxu0 0.0
      %3593 = vmatpush1.msra.mxu0 0.0
      %3594 = vmatprep.subr.mxu0 0.0
      %3595 = vmatpush1.msra.mxu0 0.0
      %3596 = vmatprep.subr.mxu0 0.0
      %3597 = vmatpush1.msra.mxu0 0.0
      %3598 = vmatprep.subr.mxu0 0.0
      %3599 = vmatpush1.msra.mxu0 0.0
      %3600 = vmatprep.subr.mxu0 0.0
      %3601 = vmatpush1.msra.mxu0 0.0
      %3602 = vmatprep.subr.mxu0 0.0
      %3603 = vmatpush1.msra.mxu0 0.0
      %3604 = vmatprep.subr.mxu0 0.0
      %3605 = vmatpush1.msra.mxu0 0.0
      %3606 = vmatprep.subr.mxu0 0.0
      %3607 = vmatpush1.msra.mxu0 0.0
      %3608 = vmatprep.subr.mxu0 0.0
      %3609 = vmatpush1.msra.mxu0 0.0
      %3610 = vmatprep.subr.mxu0 0.0
      %3611 = vmatpush1.msra.mxu0 0.0
      %3612 = vmatprep.subr.mxu0 0.0
      %3613 = vmatpush1.msra.mxu0 0.0
      %3614 = vmatprep.subr.mxu0 0.0
      %3615 = vmatpush1.msra.mxu0 0.0
      %3616 = vmatprep.subr.mxu0 0.0
      %3617 = vmatpush1.msra.mxu0 0.0
      %3618 = vmatprep.subr.mxu0 0.0
      %3619 = vmatpush1.msra.mxu0 0.0
      %3620 = vmatprep.subr.mxu0 0.0
      %3621 = vmatpush1.msra.mxu0 0.0
      %3622 = vmatprep.subr.mxu0 0.0
      %3623 = vmatpush1.msra.mxu0 0.0
      %3624 = vmatprep.subr.mxu0 0.0
      %3625 = vmatpush1.msra.mxu0 0.0
      %3626 = vmatprep.subr.mxu0 0.0
      %3627 = vmatpush1.msra.mxu0 0.0
      %3628 = vmatprep.subr.mxu0 0.0
      %3629 = vmatpush1.msra.mxu0 0.0
      %3630 = vmatprep.subr.mxu0 0.0
      %3631 = vmatpush1.msra.mxu0 0.0
      %3632 = vmatprep.mubr.f32.mxu0 0.0
      %3633 = vmatmul.mubr.f32.gmra.mrb[0].mxu0 %v3566
      %v3634 = vpop.f32.mrb[0].mxu0
      %v3635 = vadd.f32 0.0, %v3634
      %v3636 = vpop.f32.mrb[0].mxu0
      %3637 = vdwg.mxu0
      %v3638 = vadd.f32 %v3559, %v3635
      %s3639 = scalar_lea.vmem %s5, 48
      %v3640 = vld [vmem:[%s3639] sm:$0xff]
      %v3641 = vld [vmem:[%s3639 + $0x8] sm:$0xff]
      %v3642 = vrot.slane %v3400, 6
      %v3643 = vsel %vm3417, %v3642, 0
      %3645 = vmatprep.subr.mxu0 0.0
      %3646 = vmatpush1.msra.mxu0 %v3640
      %3647 = vmatprep.subr.mxu0 0.0
      %3648 = vmatpush1.msra.mxu0 %v3641
      %3649 = vmatprep.subr.mxu0 0.0
      %3650 = vmatpush1.msra.mxu0 0.0
      %3651 = vmatprep.subr.mxu0 0.0
      %3652 = vmatpush1.msra.mxu0 0.0
      %3653 = vmatprep.subr.mxu0 0.0
      %3654 = vmatpush1.msra.mxu0 0.0
      %3655 = vmatprep.subr.mxu0 0.0
      %3656 = vmatpush1.msra.mxu0 0.0
      %3657 = vmatprep.subr.mxu0 0.0
      %3658 = vmatpush1.msra.mxu0 0.0
      %3659 = vmatprep.subr.mxu0 0.0
      %3660 = vmatpush1.msra.mxu0 0.0
      %3661 = vmatprep.subr.mxu0 0.0
      %3662 = vmatpush1.msra.mxu0 0.0
      %3663 = vmatprep.subr.mxu0 0.0
      %3664 = vmatpush1.msra.mxu0 0.0
      %3665 = vmatprep.subr.mxu0 0.0
      %3666 = vmatpush1.msra.mxu0 0.0
      %3667 = vmatprep.subr.mxu0 0.0
      %3668 = vmatpush1.msra.mxu0 0.0
      %3669 = vmatprep.subr.mxu0 0.0
      %3670 = vmatpush1.msra.mxu0 0.0
      %3671 = vmatprep.subr.mxu0 0.0
      %3672 = vmatpush1.msra.mxu0 0.0
      %3673 = vmatprep.subr.mxu0 0.0
      %3674 = vmatpush1.msra.mxu0 0.0
      %3675 = vmatprep.subr.mxu0 0.0
      %3676 = vmatpush1.msra.mxu0 0.0
      %3677 = vmatprep.subr.mxu0 0.0
      %3678 = vmatpush1.msra.mxu0 0.0
      %3679 = vmatprep.subr.mxu0 0.0
      %3680 = vmatpush1.msra.mxu0 0.0
      %3681 = vmatprep.subr.mxu0 0.0
      %3682 = vmatpush1.msra.mxu0 0.0
      %3683 = vmatprep.subr.mxu0 0.0
      %3684 = vmatpush1.msra.mxu0 0.0
      %3685 = vmatprep.subr.mxu0 0.0
      %3686 = vmatpush1.msra.mxu0 0.0
      %3687 = vmatprep.subr.mxu0 0.0
      %3688 = vmatpush1.msra.mxu0 0.0
      %3689 = vmatprep.subr.mxu0 0.0
      %3690 = vmatpush1.msra.mxu0 0.0
      %3691 = vmatprep.subr.mxu0 0.0
      %3692 = vmatpush1.msra.mxu0 0.0
      %3693 = vmatprep.subr.mxu0 0.0
      %3694 = vmatpush1.msra.mxu0 0.0
      %3695 = vmatprep.subr.mxu0 0.0
      %3696 = vmatpush1.msra.mxu0 0.0
      %3697 = vmatprep.subr.mxu0 0.0
      %3698 = vmatpush1.msra.mxu0 0.0
      %3699 = vmatprep.subr.mxu0 0.0
      %3700 = vmatpush1.msra.mxu0 0.0
      %3701 = vmatprep.subr.mxu0 0.0
      %3702 = vmatpush1.msra.mxu0 0.0
      %3703 = vmatprep.subr.mxu0 0.0
      %3704 = vmatpush1.msra.mxu0 0.0
      %3705 = vmatprep.subr.mxu0 0.0
      %3706 = vmatpush1.msra.mxu0 0.0
      %3707 = vmatprep.subr.mxu0 0.0
      %3708 = vmatpush1.msra.mxu0 0.0
      %3709 = vmatprep.mubr.f32.mxu0 0.0
      %3710 = vmatmul.mubr.f32.gmra.mrb[0].mxu0 %v3643
      %v3711 = vpop.f32.mrb[0].mxu0
      %v3712 = vadd.f32 0.0, %v3711
      %v3713 = vpop.f32.mrb[0].mxu0
      %3714 = vdwg.mxu0
      %v3715 = vadd.f32 %v3638, %v3712
      %s3716 = scalar_lea.vmem %s5, 64
      %v3717 = vld [vmem:[%s3716] sm:$0xff]
      %v3718 = vld [vmem:[%s3716 + $0x8] sm:$0xff]
      %v3720 = vsel %vm3417, %v3401, 0
      %3722 = vmatprep.subr.mxu0 0.0
      %3723 = vmatpush1.msra.mxu0 %v3717
      %3724 = vmatprep.subr.mxu0 0.0
      %3725 = vmatpush1.msra.mxu0 %v3718
      %3726 = vmatprep.subr.mxu0 0.0
      %3727 = vmatpush1.msra.mxu0 0.0
      %3728 = vmatprep.subr.mxu0 0.0
      %3729 = vmatpush1.msra.mxu0 0.0
      %3730 = vmatprep.subr.mxu0 0.0
      %3731 = vmatpush1.msra.mxu0 0.0
      %3732 = vmatprep.subr.mxu0 0.0
      %3733 = vmatpush1.msra.mxu0 0.0
      %3734 = vmatprep.subr.mxu0 0.0
      %3735 = vmatpush1.msra.mxu0 0.0
      %3736 = vmatprep.subr.mxu0 0.0
      %3737 = vmatpush1.msra.mxu0 0.0
      %3738 = vmatprep.subr.mxu0 0.0
      %3739 = vmatpush1.msra.mxu0 0.0
      %3740 = vmatprep.subr.mxu0 0.0
      %3741 = vmatpush1.msra.mxu0 0.0
      %3742 = vmatprep.subr.mxu0 0.0
      %3743 = vmatpush1.msra.mxu0 0.0
      %3744 = vmatprep.subr.mxu0 0.0
      %3745 = vmatpush1.msra.mxu0 0.0
      %3746 = vmatprep.subr.mxu0 0.0
      %3747 = vmatpush1.msra.mxu0 0.0
      %3748 = vmatprep.subr.mxu0 0.0
      %3749 = vmatpush1.msra.mxu0 0.0
      %3750 = vmatprep.subr.mxu0 0.0
      %3751 = vmatpush1.msra.mxu0 0.0
      %3752 = vmatprep.subr.mxu0 0.0
      %3753 = vmatpush1.msra.mxu0 0.0
      %3754 = vmatprep.subr.mxu0 0.0
      %3755 = vmatpush1.msra.mxu0 0.0
      %3756 = vmatprep.subr.mxu0 0.0
      %3757 = vmatpush1.msra.mxu0 0.0
      %3758 = vmatprep.subr.mxu0 0.0
      %3759 = vmatpush1.msra.mxu0 0.0
      %3760 = vmatprep.subr.mxu0 0.0
      %3761 = vmatpush1.msra.mxu0 0.0
      %3762 = vmatprep.subr.mxu0 0.0
      %3763 = vmatpush1.msra.mxu0 0.0
      %3764 = vmatprep.subr.mxu0 0.0
      %3765 = vmatpush1.msra.mxu0 0.0
      %3766 = vmatprep.subr.mxu0 0.0
      %3767 = vmatpush1.msra.mxu0 0.0
      %3768 = vmatprep.subr.mxu0 0.0
      %3769 = vmatpush1.msra.mxu0 0.0
      %3770 = vmatprep.subr.mxu0 0.0
      %3771 = vmatpush1.msra.mxu0 0.0
      %3772 = vmatprep.subr.mxu0 0.0
      %3773 = vmatpush1.msra.mxu0 0.0
      %3774 = vmatprep.subr.mxu0 0.0
      %3775 = vmatpush1.msra.mxu0 0.0
      %3776 = vmatprep.subr.mxu0 0.0
      %3777 = vmatpush1.msra.mxu0 0.0
      %3778 = vmatprep.subr.mxu0 0.0
      %3779 = vmatpush1.msra.mxu0 0.0
      %3780 = vmatprep.subr.mxu0 0.0
      %3781 = vmatpush1.msra.mxu0 0.0
      %3782 = vmatprep.subr.mxu0 0.0
      %3783 = vmatpush1.msra.mxu0 0.0
      %3784 = vmatprep.subr.mxu0 0.0
      %3785 = vmatpush1.msra.mxu0 0.0
      %3786 = vmatprep.mubr.f32.mxu0 0.0
      %3787 = vmatmul.mubr.f32.gmra.mrb[0].mxu0 %v3720
      %v3788 = vpop.f32.mrb[0].mxu0
      %v3789 = vadd.f32 0.0, %v3788
      %v3790 = vpop.f32.mrb[0].mxu0
      %3791 = vdwg.mxu0
      %v3792 = vadd.f32 %v3715, %v3789
      %s3793 = scalar_lea.vmem %s5, 80
      %v3794 = vld [vmem:[%s3793] sm:$0xff]
      %v3795 = vld [vmem:[%s3793 + $0x8] sm:$0xff]
      %v3797 = vsel %vm3417, %v3402, 0
      %3799 = vmatprep.subr.mxu0 0.0
      %3800 = vmatpush1.msra.mxu0 %v3794
      %3801 = vmatprep.subr.mxu0 0.0
      %3802 = vmatpush1.msra.mxu0 %v3795
      %3803 = vmatprep.subr.mxu0 0.0
      %3804 = vmatpush1.msra.mxu0 0.0
      %3805 = vmatprep.subr.mxu0 0.0
      %3806 = vmatpush1.msra.mxu0 0.0
      %3807 = vmatprep.subr.mxu0 0.0
      %3808 = vmatpush1.msra.mxu0 0.0
      %3809 = vmatprep.subr.mxu0 0.0
      %3810 = vmatpush1.msra.mxu0 0.0
      %3811 = vmatprep.subr.mxu0 0.0
      %3812 = vmatpush1.msra.mxu0 0.0
      %3813 = vmatprep.subr.mxu0 0.0
      %3814 = vmatpush1.msra.mxu0 0.0
      %3815 = vmatprep.subr.mxu0 0.0
      %3816 = vmatpush1.msra.mxu0 0.0
      %3817 = vmatprep.subr.mxu0 0.0
      %3818 = vmatpush1.msra.mxu0 0.0
      %3819 = vmatprep.subr.mxu0 0.0
      %3820 = vmatpush1.msra.mxu0 0.0
      %3821 = vmatprep.subr.mxu0 0.0
      %3822 = vmatpush1.msra.mxu0 0.0
      %3823 = vmatprep.subr.mxu0 0.0
      %3824 = vmatpush1.msra.mxu0 0.0
      %3825 = vmatprep.subr.mxu0 0.0
      %3826 = vmatpush1.msra.mxu0 0.0
      %3827 = vmatprep.subr.mxu0 0.0
      %3828 = vmatpush1.msra.mxu0 0.0
      %3829 = vmatprep.subr.mxu0 0.0
      %3830 = vmatpush1.msra.mxu0 0.0
      %3831 = vmatprep.subr.mxu0 0.0
      %3832 = vmatpush1.msra.mxu0 0.0
      %3833 = vmatprep.subr.mxu0 0.0
      %3834 = vmatpush1.msra.mxu0 0.0
      %3835 = vmatprep.subr.mxu0 0.0
      %3836 = vmatpush1.msra.mxu0 0.0
      %3837 = vmatprep.subr.mxu0 0.0
      %3838 = vmatpush1.msra.mxu0 0.0
      %3839 = vmatprep.subr.mxu0 0.0
      %3840 = vmatpush1.msra.mxu0 0.0
      %3841 = vmatprep.subr.mxu0 0.0
      %3842 = vmatpush1.msra.mxu0 0.0
      %3843 = vmatprep.subr.mxu0 0.0
      %3844 = vmatpush1.msra.mxu0 0.0
      %3845 = vmatprep.subr.mxu0 0.0
      %3846 = vmatpush1.msra.mxu0 0.0
      %3847 = vmatprep.subr.mxu0 0.0
      %3848 = vmatpush1.msra.mxu0 0.0
      %3849 = vmatprep.subr.mxu0 0.0
      %3850 = vmatpush1.msra.mxu0 0.0
      %3851 = vmatprep.subr.mxu0 0.0
      %3852 = vmatpush1.msra.mxu0 0.0
      %3853 = vmatprep.subr.mxu0 0.0
      %3854 = vmatpush1.msra.mxu0 0.0
      %3855 = vmatprep.subr.mxu0 0.0
      %3856 = vmatpush1.msra.mxu0 0.0
      %3857 = vmatprep.subr.mxu0 0.0
      %3858 = vmatpush1.msra.mxu0 0.0
      %3859 = vmatprep.subr.mxu0 0.0
      %3860 = vmatpush1.msra.mxu0 0.0
      %3861 = vmatprep.subr.mxu0 0.0
      %3862 = vmatpush1.msra.mxu0 0.0
      %3863 = vmatprep.mubr.f32.mxu0 0.0
      %3864 = vmatmul.mubr.f32.gmra.mrb[0].mxu0 %v3797
      %v3865 = vpop.f32.mrb[0].mxu0
      %v3866 = vadd.f32 0.0, %v3865
      %v3867 = vpop.f32.mrb[0].mxu0
      %3868 = vdwg.mxu0
      %v3869 = vadd.f32 %v3792, %v3866
      %s3870 = scalar_lea.vmem %s5, 96
      %v3871 = vld [vmem:[%s3870] sm:$0xff]
      %v3872 = vld [vmem:[%s3870 + $0x8] sm:$0xff]
      %v3873 = vrot.slane %v3402, 2
      %v3874 = vsel %vm3417, %v3873, 0
      %3876 = vmatprep.subr.mxu0 0.0
      %3877 = vmatpush1.msra.mxu0 %v3871
      %3878 = vmatprep.subr.mxu0 0.0
      %3879 = vmatpush1.msra.mxu0 %v3872
      %3880 = vmatprep.subr.mxu0 0.0
      %3881 = vmatpush1.msra.mxu0 0.0
      %3882 = vmatprep.subr.mxu0 0.0
      %3883 = vmatpush1.msra.mxu0 0.0
      %3884 = vmatprep.subr.mxu0 0.0
      %3885 = vmatpush1.msra.mxu0 0.0
      %3886 = vmatprep.subr.mxu0 0.0
      %3887 = vmatpush1.msra.mxu0 0.0
      %3888 = vmatprep.subr.mxu0 0.0
      %3889 = vmatpush1.msra.mxu0 0.0
      %3890 = vmatprep.subr.mxu0 0.0
      %3891 = vmatpush1.msra.mxu0 0.0
      %3892 = vmatprep.subr.mxu0 0.0
      %3893 = vmatpush1.msra.mxu0 0.0
      %3894 = vmatprep.subr.mxu0 0.0
      %3895 = vmatpush1.msra.mxu0 0.0
      %3896 = vmatprep.subr.mxu0 0.0
      %3897 = vmatpush1.msra.mxu0 0.0
      %3898 = vmatprep.subr.mxu0 0.0
      %3899 = vmatpush1.msra.mxu0 0.0
      %3900 = vmatprep.subr.mxu0 0.0
      %3901 = vmatpush1.msra.mxu0 0.0
      %3902 = vmatprep.subr.mxu0 0.0
      %3903 = vmatpush1.msra.mxu0 0.0
      %3904 = vmatprep.subr.mxu0 0.0
      %3905 = vmatpush1.msra.mxu0 0.0
      %3906 = vmatprep.subr.mxu0 0.0
      %3907 = vmatpush1.msra.mxu0 0.0
      %3908 = vmatprep.subr.mxu0 0.0
      %3909 = vmatpush1.msra.mxu0 0.0
      %3910 = vmatprep.subr.mxu0 0.0
      %3911 = vmatpush1.msra.mxu0 0.0
      %3912 = vmatprep.subr.mxu0 0.0
      %3913 = vmatpush1.msra.mxu0 0.0
      %3914 = vmatprep.subr.mxu0 0.0
      %3915 = vmatpush1.msra.mxu0 0.0
      %3916 = vmatprep.subr.mxu0 0.0
      %3917 = vmatpush1.msra.mxu0 0.0
      %3918 = vmatprep.subr.mxu0 0.0
      %3919 = vmatpush1.msra.mxu0 0.0
      %3920 = vmatprep.subr.mxu0 0.0
      %3921 = vmatpush1.msra.mxu0 0.0
      %3922 = vmatprep.subr.mxu0 0.0
      %3923 = vmatpush1.msra.mxu0 0.0
      %3924 = vmatprep.subr.mxu0 0.0
      %3925 = vmatpush1.msra.mxu0 0.0
      %3926 = vmatprep.subr.mxu0 0.0
      %3927 = vmatpush1.msra.mxu0 0.0
      %3928 = vmatprep.subr.mxu0 0.0
      %3929 = vmatpush1.msra.mxu0 0.0
      %3930 = vmatprep.subr.mxu0 0.0
      %3931 = vmatpush1.msra.mxu0 0.0
      %3932 = vmatprep.subr.mxu0 0.0
      %3933 = vmatpush1.msra.mxu0 0.0
      %3934 = vmatprep.subr.mxu0 0.0
      %3935 = vmatpush1.msra.mxu0 0.0
      %3936 = vmatprep.subr.mxu0 0.0
      %3937 = vmatpush1.msra.mxu0 0.0
      %3938 = vmatprep.subr.mxu0 0.0
      %3939 = vmatpush1.msra.mxu0 0.0
      %3940 = vmatprep.mubr.f32.mxu0 0.0
      %3941 = vmatmul.mubr.f32.gmra.mrb[0].mxu0 %v3874
      %v3942 = vpop.f32.mrb[0].mxu0
      %v3943 = vadd.f32 0.0, %v3942
      %v3944 = vpop.f32.mrb[0].mxu0
      %3945 = vdwg.mxu0
      %v3946 = vadd.f32 %v3869, %v3943
      %s3947 = scalar_lea.vmem %s5, 112
      %v3948 = vld [vmem:[%s3947] sm:$0xff]
      %v3949 = vld [vmem:[%s3947 + $0x8] sm:$0xff]
      %v3950 = vrot.slane %v3402, 4
      %v3951 = vsel %vm3417, %v3950, 0
      %3953 = vmatprep.subr.mxu0 0.0
      %3954 = vmatpush1.msra.mxu0 %v3948
      %3955 = vmatprep.subr.mxu0 0.0
      %3956 = vmatpush1.msra.mxu0 %v3949
      %3957 = vmatprep.subr.mxu0 0.0
      %3958 = vmatpush1.msra.mxu0 0.0
      %3959 = vmatprep.subr.mxu0 0.0
      %3960 = vmatpush1.msra.mxu0 0.0
      %3961 = vmatprep.subr.mxu0 0.0
      %3962 = vmatpush1.msra.mxu0 0.0
      %3963 = vmatprep.subr.mxu0 0.0
      %3964 = vmatpush1.msra.mxu0 0.0
      %3965 = vmatprep.subr.mxu0 0.0
      %3966 = vmatpush1.msra.mxu0 0.0
      %3967 = vmatprep.subr.mxu0 0.0
      %3968 = vmatpush1.msra.mxu0 0.0
      %3969 = vmatprep.subr.mxu0 0.0
      %3970 = vmatpush1.msra.mxu0 0.0
      %3971 = vmatprep.subr.mxu0 0.0
      %3972 = vmatpush1.msra.mxu0 0.0
      %3973 = vmatprep.subr.mxu0 0.0
      %3974 = vmatpush1.msra.mxu0 0.0
      %3975 = vmatprep.subr.mxu0 0.0
      %3976 = vmatpush1.msra.mxu0 0.0
      %3977 = vmatprep.subr.mxu0 0.0
      %3978 = vmatpush1.msra.mxu0 0.0
      %3979 = vmatprep.subr.mxu0 0.0
      %3980 = vmatpush1.msra.mxu0 0.0
      %3981 = vmatprep.subr.mxu0 0.0
      %3982 = vmatpush1.msra.mxu0 0.0
      %3983 = vmatprep.subr.mxu0 0.0
      %3984 = vmatpush1.msra.mxu0 0.0
      %3985 = vmatprep.subr.mxu0 0.0
      %3986 = vmatpush1.msra.mxu0 0.0
      %3987 = vmatprep.subr.mxu0 0.0
      %3988 = vmatpush1.msra.mxu0 0.0
      %3989 = vmatprep.subr.mxu0 0.0
      %3990 = vmatpush1.msra.mxu0 0.0
      %3991 = vmatprep.subr.mxu0 0.0
      %3992 = vmatpush1.msra.mxu0 0.0
      %3993 = vmatprep.subr.mxu0 0.0
      %3994 = vmatpush1.msra.mxu0 0.0
      %3995 = vmatprep.subr.mxu0 0.0
      %3996 = vmatpush1.msra.mxu0 0.0
      %3997 = vmatprep.subr.mxu0 0.0
      %3998 = vmatpush1.msra.mxu0 0.0
      %3999 = vmatprep.subr.mxu0 0.0
      %4000 = vmatpush1.msra.mxu0 0.0
      %4001 = vmatprep.subr.mxu0 0.0
      %4002 = vmatpush1.msra.mxu0 0.0
      %4003 = vmatprep.subr.mxu0 0.0
      %4004 = vmatpush1.msra.mxu0 0.0
      %4005 = vmatprep.subr.mxu0 0.0
      %4006 = vmatpush1.msra.mxu0 0.0
      %4007 = vmatprep.subr.mxu0 0.0
      %4008 = vmatpush1.msra.mxu0 0.0
      %4009 = vmatprep.subr.mxu0 0.0
      %4010 = vmatpush1.msra.mxu0 0.0
      %4011 = vmatprep.subr.mxu0 0.0
      %4012 = vmatpush1.msra.mxu0 0.0
      %4013 = vmatprep.subr.mxu0 0.0
      %4014 = vmatpush1.msra.mxu0 0.0
      %4015 = vmatprep.subr.mxu0 0.0
      %4016 = vmatpush1.msra.mxu0 0.0
      %4017 = vmatprep.mubr.f32.mxu0 0.0
      %4018 = vmatmul.mubr.f32.gmra.mrb[0].mxu0 %v3951
      %v4019 = vpop.f32.mrb[0].mxu0
      %v4020 = vadd.f32 0.0, %v4019
      %v4021 = vpop.f32.mrb[0].mxu0
      %4022 = vdwg.mxu0
      %v4023 = vadd.f32 %v3946, %v4020
      %s4024 = scalar_lea.vmem %s5, 128
      %v4025 = vld [vmem:[%s4024] sm:$0xff]
      %v4026 = vld [vmem:[%s4024 + $0x8] sm:$0xff]
      %v4027 = vrot.slane %v3402, 6
      %v4028 = vsel %vm3417, %v4027, 0
      %4030 = vmatprep.subr.mxu0 0.0
      %4031 = vmatpush1.msra.mxu0 %v4025
      %4032 = vmatprep.subr.mxu0 0.0
      %4033 = vmatpush1.msra.mxu0 %v4026
      %4034 = vmatprep.subr.mxu0 0.0
      %4035 = vmatpush1.msra.mxu0 0.0
      %4036 = vmatprep.subr.mxu0 0.0
      %4037 = vmatpush1.msra.mxu0 0.0
      %4038 = vmatprep.subr.mxu0 0.0
      %4039 = vmatpush1.msra.mxu0 0.0
      %4040 = vmatprep.subr.mxu0 0.0
      %4041 = vmatpush1.msra.mxu0 0.0
      %4042 = vmatprep.subr.mxu0 0.0
      %4043 = vmatpush1.msra.mxu0 0.0
      %4044 = vmatprep.subr.mxu0 0.0
      %4045 = vmatpush1.msra.mxu0 0.0
      %4046 = vmatprep.subr.mxu0 0.0
      %4047 = vmatpush1.msra.mxu0 0.0
      %4048 = vmatprep.subr.mxu0 0.0
      %4049 = vmatpush1.msra.mxu0 0.0
      %4050 = vmatprep.subr.mxu0 0.0
      %4051 = vmatpush1.msra.mxu0 0.0
      %4052 = vmatprep.subr.mxu0 0.0
      %4053 = vmatpush1.msra.mxu0 0.0
      %4054 = vmatprep.subr.mxu0 0.0
      %4055 = vmatpush1.msra.mxu0 0.0
      %4056 = vmatprep.subr.mxu0 0.0
      %4057 = vmatpush1.msra.mxu0 0.0
      %4058 = vmatprep.subr.mxu0 0.0
      %4059 = vmatpush1.msra.mxu0 0.0
      %4060 = vmatprep.subr.mxu0 0.0
      %4061 = vmatpush1.msra.mxu0 0.0
      %4062 = vmatprep.subr.mxu0 0.0
      %4063 = vmatpush1.msra.mxu0 0.0
      %4064 = vmatprep.subr.mxu0 0.0
      %4065 = vmatpush1.msra.mxu0 0.0
      %4066 = vmatprep.subr.mxu0 0.0
      %4067 = vmatpush1.msra.mxu0 0.0
      %4068 = vmatprep.subr.mxu0 0.0
      %4069 = vmatpush1.msra.mxu0 0.0
      %4070 = vmatprep.subr.mxu0 0.0
      %4071 = vmatpush1.msra.mxu0 0.0
      %4072 = vmatprep.subr.mxu0 0.0
      %4073 = vmatpush1.msra.mxu0 0.0
      %4074 = vmatprep.subr.mxu0 0.0
      %4075 = vmatpush1.msra.mxu0 0.0
      %4076 = vmatprep.subr.mxu0 0.0
      %4077 = vmatpush1.msra.mxu0 0.0
      %4078 = vmatprep.subr.mxu0 0.0
      %4079 = vmatpush1.msra.mxu0 0.0
      %4080 = vmatprep.subr.mxu0 0.0
      %4081 = vmatpush1.msra.mxu0 0.0
      %4082 = vmatprep.subr.mxu0 0.0
      %4083 = vmatpush1.msra.mxu0 0.0
      %4084 = vmatprep.subr.mxu0 0.0
      %4085 = vmatpush1.msra.mxu0 0.0
      %4086 = vmatprep.subr.mxu0 0.0
      %4087 = vmatpush1.msra.mxu0 0.0
      %4088 = vmatprep.subr.mxu0 0.0
      %4089 = vmatpush1.msra.mxu0 0.0
      %4090 = vmatprep.subr.mxu0 0.0
      %4091 = vmatpush1.msra.mxu0 0.0
      %4092 = vmatprep.subr.mxu0 0.0
      %4093 = vmatpush1.msra.mxu0 0.0
      %4094 = vmatprep.mubr.f32.mxu0 0.0
      %4095 = vmatmul.mubr.f32.gmra.mrb[0].mxu0 %v4028
      %v4096 = vpop.f32.mrb[0].mxu0
      %v4097 = vadd.f32 0.0, %v4096
      %v4098 = vpop.f32.mrb[0].mxu0
      %4099 = vdwg.mxu0
      %v4100 = vadd.f32 %v4023, %v4097
      %s4101 = scalar_lea.vmem %s5, 144
      %v4102 = vld [vmem:[%s4101] sm:$0xff]
      %v4103 = vld [vmem:[%s4101 + $0x8] sm:$0xff]
      %v4105 = vsel %vm3417, %v3403, 0
      %4107 = vmatprep.subr.mxu0 0.0
      %4108 = vmatpush1.msra.mxu0 %v4102
      %4109 = vmatprep.subr.mxu0 0.0
      %4110 = vmatpush1.msra.mxu0 %v4103
      %4111 = vmatprep.subr.mxu0 0.0
      %4112 = vmatpush1.msra.mxu0 0.0
      %4113 = vmatprep.subr.mxu0 0.0
      %4114 = vmatpush1.msra.mxu0 0.0
      %4115 = vmatprep.subr.mxu0 0.0
      %4116 = vmatpush1.msra.mxu0 0.0
      %4117 = vmatprep.subr.mxu0 0.0
      %4118 = vmatpush1.msra.mxu0 0.0
      %4119 = vmatprep.subr.mxu0 0.0
      %4120 = vmatpush1.msra.mxu0 0.0
      %4121 = vmatprep.subr.mxu0 0.0
      %4122 = vmatpush1.msra.mxu0 0.0
      %4123 = vmatprep.subr.mxu0 0.0
      %4124 = vmatpush1.msra.mxu0 0.0
      %4125 = vmatprep.subr.mxu0 0.0
      %4126 = vmatpush1.msra.mxu0 0.0
      %4127 = vmatprep.subr.mxu0 0.0
      %4128 = vmatpush1.msra.mxu0 0.0
      %4129 = vmatprep.subr.mxu0 0.0
      %4130 = vmatpush1.msra.mxu0 0.0
      %4131 = vmatprep.subr.mxu0 0.0
      %4132 = vmatpush1.msra.mxu0 0.0
      %4133 = vmatprep.subr.mxu0 0.0
      %4134 = vmatpush1.msra.mxu0 0.0
      %4135 = vmatprep.subr.mxu0 0.0
      %4136 = vmatpush1.msra.mxu0 0.0
      %4137 = vmatprep.subr.mxu0 0.0
      %4138 = vmatpush1.msra.mxu0 0.0
      %4139 = vmatprep.subr.mxu0 0.0
      %4140 = vmatpush1.msra.mxu0 0.0
      %4141 = vmatprep.subr.mxu0 0.0
      %4142 = vmatpush1.msra.mxu0 0.0
      %4143 = vmatprep.subr.mxu0 0.0
      %4144 = vmatpush1.msra.mxu0 0.0
      %4145 = vmatprep.subr.mxu0 0.0
      %4146 = vmatpush1.msra.mxu0 0.0
      %4147 = vmatprep.subr.mxu0 0.0
      %4148 = vmatpush1.msra.mxu0 0.0
      %4149 = vmatprep.subr.mxu0 0.0
      %4150 = vmatpush1.msra.mxu0 0.0
      %4151 = vmatprep.subr.mxu0 0.0
      %4152 = vmatpush1.msra.mxu0 0.0
      %4153 = vmatprep.subr.mxu0 0.0
      %4154 = vmatpush1.msra.mxu0 0.0
      %4155 = vmatprep.subr.mxu0 0.0
      %4156 = vmatpush1.msra.mxu0 0.0
      %4157 = vmatprep.subr.mxu0 0.0
      %4158 = vmatpush1.msra.mxu0 0.0
      %4159 = vmatprep.subr.mxu0 0.0
      %4160 = vmatpush1.msra.mxu0 0.0
      %4161 = vmatprep.subr.mxu0 0.0
      %4162 = vmatpush1.msra.mxu0 0.0
      %4163 = vmatprep.subr.mxu0 0.0
      %4164 = vmatpush1.msra.mxu0 0.0
      %4165 = vmatprep.subr.mxu0 0.0
      %4166 = vmatpush1.msra.mxu0 0.0
      %4167 = vmatprep.subr.mxu0 0.0
      %4168 = vmatpush1.msra.mxu0 0.0
      %4169 = vmatprep.subr.mxu0 0.0
      %4170 = vmatpush1.msra.mxu0 0.0
      %4171 = vmatprep.mubr.f32.mxu0 0.0
      %4172 = vmatmul.mubr.f32.gmra.mrb[0].mxu0 %v4105
      %v4173 = vpop.f32.mrb[0].mxu0
      %v4174 = vadd.f32 0.0, %v4173
      %v4175 = vpop.f32.mrb[0].mxu0
      %4176 = vdwg.mxu0
      %v4177 = vadd.f32 %v4100, %v4174
      %s4178 = scalar_lea.vmem %s5, 160
      %v4179 = vld [vmem:[%s4178] sm:$0xff]
      %v4180 = vld [vmem:[%s4178 + $0x8] sm:$0xff]
      %v4182 = vsel %vm3417, %v3404, 0
      %4184 = vmatprep.subr.mxu0 0.0
      %4185 = vmatpush1.msra.mxu0 %v4179
      %4186 = vmatprep.subr.mxu0 0.0
      %4187 = vmatpush1.msra.mxu0 %v4180
      %4188 = vmatprep.subr.mxu0 0.0
      %4189 = vmatpush1.msra.mxu0 0.0
      %4190 = vmatprep.subr.mxu0 0.0
      %4191 = vmatpush1.msra.mxu0 0.0
      %4192 = vmatprep.subr.mxu0 0.0
      %4193 = vmatpush1.msra.mxu0 0.0
      %4194 = vmatprep.subr.mxu0 0.0
      %4195 = vmatpush1.msra.mxu0 0.0
      %4196 = vmatprep.subr.mxu0 0.0
      %4197 = vmatpush1.msra.mxu0 0.0
      %4198 = vmatprep.subr.mxu0 0.0
      %4199 = vmatpush1.msra.mxu0 0.0
      %4200 = vmatprep.subr.mxu0 0.0
      %4201 = vmatpush1.msra.mxu0 0.0
      %4202 = vmatprep.subr.mxu0 0.0
      %4203 = vmatpush1.msra.mxu0 0.0
      %4204 = vmatprep.subr.mxu0 0.0
      %4205 = vmatpush1.msra.mxu0 0.0
      %4206 = vmatprep.subr.mxu0 0.0
      %4207 = vmatpush1.msra.mxu0 0.0
      %4208 = vmatprep.subr.mxu0 0.0
      %4209 = vmatpush1.msra.mxu0 0.0
      %4210 = vmatprep.subr.mxu0 0.0
      %4211 = vmatpush1.msra.mxu0 0.0
      %4212 = vmatprep.subr.mxu0 0.0
      %4213 = vmatpush1.msra.mxu0 0.0
      %4214 = vmatprep.subr.mxu0 0.0
      %4215 = vmatpush1.msra.mxu0 0.0
      %4216 = vmatprep.subr.mxu0 0.0
      %4217 = vmatpush1.msra.mxu0 0.0
      %4218 = vmatprep.subr.mxu0 0.0
      %4219 = vmatpush1.msra.mxu0 0.0
      %4220 = vmatprep.subr.mxu0 0.0
      %4221 = vmatpush1.msra.mxu0 0.0
      %4222 = vmatprep.subr.mxu0 0.0
      %4223 = vmatpush1.msra.mxu0 0.0
      %4224 = vmatprep.subr.mxu0 0.0
      %4225 = vmatpush1.msra.mxu0 0.0
      %4226 = vmatprep.subr.mxu0 0.0
      %4227 = vmatpush1.msra.mxu0 0.0
      %4228 = vmatprep.subr.mxu0 0.0
      %4229 = vmatpush1.msra.mxu0 0.0
      %4230 = vmatprep.subr.mxu0 0.0
      %4231 = vmatpush1.msra.mxu0 0.0
      %4232 = vmatprep.subr.mxu0 0.0
      %4233 = vmatpush1.msra.mxu0 0.0
      %4234 = vmatprep.subr.mxu0 0.0
      %4235 = vmatpush1.msra.mxu0 0.0
      %4236 = vmatprep.subr.mxu0 0.0
      %4237 = vmatpush1.msra.mxu0 0.0
      %4238 = vmatprep.subr.mxu0 0.0
      %4239 = vmatpush1.msra.mxu0 0.0
      %4240 = vmatprep.subr.mxu0 0.0
      %4241 = vmatpush1.msra.mxu0 0.0
      %4242 = vmatprep.subr.mxu0 0.0
      %4243 = vmatpush1.msra.mxu0 0.0
      %4244 = vmatprep.subr.mxu0 0.0
      %4245 = vmatpush1.msra.mxu0 0.0
      %4246 = vmatprep.subr.mxu0 0.0
      %4247 = vmatpush1.msra.mxu0 0.0
      %4248 = vmatprep.mubr.f32.mxu0 0.0
      %4249 = vmatmul.mubr.f32.gmra.mrb[0].mxu0 %v4182
      %v4250 = vpop.f32.mrb[0].mxu0
      %v4251 = vadd.f32 0.0, %v4250
      %v4252 = vpop.f32.mrb[0].mxu0
      %4253 = vdwg.mxu0
      %v4254 = vadd.f32 %v4177, %v4251
      %s4255 = scalar_lea.vmem %s5, 176
      %v4256 = vld [vmem:[%s4255] sm:$0xff]
      %v4257 = vld [vmem:[%s4255 + $0x8] sm:$0xff]
      %v4258 = vrot.slane %v3404, 2
      %v4259 = vsel %vm3417, %v4258, 0
      %4261 = vmatprep.subr.mxu0 0.0
      %4262 = vmatpush1.msra.mxu0 %v4256
      %4263 = vmatprep.subr.mxu0 0.0
      %4264 = vmatpush1.msra.mxu0 %v4257
      %4265 = vmatprep.subr.mxu0 0.0
      %4266 = vmatpush1.msra.mxu0 0.0
      %4267 = vmatprep.subr.mxu0 0.0
      %4268 = vmatpush1.msra.mxu0 0.0
      %4269 = vmatprep.subr.mxu0 0.0
      %4270 = vmatpush1.msra.mxu0 0.0
      %4271 = vmatprep.subr.mxu0 0.0
      %4272 = vmatpush1.msra.mxu0 0.0
      %4273 = vmatprep.subr.mxu0 0.0
      %4274 = vmatpush1.msra.mxu0 0.0
      %4275 = vmatprep.subr.mxu0 0.0
      %4276 = vmatpush1.msra.mxu0 0.0
      %4277 = vmatprep.subr.mxu0 0.0
      %4278 = vmatpush1.msra.mxu0 0.0
      %4279 = vmatprep.subr.mxu0 0.0
      %4280 = vmatpush1.msra.mxu0 0.0
      %4281 = vmatprep.subr.mxu0 0.0
      %4282 = vmatpush1.msra.mxu0 0.0
      %4283 = vmatprep.subr.mxu0 0.0
      %4284 = vmatpush1.msra.mxu0 0.0
      %4285 = vmatprep.subr.mxu0 0.0
      %4286 = vmatpush1.msra.mxu0 0.0
      %4287 = vmatprep.subr.mxu0 0.0
      %4288 = vmatpush1.msra.mxu0 0.0
      %4289 = vmatprep.subr.mxu0 0.0
      %4290 = vmatpush1.msra.mxu0 0.0
      %4291 = vmatprep.subr.mxu0 0.0
      %4292 = vmatpush1.msra.mxu0 0.0
      %4293 = vmatprep.subr.mxu0 0.0
      %4294 = vmatpush1.msra.mxu0 0.0
      %4295 = vmatprep.subr.mxu0 0.0
      %4296 = vmatpush1.msra.mxu0 0.0
      %4297 = vmatprep.subr.mxu0 0.0
      %4298 = vmatpush1.msra.mxu0 0.0
      %4299 = vmatprep.subr.mxu0 0.0
      %4300 = vmatpush1.msra.mxu0 0.0
      %4301 = vmatprep.subr.mxu0 0.0
      %4302 = vmatpush1.msra.mxu0 0.0
      %4303 = vmatprep.subr.mxu0 0.0
      %4304 = vmatpush1.msra.mxu0 0.0
      %4305 = vmatprep.subr.mxu0 0.0
      %4306 = vmatpush1.msra.mxu0 0.0
      %4307 = vmatprep.subr.mxu0 0.0
      %4308 = vmatpush1.msra.mxu0 0.0
      %4309 = vmatprep.subr.mxu0 0.0
      %4310 = vmatpush1.msra.mxu0 0.0
      %4311 = vmatprep.subr.mxu0 0.0
      %4312 = vmatpush1.msra.mxu0 0.0
      %4313 = vmatprep.subr.mxu0 0.0
      %4314 = vmatpush1.msra.mxu0 0.0
      %4315 = vmatprep.subr.mxu0 0.0
      %4316 = vmatpush1.msra.mxu0 0.0
      %4317 = vmatprep.subr.mxu0 0.0
      %4318 = vmatpush1.msra.mxu0 0.0
      %4319 = vmatprep.subr.mxu0 0.0
      %4320 = vmatpush1.msra.mxu0 0.0
      %4321 = vmatprep.subr.mxu0 0.0
      %4322 = vmatpush1.msra.mxu0 0.0
      %4323 = vmatprep.subr.mxu0 0.0
      %4324 = vmatpush1.msra.mxu0 0.0
      %4325 = vmatprep.mubr.f32.mxu0 0.0
      %4326 = vmatmul.mubr.f32.gmra.mrb[0].mxu0 %v4259
      %v4327 = vpop.f32.mrb[0].mxu0
      %v4328 = vadd.f32 0.0, %v4327
      %v4329 = vpop.f32.mrb[0].mxu0
      %4330 = vdwg.mxu0
      %v4331 = vadd.f32 %v4254, %v4328
      %s4332 = scalar_lea.vmem %s5, 192
      %v4333 = vld [vmem:[%s4332] sm:$0xff]
      %v4334 = vld [vmem:[%s4332 + $0x8] sm:$0xff]
      %v4335 = vrot.slane %v3404, 4
      %v4336 = vsel %vm3417, %v4335, 0
      %4338 = vmatprep.subr.mxu0 0.0
      %4339 = vmatpush1.msra.mxu0 %v4333
      %4340 = vmatprep.subr.mxu0 0.0
      %4341 = vmatpush1.msra.mxu0 %v4334
      %4342 = vmatprep.subr.mxu0 0.0
      %4343 = vmatpush1.msra.mxu0 0.0
      %4344 = vmatprep.subr.mxu0 0.0
      %4345 = vmatpush1.msra.mxu0 0.0
      %4346 = vmatprep.subr.mxu0 0.0
      %4347 = vmatpush1.msra.mxu0 0.0
      %4348 = vmatprep.subr.mxu0 0.0
      %4349 = vmatpush1.msra.mxu0 0.0
      %4350 = vmatprep.subr.mxu0 0.0
      %4351 = vmatpush1.msra.mxu0 0.0
      %4352 = vmatprep.subr.mxu0 0.0
      %4353 = vmatpush1.msra.mxu0 0.0
      %4354 = vmatprep.subr.mxu0 0.0
      %4355 = vmatpush1.msra.mxu0 0.0
      %4356 = vmatprep.subr.mxu0 0.0
      %4357 = vmatpush1.msra.mxu0 0.0
      %4358 = vmatprep.subr.mxu0 0.0
      %4359 = vmatpush1.msra.mxu0 0.0
      %4360 = vmatprep.subr.mxu0 0.0
      %4361 = vmatpush1.msra.mxu0 0.0
      %4362 = vmatprep.subr.mxu0 0.0
      %4363 = vmatpush1.msra.mxu0 0.0
      %4364 = vmatprep.subr.mxu0 0.0
      %4365 = vmatpush1.msra.mxu0 0.0
      %4366 = vmatprep.subr.mxu0 0.0
      %4367 = vmatpush1.msra.mxu0 0.0
      %4368 = vmatprep.subr.mxu0 0.0
      %4369 = vmatpush1.msra.mxu0 0.0
      %4370 = vmatprep.subr.mxu0 0.0
      %4371 = vmatpush1.msra.mxu0 0.0
      %4372 = vmatprep.subr.mxu0 0.0
      %4373 = vmatpush1.msra.mxu0 0.0
      %4374 = vmatprep.subr.mxu0 0.0
      %4375 = vmatpush1.msra.mxu0 0.0
      %4376 = vmatprep.subr.mxu0 0.0
      %4377 = vmatpush1.msra.mxu0 0.0
      %4378 = vmatprep.subr.mxu0 0.0
      %4379 = vmatpush1.msra.mxu0 0.0
      %4380 = vmatprep.subr.mxu0 0.0
      %4381 = vmatpush1.msra.mxu0 0.0
      %4382 = vmatprep.subr.mxu0 0.0
      %4383 = vmatpush1.msra.mxu0 0.0
      %4384 = vmatprep.subr.mxu0 0.0
      %4385 = vmatpush1.msra.mxu0 0.0
      %4386 = vmatprep.subr.mxu0 0.0
      %4387 = vmatpush1.msra.mxu0 0.0
      %4388 = vmatprep.subr.mxu0 0.0
      %4389 = vmatpush1.msra.mxu0 0.0
      %4390 = vmatprep.subr.mxu0 0.0
      %4391 = vmatpush1.msra.mxu0 0.0
      %4392 = vmatprep.subr.mxu0 0.0
      %4393 = vmatpush1.msra.mxu0 0.0
      %4394 = vmatprep.subr.mxu0 0.0
      %4395 = vmatpush1.msra.mxu0 0.0
      %4396 = vmatprep.subr.mxu0 0.0
      %4397 = vmatpush1.msra.mxu0 0.0
      %4398 = vmatprep.subr.mxu0 0.0
      %4399 = vmatpush1.msra.mxu0 0.0
      %4400 = vmatprep.subr.mxu0 0.0
      %4401 = vmatpush1.msra.mxu0 0.0
      %4402 = vmatprep.mubr.f32.mxu0 0.0
      %4403 = vmatmul.mubr.f32.gmra.mrb[0].mxu0 %v4336
      %v4404 = vpop.f32.mrb[0].mxu0
      %v4405 = vadd.f32 0.0, %v4404
      %v4406 = vpop.f32.mrb[0].mxu0
      %4407 = vdwg.mxu0
      %v4408 = vadd.f32 %v4331, %v4405
      %s4409 = scalar_lea.vmem %s5, 208
      %v4410 = vld [vmem:[%s4409] sm:$0xff]
      %v4411 = vld [vmem:[%s4409 + $0x8] sm:$0xff]
      %v4412 = vrot.slane %v3404, 6
      %v4413 = vsel %vm3417, %v4412, 0
      %4415 = vmatprep.subr.mxu0 0.0
      %4416 = vmatpush1.msra.mxu0 %v4410
      %4417 = vmatprep.subr.mxu0 0.0
      %4418 = vmatpush1.msra.mxu0 %v4411
      %4419 = vmatprep.subr.mxu0 0.0
      %4420 = vmatpush1.msra.mxu0 0.0
      %4421 = vmatprep.subr.mxu0 0.0
      %4422 = vmatpush1.msra.mxu0 0.0
      %4423 = vmatprep.subr.mxu0 0.0
      %4424 = vmatpush1.msra.mxu0 0.0
      %4425 = vmatprep.subr.mxu0 0.0
      %4426 = vmatpush1.msra.mxu0 0.0
      %4427 = vmatprep.subr.mxu0 0.0
      %4428 = vmatpush1.msra.mxu0 0.0
      %4429 = vmatprep.subr.mxu0 0.0
      %4430 = vmatpush1.msra.mxu0 0.0
      %4431 = vmatprep.subr.mxu0 0.0
      %4432 = vmatpush1.msra.mxu0 0.0
      %4433 = vmatprep.subr.mxu0 0.0
      %4434 = vmatpush1.msra.mxu0 0.0
      %4435 = vmatprep.subr.mxu0 0.0
      %4436 = vmatpush1.msra.mxu0 0.0
      %4437 = vmatprep.subr.mxu0 0.0
      %4438 = vmatpush1.msra.mxu0 0.0
      %4439 = vmatprep.subr.mxu0 0.0
      %4440 = vmatpush1.msra.mxu0 0.0
      %4441 = vmatprep.subr.mxu0 0.0
      %4442 = vmatpush1.msra.mxu0 0.0
      %4443 = vmatprep.subr.mxu0 0.0
      %4444 = vmatpush1.msra.mxu0 0.0
      %4445 = vmatprep.subr.mxu0 0.0
      %4446 = vmatpush1.msra.mxu0 0.0
      %4447 = vmatprep.subr.mxu0 0.0
      %4448 = vmatpush1.msra.mxu0 0.0
      %4449 = vmatprep.subr.mxu0 0.0
      %4450 = vmatpush1.msra.mxu0 0.0
      %4451 = vmatprep.subr.mxu0 0.0
      %4452 = vmatpush1.msra.mxu0 0.0
      %4453 = vmatprep.subr.mxu0 0.0
      %4454 = vmatpush1.msra.mxu0 0.0
      %4455 = vmatprep.subr.mxu0 0.0
      %4456 = vmatpush1.msra.mxu0 0.0
      %4457 = vmatprep.subr.mxu0 0.0
      %4458 = vmatpush1.msra.mxu0 0.0
      %4459 = vmatprep.subr.mxu0 0.0
      %4460 = vmatpush1.msra.mxu0 0.0
      %4461 = vmatprep.subr.mxu0 0.0
      %4462 = vmatpush1.msra.mxu0 0.0
      %4463 = vmatprep.subr.mxu0 0.0
      %4464 = vmatpush1.msra.mxu0 0.0
      %4465 = vmatprep.subr.mxu0 0.0
      %4466 = vmatpush1.msra.mxu0 0.0
      %4467 = vmatprep.subr.mxu0 0.0
      %4468 = vmatpush1.msra.mxu0 0.0
      %4469 = vmatprep.subr.mxu0 0.0
      %4470 = vmatpush1.msra.mxu0 0.0
      %4471 = vmatprep.subr.mxu0 0.0
      %4472 = vmatpush1.msra.mxu0 0.0
      %4473 = vmatprep.subr.mxu0 0.0
      %4474 = vmatpush1.msra.mxu0 0.0
      %4475 = vmatprep.subr.mxu0 0.0
      %4476 = vmatpush1.msra.mxu0 0.0
      %4477 = vmatprep.subr.mxu0 0.0
      %4478 = vmatpush1.msra.mxu0 0.0
      %4479 = vmatprep.mubr.f32.mxu0 0.0
      %4480 = vmatmul.mubr.f32.gmra.mrb[0].mxu0 %v4413
      %v4481 = vpop.f32.mrb[0].mxu0
      %v4482 = vadd.f32 0.0, %v4481
      %v4483 = vpop.f32.mrb[0].mxu0
      %4484 = vdwg.mxu0
      %v4485 = vadd.f32 %v4408, %v4482
      %s4486 = scalar_lea.vmem %s5, 224
      %v4487 = vld [vmem:[%s4486] sm:$0xff]
      %v4488 = vld [vmem:[%s4486 + $0x8] sm:$0xff]
      %v4490 = vsel %vm3417, %v3405, 0
      %4492 = vmatprep.subr.mxu0 0.0
      %4493 = vmatpush1.msra.mxu0 %v4487
      %4494 = vmatprep.subr.mxu0 0.0
      %4495 = vmatpush1.msra.mxu0 %v4488
      %4496 = vmatprep.subr.mxu0 0.0
      %4497 = vmatpush1.msra.mxu0 0.0
      %4498 = vmatprep.subr.mxu0 0.0
      %4499 = vmatpush1.msra.mxu0 0.0
      %4500 = vmatprep.subr.mxu0 0.0
      %4501 = vmatpush1.msra.mxu0 0.0
      %4502 = vmatprep.subr.mxu0 0.0
      %4503 = vmatpush1.msra.mxu0 0.0
      %4504 = vmatprep.subr.mxu0 0.0
      %4505 = vmatpush1.msra.mxu0 0.0
      %4506 = vmatprep.subr.mxu0 0.0
      %4507 = vmatpush1.msra.mxu0 0.0
      %4508 = vmatprep.subr.mxu0 0.0
      %4509 = vmatpush1.msra.mxu0 0.0
      %4510 = vmatprep.subr.mxu0 0.0
      %4511 = vmatpush1.msra.mxu0 0.0
      %4512 = vmatprep.subr.mxu0 0.0
      %4513 = vmatpush1.msra.mxu0 0.0
      %4514 = vmatprep.subr.mxu0 0.0
      %4515 = vmatpush1.msra.mxu0 0.0
      %4516 = vmatprep.subr.mxu0 0.0
      %4517 = vmatpush1.msra.mxu0 0.0
      %4518 = vmatprep.subr.mxu0 0.0
      %4519 = vmatpush1.msra.mxu0 0.0
      %4520 = vmatprep.subr.mxu0 0.0
      %4521 = vmatpush1.msra.mxu0 0.0
      %4522 = vmatprep.subr.mxu0 0.0
      %4523 = vmatpush1.msra.mxu0 0.0
      %4524 = vmatprep.subr.mxu0 0.0
      %4525 = vmatpush1.msra.mxu0 0.0
      %4526 = vmatprep.subr.mxu0 0.0
      %4527 = vmatpush1.msra.mxu0 0.0
      %4528 = vmatprep.subr.mxu0 0.0
      %4529 = vmatpush1.msra.mxu0 0.0
      %4530 = vmatprep.subr.mxu0 0.0
      %4531 = vmatpush1.msra.mxu0 0.0
      %4532 = vmatprep.subr.mxu0 0.0
      %4533 = vmatpush1.msra.mxu0 0.0
      %4534 = vmatprep.subr.mxu0 0.0
      %4535 = vmatpush1.msra.mxu0 0.0
      %4536 = vmatprep.subr.mxu0 0.0
      %4537 = vmatpush1.msra.mxu0 0.0
      %4538 = vmatprep.subr.mxu0 0.0
      %4539 = vmatpush1.msra.mxu0 0.0
      %4540 = vmatprep.subr.mxu0 0.0
      %4541 = vmatpush1.msra.mxu0 0.0
      %4542 = vmatprep.subr.mxu0 0.0
      %4543 = vmatpush1.msra.mxu0 0.0
      %4544 = vmatprep.subr.mxu0 0.0
      %4545 = vmatpush1.msra.mxu0 0.0
      %4546 = vmatprep.subr.mxu0 0.0
      %4547 = vmatpush1.msra.mxu0 0.0
      %4548 = vmatprep.subr.mxu0 0.0
      %4549 = vmatpush1.msra.mxu0 0.0
      %4550 = vmatprep.subr.mxu0 0.0
      %4551 = vmatpush1.msra.mxu0 0.0
      %4552 = vmatprep.subr.mxu0 0.0
      %4553 = vmatpush1.msra.mxu0 0.0
      %4554 = vmatprep.subr.mxu0 0.0
      %4555 = vmatpush1.msra.mxu0 0.0
      %4556 = vmatprep.mubr.f32.mxu0 0.0
      %4557 = vmatmul.mubr.f32.gmra.mrb[0].mxu0 %v4490
      %v4558 = vpop.f32.mrb[0].mxu0
      %v4559 = vadd.f32 0.0, %v4558
      %v4560 = vpop.f32.mrb[0].mxu0
      %4561 = vdwg.mxu0
      %v4562 = vadd.f32 %v4485, %v4559
      %s4563 = scalar_lea.vmem %s5, 240
      %v4564 = vld [vmem:[%s4563] sm:$0xff]
      %v4565 = vld [vmem:[%s4563 + $0x8] sm:$0xff]
      %v4567 = vsel %vm3417, %v3406, 0
      %4569 = vmatprep.subr.mxu0 0.0
      %4570 = vmatpush1.msra.mxu0 %v4564
      %4571 = vmatprep.subr.mxu0 0.0
      %4572 = vmatpush1.msra.mxu0 %v4565
      %4573 = vmatprep.subr.mxu0 0.0
      %4574 = vmatpush1.msra.mxu0 0.0
      %4575 = vmatprep.subr.mxu0 0.0
      %4576 = vmatpush1.msra.mxu0 0.0
      %4577 = vmatprep.subr.mxu0 0.0
      %4578 = vmatpush1.msra.mxu0 0.0
      %4579 = vmatprep.subr.mxu0 0.0
      %4580 = vmatpush1.msra.mxu0 0.0
      %4581 = vmatprep.subr.mxu0 0.0
      %4582 = vmatpush1.msra.mxu0 0.0
      %4583 = vmatprep.subr.mxu0 0.0
      %4584 = vmatpush1.msra.mxu0 0.0
      %4585 = vmatprep.subr.mxu0 0.0
      %4586 = vmatpush1.msra.mxu0 0.0
      %4587 = vmatprep.subr.mxu0 0.0
      %4588 = vmatpush1.msra.mxu0 0.0
      %4589 = vmatprep.subr.mxu0 0.0
      %4590 = vmatpush1.msra.mxu0 0.0
      %4591 = vmatprep.subr.mxu0 0.0
      %4592 = vmatpush1.msra.mxu0 0.0
      %4593 = vmatprep.subr.mxu0 0.0
      %4594 = vmatpush1.msra.mxu0 0.0
      %4595 = vmatprep.subr.mxu0 0.0
      %4596 = vmatpush1.msra.mxu0 0.0
      %4597 = vmatprep.subr.mxu0 0.0
      %4598 = vmatpush1.msra.mxu0 0.0
      %4599 = vmatprep.subr.mxu0 0.0
      %4600 = vmatpush1.msra.mxu0 0.0
      %4601 = vmatprep.subr.mxu0 0.0
      %4602 = vmatpush1.msra.mxu0 0.0
      %4603 = vmatprep.subr.mxu0 0.0
      %4604 = vmatpush1.msra.mxu0 0.0
      %4605 = vmatprep.subr.mxu0 0.0
      %4606 = vmatpush1.msra.mxu0 0.0
      %4607 = vmatprep.subr.mxu0 0.0
      %4608 = vmatpush1.msra.mxu0 0.0
      %4609 = vmatprep.subr.mxu0 0.0
      %4610 = vmatpush1.msra.mxu0 0.0
      %4611 = vmatprep.subr.mxu0 0.0
      %4612 = vmatpush1.msra.mxu0 0.0
      %4613 = vmatprep.subr.mxu0 0.0
      %4614 = vmatpush1.msra.mxu0 0.0
      %4615 = vmatprep.subr.mxu0 0.0
      %4616 = vmatpush1.msra.mxu0 0.0
      %4617 = vmatprep.subr.mxu0 0.0
      %4618 = vmatpush1.msra.mxu0 0.0
      %4619 = vmatprep.subr.mxu0 0.0
      %4620 = vmatpush1.msra.mxu0 0.0
      %4621 = vmatprep.subr.mxu0 0.0
      %4622 = vmatpush1.msra.mxu0 0.0
      %4623 = vmatprep.subr.mxu0 0.0
      %4624 = vmatpush1.msra.mxu0 0.0
      %4625 = vmatprep.subr.mxu0 0.0
      %4626 = vmatpush1.msra.mxu0 0.0
      %4627 = vmatprep.subr.mxu0 0.0
      %4628 = vmatpush1.msra.mxu0 0.0
      %4629 = vmatprep.subr.mxu0 0.0
      %4630 = vmatpush1.msra.mxu0 0.0
      %4631 = vmatprep.subr.mxu0 0.0
      %4632 = vmatpush1.msra.mxu0 0.0
      %4633 = vmatprep.mubr.f32.mxu0 0.0
      %4634 = vmatmul.mubr.f32.gmra.mrb[0].mxu0 %v4567
      %v4635 = vpop.f32.mrb[0].mxu0
      %v4636 = vadd.f32 0.0, %v4635
      %v4637 = vpop.f32.mrb[0].mxu0
      %4638 = vdwg.mxu0
      %v4639 = vadd.f32 %v4562, %v4636
      %s4640 = scalar_lea.vmem %s5, 256
      %v4641 = vld [vmem:[%s4640] sm:$0xff]
      %v4642 = vld [vmem:[%s4640 + $0x8] sm:$0xff]
      %v4643 = vrot.slane %v3406, 2
      %v4644 = vsel %vm3417, %v4643, 0
      %4646 = vmatprep.subr.mxu0 0.0
      %4647 = vmatpush1.msra.mxu0 %v4641
      %4648 = vmatprep.subr.mxu0 0.0
      %4649 = vmatpush1.msra.mxu0 %v4642
      %4650 = vmatprep.subr.mxu0 0.0
      %4651 = vmatpush1.msra.mxu0 0.0
      %4652 = vmatprep.subr.mxu0 0.0
      %4653 = vmatpush1.msra.mxu0 0.0
      %4654 = vmatprep.subr.mxu0 0.0
      %4655 = vmatpush1.msra.mxu0 0.0
      %4656 = vmatprep.subr.mxu0 0.0
      %4657 = vmatpush1.msra.mxu0 0.0
      %4658 = vmatprep.subr.mxu0 0.0
      %4659 = vmatpush1.msra.mxu0 0.0
      %4660 = vmatprep.subr.mxu0 0.0
      %4661 = vmatpush1.msra.mxu0 0.0
      %4662 = vmatprep.subr.mxu0 0.0
      %4663 = vmatpush1.msra.mxu0 0.0
      %4664 = vmatprep.subr.mxu0 0.0
      %4665 = vmatpush1.msra.mxu0 0.0
      %4666 = vmatprep.subr.mxu0 0.0
      %4667 = vmatpush1.msra.mxu0 0.0
      %4668 = vmatprep.subr.mxu0 0.0
      %4669 = vmatpush1.msra.mxu0 0.0
      %4670 = vmatprep.subr.mxu0 0.0
      %4671 = vmatpush1.msra.mxu0 0.0
      %4672 = vmatprep.subr.mxu0 0.0
      %4673 = vmatpush1.msra.mxu0 0.0
      %4674 = vmatprep.subr.mxu0 0.0
      %4675 = vmatpush1.msra.mxu0 0.0
      %4676 = vmatprep.subr.mxu0 0.0
      %4677 = vmatpush1.msra.mxu0 0.0
      %4678 = vmatprep.subr.mxu0 0.0
      %4679 = vmatpush1.msra.mxu0 0.0
      %4680 = vmatprep.subr.mxu0 0.0
      %4681 = vmatpush1.msra.mxu0 0.0
      %4682 = vmatprep.subr.mxu0 0.0
      %4683 = vmatpush1.msra.mxu0 0.0
      %4684 = vmatprep.subr.mxu0 0.0
      %4685 = vmatpush1.msra.mxu0 0.0
      %4686 = vmatprep.subr.mxu0 0.0
      %4687 = vmatpush1.msra.mxu0 0.0
      %4688 = vmatprep.subr.mxu0 0.0
      %4689 = vmatpush1.msra.mxu0 0.0
      %4690 = vmatprep.subr.mxu0 0.0
      %4691 = vmatpush1.msra.mxu0 0.0
      %4692 = vmatprep.subr.mxu0 0.0
      %4693 = vmatpush1.msra.mxu0 0.0
      %4694 = vmatprep.subr.mxu0 0.0
      %4695 = vmatpush1.msra.mxu0 0.0
      %4696 = vmatprep.subr.mxu0 0.0
      %4697 = vmatpush1.msra.mxu0 0.0
      %4698 = vmatprep.subr.mxu0 0.0
      %4699 = vmatpush1.msra.mxu0 0.0
      %4700 = vmatprep.subr.mxu0 0.0
      %4701 = vmatpush1.msra.mxu0 0.0
      %4702 = vmatprep.subr.mxu0 0.0
      %4703 = vmatpush1.msra.mxu0 0.0
      %4704 = vmatprep.subr.mxu0 0.0
      %4705 = vmatpush1.msra.mxu0 0.0
      %4706 = vmatprep.subr.mxu0 0.0
      %4707 = vmatpush1.msra.mxu0 0.0
      %4708 = vmatprep.subr.mxu0 0.0
      %4709 = vmatpush1.msra.mxu0 0.0
      %4710 = vmatprep.mubr.f32.mxu0 0.0
      %4711 = vmatmul.mubr.f32.gmra.mrb[0].mxu0 %v4644
      %v4712 = vpop.f32.mrb[0].mxu0
      %v4713 = vadd.f32 0.0, %v4712
      %v4714 = vpop.f32.mrb[0].mxu0
      %4715 = vdwg.mxu0
      %v4716 = vadd.f32 %v4639, %v4713
      %s4717 = scalar_lea.vmem %s5, 272
      %v4718 = vld [vmem:[%s4717] sm:$0xff]
      %v4719 = vld [vmem:[%s4717 + $0x8] sm:$0xff]
      %v4720 = vrot.slane %v3406, 4
      %v4721 = vsel %vm3417, %v4720, 0
      %4723 = vmatprep.subr.mxu0 0.0
      %4724 = vmatpush1.msra.mxu0 %v4718
      %4725 = vmatprep.subr.mxu0 0.0
      %4726 = vmatpush1.msra.mxu0 %v4719
      %4727 = vmatprep.subr.mxu0 0.0
      %4728 = vmatpush1.msra.mxu0 0.0
      %4729 = vmatprep.subr.mxu0 0.0
      %4730 = vmatpush1.msra.mxu0 0.0
      %4731 = vmatprep.subr.mxu0 0.0
      %4732 = vmatpush1.msra.mxu0 0.0
      %4733 = vmatprep.subr.mxu0 0.0
      %4734 = vmatpush1.msra.mxu0 0.0
      %4735 = vmatprep.subr.mxu0 0.0
      %4736 = vmatpush1.msra.mxu0 0.0
      %4737 = vmatprep.subr.mxu0 0.0
      %4738 = vmatpush1.msra.mxu0 0.0
      %4739 = vmatprep.subr.mxu0 0.0
      %4740 = vmatpush1.msra.mxu0 0.0
      %4741 = vmatprep.subr.mxu0 0.0
      %4742 = vmatpush1.msra.mxu0 0.0
      %4743 = vmatprep.subr.mxu0 0.0
      %4744 = vmatpush1.msra.mxu0 0.0
      %4745 = vmatprep.subr.mxu0 0.0
      %4746 = vmatpush1.msra.mxu0 0.0
      %4747 = vmatprep.subr.mxu0 0.0
      %4748 = vmatpush1.msra.mxu0 0.0
      %4749 = vmatprep.subr.mxu0 0.0
      %4750 = vmatpush1.msra.mxu0 0.0
      %4751 = vmatprep.subr.mxu0 0.0
      %4752 = vmatpush1.msra.mxu0 0.0
      %4753 = vmatprep.subr.mxu0 0.0
      %4754 = vmatpush1.msra.mxu0 0.0
      %4755 = vmatprep.subr.mxu0 0.0
      %4756 = vmatpush1.msra.mxu0 0.0
      %4757 = vmatprep.subr.mxu0 0.0
      %4758 = vmatpush1.msra.mxu0 0.0
      %4759 = vmatprep.subr.mxu0 0.0
      %4760 = vmatpush1.msra.mxu0 0.0
      %4761 = vmatprep.subr.mxu0 0.0
      %4762 = vmatpush1.msra.mxu0 0.0
      %4763 = vmatprep.subr.mxu0 0.0
      %4764 = vmatpush1.msra.mxu0 0.0
      %4765 = vmatprep.subr.mxu0 0.0
      %4766 = vmatpush1.msra.mxu0 0.0
      %4767 = vmatprep.subr.mxu0 0.0
      %4768 = vmatpush1.msra.mxu0 0.0
      %4769 = vmatprep.subr.mxu0 0.0
      %4770 = vmatpush1.msra.mxu0 0.0
      %4771 = vmatprep.subr.mxu0 0.0
      %4772 = vmatpush1.msra.mxu0 0.0
      %4773 = vmatprep.subr.mxu0 0.0
      %4774 = vmatpush1.msra.mxu0 0.0
      %4775 = vmatprep.subr.mxu0 0.0
      %4776 = vmatpush1.msra.mxu0 0.0
      %4777 = vmatprep.subr.mxu0 0.0
      %4778 = vmatpush1.msra.mxu0 0.0
      %4779 = vmatprep.subr.mxu0 0.0
      %4780 = vmatpush1.msra.mxu0 0.0
      %4781 = vmatprep.subr.mxu0 0.0
      %4782 = vmatpush1.msra.mxu0 0.0
      %4783 = vmatprep.subr.mxu0 0.0
      %4784 = vmatpush1.msra.mxu0 0.0
      %4785 = vmatprep.subr.mxu0 0.0
      %4786 = vmatpush1.msra.mxu0 0.0
      %4787 = vmatprep.mubr.f32.mxu0 0.0
      %4788 = vmatmul.mubr.f32.gmra.mrb[0].mxu0 %v4721
      %v4789 = vpop.f32.mrb[0].mxu0
      %v4790 = vadd.f32 0.0, %v4789
      %v4791 = vpop.f32.mrb[0].mxu0
      %4792 = vdwg.mxu0
      %v4793 = vadd.f32 %v4716, %v4790
      %s4794 = scalar_lea.vmem %s5, 288
      %v4795 = vld [vmem:[%s4794] sm:$0xff]
      %v4796 = vld [vmem:[%s4794 + $0x8] sm:$0xff]
      %v4797 = vrot.slane %v3406, 6
      %v4798 = vsel %vm3417, %v4797, 0
      %4800 = vmatprep.subr.mxu0 0.0
      %4801 = vmatpush1.msra.mxu0 %v4795
      %4802 = vmatprep.subr.mxu0 0.0
      %4803 = vmatpush1.msra.mxu0 %v4796
      %4804 = vmatprep.subr.mxu0 0.0
      %4805 = vmatpush1.msra.mxu0 0.0
      %4806 = vmatprep.subr.mxu0 0.0
      %4807 = vmatpush1.msra.mxu0 0.0
      %4808 = vmatprep.subr.mxu0 0.0
      %4809 = vmatpush1.msra.mxu0 0.0
      %4810 = vmatprep.subr.mxu0 0.0
      %4811 = vmatpush1.msra.mxu0 0.0
      %4812 = vmatprep.subr.mxu0 0.0
      %4813 = vmatpush1.msra.mxu0 0.0
      %4814 = vmatprep.subr.mxu0 0.0
      %4815 = vmatpush1.msra.mxu0 0.0
      %4816 = vmatprep.subr.mxu0 0.0
      %4817 = vmatpush1.msra.mxu0 0.0
      %4818 = vmatprep.subr.mxu0 0.0
      %4819 = vmatpush1.msra.mxu0 0.0
      %4820 = vmatprep.subr.mxu0 0.0
      %4821 = vmatpush1.msra.mxu0 0.0
      %4822 = vmatprep.subr.mxu0 0.0
      %4823 = vmatpush1.msra.mxu0 0.0
      %4824 = vmatprep.subr.mxu0 0.0
      %4825 = vmatpush1.msra.mxu0 0.0
      %4826 = vmatprep.subr.mxu0 0.0
      %4827 = vmatpush1.msra.mxu0 0.0
      %4828 = vmatprep.subr.mxu0 0.0
      %4829 = vmatpush1.msra.mxu0 0.0
      %4830 = vmatprep.subr.mxu0 0.0
      %4831 = vmatpush1.msra.mxu0 0.0
      %4832 = vmatprep.subr.mxu0 0.0
      %4833 = vmatpush1.msra.mxu0 0.0
      %4834 = vmatprep.subr.mxu0 0.0
      %4835 = vmatpush1.msra.mxu0 0.0
      %4836 = vmatprep.subr.mxu0 0.0
      %4837 = vmatpush1.msra.mxu0 0.0
      %4838 = vmatprep.subr.mxu0 0.0
      %4839 = vmatpush1.msra.mxu0 0.0
      %4840 = vmatprep.subr.mxu0 0.0
      %4841 = vmatpush1.msra.mxu0 0.0
      %4842 = vmatprep.subr.mxu0 0.0
      %4843 = vmatpush1.msra.mxu0 0.0
      %4844 = vmatprep.subr.mxu0 0.0
      %4845 = vmatpush1.msra.mxu0 0.0
      %4846 = vmatprep.subr.mxu0 0.0
      %4847 = vmatpush1.msra.mxu0 0.0
      %4848 = vmatprep.subr.mxu0 0.0
      %4849 = vmatpush1.msra.mxu0 0.0
      %4850 = vmatprep.subr.mxu0 0.0
      %4851 = vmatpush1.msra.mxu0 0.0
      %4852 = vmatprep.subr.mxu0 0.0
      %4853 = vmatpush1.msra.mxu0 0.0
      %4854 = vmatprep.subr.mxu0 0.0
      %4855 = vmatpush1.msra.mxu0 0.0
      %4856 = vmatprep.subr.mxu0 0.0
      %4857 = vmatpush1.msra.mxu0 0.0
      %4858 = vmatprep.subr.mxu0 0.0
      %4859 = vmatpush1.msra.mxu0 0.0
      %4860 = vmatprep.subr.mxu0 0.0
      %4861 = vmatpush1.msra.mxu0 0.0
      %4862 = vmatprep.subr.mxu0 0.0
      %4863 = vmatpush1.msra.mxu0 0.0
      %4864 = vmatprep.mubr.f32.mxu0 0.0
      %4865 = vmatmul.mubr.f32.gmra.mrb[0].mxu0 %v4798
      %v4866 = vpop.f32.mrb[0].mxu0
      %v4867 = vadd.f32 0.0, %v4866
      %v4868 = vpop.f32.mrb[0].mxu0
      %4869 = vdwg.mxu0
      %v4870 = vadd.f32 %v4793, %v4867
      %s4871 = scalar_lea.vmem %s5, 304
      %v4872 = vld [vmem:[%s4871] sm:$0xff]
      %v4873 = vld [vmem:[%s4871 + $0x8] sm:$0xff]
      %v4875 = vsel %vm3417, %v3407, 0
      %4877 = vmatprep.subr.mxu0 0.0
      %4878 = vmatpush1.msra.mxu0 %v4872
      %4879 = vmatprep.subr.mxu0 0.0
      %4880 = vmatpush1.msra.mxu0 %v4873
      %4881 = vmatprep.subr.mxu0 0.0
      %4882 = vmatpush1.msra.mxu0 0.0
      %4883 = vmatprep.subr.mxu0 0.0
      %4884 = vmatpush1.msra.mxu0 0.0
      %4885 = vmatprep.subr.mxu0 0.0
      %4886 = vmatpush1.msra.mxu0 0.0
      %4887 = vmatprep.subr.mxu0 0.0
      %4888 = vmatpush1.msra.mxu0 0.0
      %4889 = vmatprep.subr.mxu0 0.0
      %4890 = vmatpush1.msra.mxu0 0.0
      %4891 = vmatprep.subr.mxu0 0.0
      %4892 = vmatpush1.msra.mxu0 0.0
      %4893 = vmatprep.subr.mxu0 0.0
      %4894 = vmatpush1.msra.mxu0 0.0
      %4895 = vmatprep.subr.mxu0 0.0
      %4896 = vmatpush1.msra.mxu0 0.0
      %4897 = vmatprep.subr.mxu0 0.0
      %4898 = vmatpush1.msra.mxu0 0.0
      %4899 = vmatprep.subr.mxu0 0.0
      %4900 = vmatpush1.msra.mxu0 0.0
      %4901 = vmatprep.subr.mxu0 0.0
      %4902 = vmatpush1.msra.mxu0 0.0
      %4903 = vmatprep.subr.mxu0 0.0
      %4904 = vmatpush1.msra.mxu0 0.0
      %4905 = vmatprep.subr.mxu0 0.0
      %4906 = vmatpush1.msra.mxu0 0.0
      %4907 = vmatprep.subr.mxu0 0.0
      %4908 = vmatpush1.msra.mxu0 0.0
      %4909 = vmatprep.subr.mxu0 0.0
      %4910 = vmatpush1.msra.mxu0 0.0
      %4911 = vmatprep.subr.mxu0 0.0
      %4912 = vmatpush1.msra.mxu0 0.0
      %4913 = vmatprep.subr.mxu0 0.0
      %4914 = vmatpush1.msra.mxu0 0.0
      %4915 = vmatprep.subr.mxu0 0.0
      %4916 = vmatpush1.msra.mxu0 0.0
      %4917 = vmatprep.subr.mxu0 0.0
      %4918 = vmatpush1.msra.mxu0 0.0
      %4919 = vmatprep.subr.mxu0 0.0
      %4920 = vmatpush1.msra.mxu0 0.0
      %4921 = vmatprep.subr.mxu0 0.0
      %4922 = vmatpush1.msra.mxu0 0.0
      %4923 = vmatprep.subr.mxu0 0.0
      %4924 = vmatpush1.msra.mxu0 0.0
      %4925 = vmatprep.subr.mxu0 0.0
      %4926 = vmatpush1.msra.mxu0 0.0
      %4927 = vmatprep.subr.mxu0 0.0
      %4928 = vmatpush1.msra.mxu0 0.0
      %4929 = vmatprep.subr.mxu0 0.0
      %4930 = vmatpush1.msra.mxu0 0.0
      %4931 = vmatprep.subr.mxu0 0.0
      %4932 = vmatpush1.msra.mxu0 0.0
      %4933 = vmatprep.subr.mxu0 0.0
      %4934 = vmatpush1.msra.mxu0 0.0
      %4935 = vmatprep.subr.mxu0 0.0
      %4936 = vmatpush1.msra.mxu0 0.0
      %4937 = vmatprep.subr.mxu0 0.0
      %4938 = vmatpush1.msra.mxu0 0.0
      %4939 = vmatprep.subr.mxu0 0.0
      %4940 = vmatpush1.msra.mxu0 0.0
      %4941 = vmatprep.mubr.f32.mxu0 0.0
      %4942 = vmatmul.mubr.f32.gmra.mrb[0].mxu0 %v4875
      %v4943 = vpop.f32.mrb[0].mxu0
      %v4944 = vadd.f32 0.0, %v4943
      %v4945 = vpop.f32.mrb[0].mxu0
      %4946 = vdwg.mxu0
      %v4947 = vadd.f32 %v4870, %v4944
      %s4948 = scalar_lea.vmem %s5, 320
      %v4949 = vld [vmem:[%s4948] sm:$0xff]
      %v4950 = vld [vmem:[%s4948 + $0x8] sm:$0xff]
      %v4952 = vsel %vm3417, %v3408, 0
      %4954 = vmatprep.subr.mxu0 0.0
      %4955 = vmatpush1.msra.mxu0 %v4949
      %4956 = vmatprep.subr.mxu0 0.0
      %4957 = vmatpush1.msra.mxu0 %v4950
      %4958 = vmatprep.subr.mxu0 0.0
      %4959 = vmatpush1.msra.mxu0 0.0
      %4960 = vmatprep.subr.mxu0 0.0
      %4961 = vmatpush1.msra.mxu0 0.0
      %4962 = vmatprep.subr.mxu0 0.0
      %4963 = vmatpush1.msra.mxu0 0.0
      %4964 = vmatprep.subr.mxu0 0.0
      %4965 = vmatpush1.msra.mxu0 0.0
      %4966 = vmatprep.subr.mxu0 0.0
      %4967 = vmatpush1.msra.mxu0 0.0
      %4968 = vmatprep.subr.mxu0 0.0
      %4969 = vmatpush1.msra.mxu0 0.0
      %4970 = vmatprep.subr.mxu0 0.0
      %4971 = vmatpush1.msra.mxu0 0.0
      %4972 = vmatprep.subr.mxu0 0.0
      %4973 = vmatpush1.msra.mxu0 0.0
      %4974 = vmatprep.subr.mxu0 0.0
      %4975 = vmatpush1.msra.mxu0 0.0
      %4976 = vmatprep.subr.mxu0 0.0
      %4977 = vmatpush1.msra.mxu0 0.0
      %4978 = vmatprep.subr.mxu0 0.0
      %4979 = vmatpush1.msra.mxu0 0.0
      %4980 = vmatprep.subr.mxu0 0.0
      %4981 = vmatpush1.msra.mxu0 0.0
      %4982 = vmatprep.subr.mxu0 0.0
      %4983 = vmatpush1.msra.mxu0 0.0
      %4984 = vmatprep.subr.mxu0 0.0
      %4985 = vmatpush1.msra.mxu0 0.0
      %4986 = vmatprep.subr.mxu0 0.0
      %4987 = vmatpush1.msra.mxu0 0.0
      %4988 = vmatprep.subr.mxu0 0.0
      %4989 = vmatpush1.msra.mxu0 0.0
      %4990 = vmatprep.subr.mxu0 0.0
      %4991 = vmatpush1.msra.mxu0 0.0
      %4992 = vmatprep.subr.mxu0 0.0
      %4993 = vmatpush1.msra.mxu0 0.0
      %4994 = vmatprep.subr.mxu0 0.0
      %4995 = vmatpush1.msra.mxu0 0.0
      %4996 = vmatprep.subr.mxu0 0.0
      %4997 = vmatpush1.msra.mxu0 0.0
      %4998 = vmatprep.subr.mxu0 0.0
      %4999 = vmatpush1.msra.mxu0 0.0
      %5000 = vmatprep.subr.mxu0 0.0
      %5001 = vmatpush1.msra.mxu0 0.0
      %5002 = vmatprep.subr.mxu0 0.0
      %5003 = vmatpush1.msra.mxu0 0.0
      %5004 = vmatprep.subr.mxu0 0.0
      %5005 = vmatpush1.msra.mxu0 0.0
      %5006 = vmatprep.subr.mxu0 0.0
      %5007 = vmatpush1.msra.mxu0 0.0
      %5008 = vmatprep.subr.mxu0 0.0
      %5009 = vmatpush1.msra.mxu0 0.0
      %5010 = vmatprep.subr.mxu0 0.0
      %5011 = vmatpush1.msra.mxu0 0.0
      %5012 = vmatprep.subr.mxu0 0.0
      %5013 = vmatpush1.msra.mxu0 0.0
      %5014 = vmatprep.subr.mxu0 0.0
      %5015 = vmatpush1.msra.mxu0 0.0
      %5016 = vmatprep.subr.mxu0 0.0
      %5017 = vmatpush1.msra.mxu0 0.0
      %5018 = vmatprep.mubr.f32.mxu0 0.0
      %5019 = vmatmul.mubr.f32.gmra.mrb[0].mxu0 %v4952
      %v5020 = vpop.f32.mrb[0].mxu0
      %v5021 = vadd.f32 0.0, %v5020
      %v5022 = vpop.f32.mrb[0].mxu0
      %5023 = vdwg.mxu0
      %v5024 = vadd.f32 %v4947, %v5021
      %s5025 = scalar_lea.vmem %s5, 336
      %v5026 = vld [vmem:[%s5025] sm:$0xff]
      %v5027 = vld [vmem:[%s5025 + $0x8] sm:$0xff]
      %v5028 = vrot.slane %v3408, 2
      %v5029 = vsel %vm3417, %v5028, 0
      %5031 = vmatprep.subr.mxu0 0.0
      %5032 = vmatpush1.msra.mxu0 %v5026
      %5033 = vmatprep.subr.mxu0 0.0
      %5034 = vmatpush1.msra.mxu0 %v5027
      %5035 = vmatprep.subr.mxu0 0.0
      %5036 = vmatpush1.msra.mxu0 0.0
      %5037 = vmatprep.subr.mxu0 0.0
      %5038 = vmatpush1.msra.mxu0 0.0
      %5039 = vmatprep.subr.mxu0 0.0
      %5040 = vmatpush1.msra.mxu0 0.0
      %5041 = vmatprep.subr.mxu0 0.0
      %5042 = vmatpush1.msra.mxu0 0.0
      %5043 = vmatprep.subr.mxu0 0.0
      %5044 = vmatpush1.msra.mxu0 0.0
      %5045 = vmatprep.subr.mxu0 0.0
      %5046 = vmatpush1.msra.mxu0 0.0
      %5047 = vmatprep.subr.mxu0 0.0
      %5048 = vmatpush1.msra.mxu0 0.0
      %5049 = vmatprep.subr.mxu0 0.0
      %5050 = vmatpush1.msra.mxu0 0.0
      %5051 = vmatprep.subr.mxu0 0.0
      %5052 = vmatpush1.msra.mxu0 0.0
      %5053 = vmatprep.subr.mxu0 0.0
      %5054 = vmatpush1.msra.mxu0 0.0
      %5055 = vmatprep.subr.mxu0 0.0
      %5056 = vmatpush1.msra.mxu0 0.0
      %5057 = vmatprep.subr.mxu0 0.0
      %5058 = vmatpush1.msra.mxu0 0.0
      %5059 = vmatprep.subr.mxu0 0.0
      %5060 = vmatpush1.msra.mxu0 0.0
      %5061 = vmatprep.subr.mxu0 0.0
      %5062 = vmatpush1.msra.mxu0 0.0
      %5063 = vmatprep.subr.mxu0 0.0
      %5064 = vmatpush1.msra.mxu0 0.0
      %5065 = vmatprep.subr.mxu0 0.0
      %5066 = vmatpush1.msra.mxu0 0.0
      %5067 = vmatprep.subr.mxu0 0.0
      %5068 = vmatpush1.msra.mxu0 0.0
      %5069 = vmatprep.subr.mxu0 0.0
      %5070 = vmatpush1.msra.mxu0 0.0
      %5071 = vmatprep.subr.mxu0 0.0
      %5072 = vmatpush1.msra.mxu0 0.0
      %5073 = vmatprep.subr.mxu0 0.0
      %5074 = vmatpush1.msra.mxu0 0.0
      %5075 = vmatprep.subr.mxu0 0.0
      %5076 = vmatpush1.msra.mxu0 0.0
      %5077 = vmatprep.subr.mxu0 0.0
      %5078 = vmatpush1.msra.mxu0 0.0
      %5079 = vmatprep.subr.mxu0 0.0
      %5080 = vmatpush1.msra.mxu0 0.0
      %5081 = vmatprep.subr.mxu0 0.0
      %5082 = vmatpush1.msra.mxu0 0.0
      %5083 = vmatprep.subr.mxu0 0.0
      %5084 = vmatpush1.msra.mxu0 0.0
      %5085 = vmatprep.subr.mxu0 0.0
      %5086 = vmatpush1.msra.mxu0 0.0
      %5087 = vmatprep.subr.mxu0 0.0
      %5088 = vmatpush1.msra.mxu0 0.0
      %5089 = vmatprep.subr.mxu0 0.0
      %5090 = vmatpush1.msra.mxu0 0.0
      %5091 = vmatprep.subr.mxu0 0.0
      %5092 = vmatpush1.msra.mxu0 0.0
      %5093 = vmatprep.subr.mxu0 0.0
      %5094 = vmatpush1.msra.mxu0 0.0
      %5095 = vmatprep.mubr.f32.mxu0 0.0
      %5096 = vmatmul.mubr.f32.gmra.mrb[0].mxu0 %v5029
      %v5097 = vpop.f32.mrb[0].mxu0
      %v5098 = vadd.f32 0.0, %v5097
      %v5099 = vpop.f32.mrb[0].mxu0
      %5100 = vdwg.mxu0
      %v5101 = vadd.f32 %v5024, %v5098
      %s5102 = scalar_lea.vmem %s5, 352
      %v5103 = vld [vmem:[%s5102] sm:$0xff]
      %v5104 = vld [vmem:[%s5102 + $0x8] sm:$0xff]
      %v5105 = vrot.slane %v3408, 4
      %v5106 = vsel %vm3417, %v5105, 0
      %5108 = vmatprep.subr.mxu0 0.0
      %5109 = vmatpush1.msra.mxu0 %v5103
      %5110 = vmatprep.subr.mxu0 0.0
      %5111 = vmatpush1.msra.mxu0 %v5104
      %5112 = vmatprep.subr.mxu0 0.0
      %5113 = vmatpush1.msra.mxu0 0.0
      %5114 = vmatprep.subr.mxu0 0.0
      %5115 = vmatpush1.msra.mxu0 0.0
      %5116 = vmatprep.subr.mxu0 0.0
      %5117 = vmatpush1.msra.mxu0 0.0
      %5118 = vmatprep.subr.mxu0 0.0
      %5119 = vmatpush1.msra.mxu0 0.0
      %5120 = vmatprep.subr.mxu0 0.0
      %5121 = vmatpush1.msra.mxu0 0.0
      %5122 = vmatprep.subr.mxu0 0.0
      %5123 = vmatpush1.msra.mxu0 0.0
      %5124 = vmatprep.subr.mxu0 0.0
      %5125 = vmatpush1.msra.mxu0 0.0
      %5126 = vmatprep.subr.mxu0 0.0
      %5127 = vmatpush1.msra.mxu0 0.0
      %5128 = vmatprep.subr.mxu0 0.0
      %5129 = vmatpush1.msra.mxu0 0.0
      %5130 = vmatprep.subr.mxu0 0.0
      %5131 = vmatpush1.msra.mxu0 0.0
      %5132 = vmatprep.subr.mxu0 0.0
      %5133 = vmatpush1.msra.mxu0 0.0
      %5134 = vmatprep.subr.mxu0 0.0
      %5135 = vmatpush1.msra.mxu0 0.0
      %5136 = vmatprep.subr.mxu0 0.0
      %5137 = vmatpush1.msra.mxu0 0.0
      %5138 = vmatprep.subr.mxu0 0.0
      %5139 = vmatpush1.msra.mxu0 0.0
      %5140 = vmatprep.subr.mxu0 0.0
      %5141 = vmatpush1.msra.mxu0 0.0
      %5142 = vmatprep.subr.mxu0 0.0
      %5143 = vmatpush1.msra.mxu0 0.0
      %5144 = vmatprep.subr.mxu0 0.0
      %5145 = vmatpush1.msra.mxu0 0.0
      %5146 = vmatprep.subr.mxu0 0.0
      %5147 = vmatpush1.msra.mxu0 0.0
      %5148 = vmatprep.subr.mxu0 0.0
      %5149 = vmatpush1.msra.mxu0 0.0
      %5150 = vmatprep.subr.mxu0 0.0
      %5151 = vmatpush1.msra.mxu0 0.0
      %5152 = vmatprep.subr.mxu0 0.0
      %5153 = vmatpush1.msra.mxu0 0.0
      %5154 = vmatprep.subr.mxu0 0.0
      %5155 = vmatpush1.msra.mxu0 0.0
      %5156 = vmatprep.subr.mxu0 0.0
      %5157 = vmatpush1.msra.mxu0 0.0
      %5158 = vmatprep.subr.mxu0 0.0
      %5159 = vmatpush1.msra.mxu0 0.0
      %5160 = vmatprep.subr.mxu0 0.0
      %5161 = vmatpush1.msra.mxu0 0.0
      %5162 = vmatprep.subr.mxu0 0.0
      %5163 = vmatpush1.msra.mxu0 0.0
      %5164 = vmatprep.subr.mxu0 0.0
      %5165 = vmatpush1.msra.mxu0 0.0
      %5166 = vmatprep.subr.mxu0 0.0
      %5167 = vmatpush1.msra.mxu0 0.0
      %5168 = vmatprep.subr.mxu0 0.0
      %5169 = vmatpush1.msra.mxu0 0.0
      %5170 = vmatprep.subr.mxu0 0.0
      %5171 = vmatpush1.msra.mxu0 0.0
      %5172 = vmatprep.mubr.f32.mxu0 0.0
      %5173 = vmatmul.mubr.f32.gmra.mrb[0].mxu0 %v5106
      %v5174 = vpop.f32.mrb[0].mxu0
      %v5175 = vadd.f32 0.0, %v5174
      %v5176 = vpop.f32.mrb[0].mxu0
      %5177 = vdwg.mxu0
      %v5178 = vadd.f32 %v5101, %v5175
      %s5179 = scalar_lea.vmem %s5, 368
      %v5180 = vld [vmem:[%s5179] sm:$0xff]
      %v5181 = vld [vmem:[%s5179 + $0x8] sm:$0xff]
      %v5182 = vrot.slane %v3408, 6
      %v5183 = vsel %vm3417, %v5182, 0
      %5185 = vmatprep.subr.mxu0 0.0
      %5186 = vmatpush1.msra.mxu0 %v5180
      %5187 = vmatprep.subr.mxu0 0.0
      %5188 = vmatpush1.msra.mxu0 %v5181
      %5189 = vmatprep.subr.mxu0 0.0
      %5190 = vmatpush1.msra.mxu0 0.0
      %5191 = vmatprep.subr.mxu0 0.0
      %5192 = vmatpush1.msra.mxu0 0.0
      %5193 = vmatprep.subr.mxu0 0.0
      %5194 = vmatpush1.msra.mxu0 0.0
      %5195 = vmatprep.subr.mxu0 0.0
      %5196 = vmatpush1.msra.mxu0 0.0
      %5197 = vmatprep.subr.mxu0 0.0
      %5198 = vmatpush1.msra.mxu0 0.0
      %5199 = vmatprep.subr.mxu0 0.0
      %5200 = vmatpush1.msra.mxu0 0.0
      %5201 = vmatprep.subr.mxu0 0.0
      %5202 = vmatpush1.msra.mxu0 0.0
      %5203 = vmatprep.subr.mxu0 0.0
      %5204 = vmatpush1.msra.mxu0 0.0
      %5205 = vmatprep.subr.mxu0 0.0
      %5206 = vmatpush1.msra.mxu0 0.0
      %5207 = vmatprep.subr.mxu0 0.0
      %5208 = vmatpush1.msra.mxu0 0.0
      %5209 = vmatprep.subr.mxu0 0.0
      %5210 = vmatpush1.msra.mxu0 0.0
      %5211 = vmatprep.subr.mxu0 0.0
      %5212 = vmatpush1.msra.mxu0 0.0
      %5213 = vmatprep.subr.mxu0 0.0
      %5214 = vmatpush1.msra.mxu0 0.0
      %5215 = vmatprep.subr.mxu0 0.0
      %5216 = vmatpush1.msra.mxu0 0.0
      %5217 = vmatprep.subr.mxu0 0.0
      %5218 = vmatpush1.msra.mxu0 0.0
      %5219 = vmatprep.subr.mxu0 0.0
      %5220 = vmatpush1.msra.mxu0 0.0
      %5221 = vmatprep.subr.mxu0 0.0
      %5222 = vmatpush1.msra.mxu0 0.0
      %5223 = vmatprep.subr.mxu0 0.0
      %5224 = vmatpush1.msra.mxu0 0.0
      %5225 = vmatprep.subr.mxu0 0.0
      %5226 = vmatpush1.msra.mxu0 0.0
      %5227 = vmatprep.subr.mxu0 0.0
      %5228 = vmatpush1.msra.mxu0 0.0
      %5229 = vmatprep.subr.mxu0 0.0
      %5230 = vmatpush1.msra.mxu0 0.0
      %5231 = vmatprep.subr.mxu0 0.0
      %5232 = vmatpush1.msra.mxu0 0.0
      %5233 = vmatprep.subr.mxu0 0.0
      %5234 = vmatpush1.msra.mxu0 0.0
      %5235 = vmatprep.subr.mxu0 0.0
      %5236 = vmatpush1.msra.mxu0 0.0
      %5237 = vmatprep.subr.mxu0 0.0
      %5238 = vmatpush1.msra.mxu0 0.0
      %5239 = vmatprep.subr.mxu0 0.0
      %5240 = vmatpush1.msra.mxu0 0.0
      %5241 = vmatprep.subr.mxu0 0.0
      %5242 = vmatpush1.msra.mxu0 0.0
      %5243 = vmatprep.subr.mxu0 0.0
      %5244 = vmatpush1.msra.mxu0 0.0
      %5245 = vmatprep.subr.mxu0 0.0
      %5246 = vmatpush1.msra.mxu0 0.0
      %5247 = vmatprep.subr.mxu0 0.0
      %5248 = vmatpush1.msra.mxu0 0.0
      %5249 = vmatprep.mubr.f32.mxu0 0.0
      %5250 = vmatmul.mubr.f32.gmra.mrb[0].mxu0 %v5183
      %v5251 = vpop.f32.mrb[0].mxu0
      %v5252 = vadd.f32 0.0, %v5251
      %v5253 = vpop.f32.mrb[0].mxu0
      %5254 = vdwg.mxu0
      %v5255 = vadd.f32 %v5178, %v5252
      %s5256 = scalar_lea.vmem %s5, 384
      %v5257 = vld [vmem:[%s5256] sm:$0xff]
      %v5258 = vld [vmem:[%s5256 + $0x8] sm:$0xff]
      %v5260 = vsel %vm3417, %v3409, 0
      %5262 = vmatprep.subr.mxu0 0.0
      %5263 = vmatpush1.msra.mxu0 %v5257
      %5264 = vmatprep.subr.mxu0 0.0
      %5265 = vmatpush1.msra.mxu0 %v5258
      %5266 = vmatprep.subr.mxu0 0.0
      %5267 = vmatpush1.msra.mxu0 0.0
      %5268 = vmatprep.subr.mxu0 0.0
      %5269 = vmatpush1.msra.mxu0 0.0
      %5270 = vmatprep.subr.mxu0 0.0
      %5271 = vmatpush1.msra.mxu0 0.0
      %5272 = vmatprep.subr.mxu0 0.0
      %5273 = vmatpush1.msra.mxu0 0.0
      %5274 = vmatprep.subr.mxu0 0.0
      %5275 = vmatpush1.msra.mxu0 0.0
      %5276 = vmatprep.subr.mxu0 0.0
      %5277 = vmatpush1.msra.mxu0 0.0
      %5278 = vmatprep.subr.mxu0 0.0
      %5279 = vmatpush1.msra.mxu0 0.0
      %5280 = vmatprep.subr.mxu0 0.0
      %5281 = vmatpush1.msra.mxu0 0.0
      %5282 = vmatprep.subr.mxu0 0.0
      %5283 = vmatpush1.msra.mxu0 0.0
      %5284 = vmatprep.subr.mxu0 0.0
      %5285 = vmatpush1.msra.mxu0 0.0
      %5286 = vmatprep.subr.mxu0 0.0
      %5287 = vmatpush1.msra.mxu0 0.0
      %5288 = vmatprep.subr.mxu0 0.0
      %5289 = vmatpush1.msra.mxu0 0.0
      %5290 = vmatprep.subr.mxu0 0.0
      %5291 = vmatpush1.msra.mxu0 0.0
      %5292 = vmatprep.subr.mxu0 0.0
      %5293 = vmatpush1.msra.mxu0 0.0
      %5294 = vmatprep.subr.mxu0 0.0
      %5295 = vmatpush1.msra.mxu0 0.0
      %5296 = vmatprep.subr.mxu0 0.0
      %5297 = vmatpush1.msra.mxu0 0.0
      %5298 = vmatprep.subr.mxu0 0.0
      %5299 = vmatpush1.msra.mxu0 0.0
      %5300 = vmatprep.subr.mxu0 0.0
      %5301 = vmatpush1.msra.mxu0 0.0
      %5302 = vmatprep.subr.mxu0 0.0
      %5303 = vmatpush1.msra.mxu0 0.0
      %5304 = vmatprep.subr.mxu0 0.0
      %5305 = vmatpush1.msra.mxu0 0.0
      %5306 = vmatprep.subr.mxu0 0.0
      %5307 = vmatpush1.msra.mxu0 0.0
      %5308 = vmatprep.subr.mxu0 0.0
      %5309 = vmatpush1.msra.mxu0 0.0
      %5310 = vmatprep.subr.mxu0 0.0
      %5311 = vmatpush1.msra.mxu0 0.0
      %5312 = vmatprep.subr.mxu0 0.0
      %5313 = vmatpush1.msra.mxu0 0.0
      %5314 = vmatprep.subr.mxu0 0.0
      %5315 = vmatpush1.msra.mxu0 0.0
      %5316 = vmatprep.subr.mxu0 0.0
      %5317 = vmatpush1.msra.mxu0 0.0
      %5318 = vmatprep.subr.mxu0 0.0
      %5319 = vmatpush1.msra.mxu0 0.0
      %5320 = vmatprep.subr.mxu0 0.0
      %5321 = vmatpush1.msra.mxu0 0.0
      %5322 = vmatprep.subr.mxu0 0.0
      %5323 = vmatpush1.msra.mxu0 0.0
      %5324 = vmatprep.subr.mxu0 0.0
      %5325 = vmatpush1.msra.mxu0 0.0
      %5326 = vmatprep.mubr.f32.mxu0 0.0
      %5327 = vmatmul.mubr.f32.gmra.mrb[0].mxu0 %v5260
      %v5328 = vpop.f32.mrb[0].mxu0
      %v5329 = vadd.f32 0.0, %v5328
      %v5330 = vpop.f32.mrb[0].mxu0
      %5331 = vdwg.mxu0
      %v5332 = vadd.f32 %v5255, %v5329
      %v5333 = vld [vmem:[%s6] sm:$0x1]
      %v5334 = vadd.f32 %v5332, %v5333
      %v5335 = vmax.f32 %v5334, 0.0
      %v5336 = vld [vmem:[%s7] sm:$0xff]
      %v5337 = vld [vmem:[%s7 + $0x8] sm:$0xff]
      %v5338 = vld [vmem:[%s7 + $0x10] sm:$0xff]
      %v5339 = vld [vmem:[%s7 + $0x18] sm:$0xff]
      %v5340 = vld [vmem:[%s7 + $0x20] sm:$0xff]
      %v5341 = vld [vmem:[%s7 + $0x28] sm:$0xff]
      %v5342 = vld [vmem:[%s7 + $0x30] sm:$0xff]
      %v5343 = vld [vmem:[%s7 + $0x38] sm:$0xff]
      %v5344 = vld [vmem:[%s7 + $0x40] sm:$0xff]
      %v5345 = vld [vmem:[%s7 + $0x48] sm:$0xff]
      %v5346 = vld [vmem:[%s7 + $0x50] sm:$0xff]
      %v5347 = vld [vmem:[%s7 + $0x58] sm:$0xff]
      %v5348 = vld [vmem:[%s7 + $0x60] sm:$0xff]
      %v5349 = vld [vmem:[%s7 + $0x68] sm:$0xff]
      %v5350 = vld [vmem:[%s7 + $0x70] sm:$0xff]
      %v5351 = vld [vmem:[%s7 + $0x78] sm:$0xff]
      %v5352 = vld [vmem:[%s8] sm:$0x1]
      %5353 = vmatprep.subr.mxu0 0.0
      %5354 = vmatpush1.msra.mxu0 %v5336
      %5355 = vmatprep.subr.mxu0 0.0
      %5356 = vmatpush1.msra.mxu0 %v5337
      %5357 = vmatprep.subr.mxu0 0.0
      %5358 = vmatpush1.msra.mxu0 %v5338
      %5359 = vmatprep.subr.mxu0 0.0
      %5360 = vmatpush1.msra.mxu0 %v5339
      %5361 = vmatprep.subr.mxu0 0.0
      %5362 = vmatpush1.msra.mxu0 %v5340
      %5363 = vmatprep.subr.mxu0 0.0
      %5364 = vmatpush1.msra.mxu0 %v5341
      %5365 = vmatprep.subr.mxu0 0.0
      %5366 = vmatpush1.msra.mxu0 %v5342
      %5367 = vmatprep.subr.mxu0 0.0
      %5368 = vmatpush1.msra.mxu0 %v5343
      %5369 = vmatprep.subr.mxu0 0.0
      %5370 = vmatpush1.msra.mxu0 %v5344
      %5371 = vmatprep.subr.mxu0 0.0
      %5372 = vmatpush1.msra.mxu0 %v5345
      %5373 = vmatprep.subr.mxu0 0.0
      %5374 = vmatpush1.msra.mxu0 %v5346
      %5375 = vmatprep.subr.mxu0 0.0
      %5376 = vmatpush1.msra.mxu0 %v5347
      %5377 = vmatprep.subr.mxu0 0.0
      %5378 = vmatpush1.msra.mxu0 %v5348
      %5379 = vmatprep.subr.mxu0 0.0
      %5380 = vmatpush1.msra.mxu0 %v5349
      %5381 = vmatprep.subr.mxu0 0.0
      %5382 = vmatpush1.msra.mxu0 %v5350
      %5383 = vmatprep.subr.mxu0 0.0
      %5384 = vmatpush1.msra.mxu0 %v5351
      %5385 = vmatprep.subr.mxu0 0.0
      %5386 = vmatpush1.msra.mxu0 0.0
      %5387 = vmatprep.subr.mxu0 0.0
      %5388 = vmatpush1.msra.mxu0 0.0
      %5389 = vmatprep.subr.mxu0 0.0
      %5390 = vmatpush1.msra.mxu0 0.0
      %5391 = vmatprep.subr.mxu0 0.0
      %5392 = vmatpush1.msra.mxu0 0.0
      %5393 = vmatprep.subr.mxu0 0.0
      %5394 = vmatpush1.msra.mxu0 0.0
      %5395 = vmatprep.subr.mxu0 0.0
      %5396 = vmatpush1.msra.mxu0 0.0
      %5397 = vmatprep.subr.mxu0 0.0
      %5398 = vmatpush1.msra.mxu0 0.0
      %5399 = vmatprep.subr.mxu0 0.0
      %5400 = vmatpush1.msra.mxu0 0.0
      %5401 = vmatprep.subr.mxu0 0.0
      %5402 = vmatpush1.msra.mxu0 0.0
      %5403 = vmatprep.subr.mxu0 0.0
      %5404 = vmatpush1.msra.mxu0 0.0
      %5405 = vmatprep.subr.mxu0 0.0
      %5406 = vmatpush1.msra.mxu0 0.0
      %5407 = vmatprep.subr.mxu0 0.0
      %5408 = vmatpush1.msra.mxu0 0.0
      %5409 = vmatprep.subr.mxu0 0.0
      %5410 = vmatpush1.msra.mxu0 0.0
      %5411 = vmatprep.subr.mxu0 0.0
      %5412 = vmatpush1.msra.mxu0 0.0
      %5413 = vmatprep.subr.mxu0 0.0
      %5414 = vmatpush1.msra.mxu0 0.0
      %5415 = vmatprep.subr.mxu0 0.0
      %5416 = vmatpush1.msra.mxu0 0.0
      %5417 = vmatprep.mubr.f32.mxu0 0.0
      %5418 = vmatmul.mubr.f32.gmra.mrb[0].mxu0 %v5335
      %v5419 = vpop.f32.mrb[0].mxu0
      %v5420 = vadd.f32 %v5352, %v5419
      %v5421 = vpop.f32.mrb[0].mxu0
      %5422 = vdwg.mxu0
      %v5423 = vmax.f32 %v5420, 0.0
      %v5424 = vld [vmem:[%s9] sm:$0xff]
      %v5425 = vld [vmem:[%s9 + $0x8] sm:$0xff]
      %v5426 = vld [vmem:[%s9 + $0x10] sm:$0xff]
      %v5427 = vld [vmem:[%s9 + $0x18] sm:$0xff]
      %v5428 = vld [vmem:[%s9 + $0x20] sm:$0xff]
      %v5429 = vld [vmem:[%s9 + $0x28] sm:$0xff]
      %v5430 = vld [vmem:[%s9 + $0x30] sm:$0xff]
      %v5431 = vld [vmem:[%s9 + $0x38] sm:$0xff]
      %v5432 = vld [vmem:[%s9 + $0x40] sm:$0xff]
      %v5433 = vld [vmem:[%s9 + $0x48] sm:$0xff]
      %v5434 = vld [vmem:[%s9 + $0x50] sm:$0xff]
      %v5435 = vld [vmem:[%s9 + $0x58] sm:$0xff]
      %v5436 = vld [vmem:[%s9 + $0x60] sm:$0xff]
      %v5437 = vld [vmem:[%s9 + $0x68] sm:$0xff]
      %v5438 = vld [vmem:[%s9 + $0x70] sm:$0xff]
      %v5439 = vld [vmem:[%s9 + $0x78] sm:$0xff]
      %v5440 = vld [vmem:[%s10] sm:$0x1]
      %5441 = vmatprep.subr.mxu0 0.0
      %5442 = vmatpush1.msra.mxu0 %v5424
      %5443 = vmatprep.subr.mxu0 0.0
      %5444 = vmatpush1.msra.mxu0 %v5425
      %5445 = vmatprep.subr.mxu0 0.0
      %5446 = vmatpush1.msra.mxu0 %v5426
      %5447 = vmatprep.subr.mxu0 0.0
      %5448 = vmatpush1.msra.mxu0 %v5427
      %5449 = vmatprep.subr.mxu0 0.0
      %5450 = vmatpush1.msra.mxu0 %v5428
      %5451 = vmatprep.subr.mxu0 0.0
      %5452 = vmatpush1.msra.mxu0 %v5429
      %5453 = vmatprep.subr.mxu0 0.0
      %5454 = vmatpush1.msra.mxu0 %v5430
      %5455 = vmatprep.subr.mxu0 0.0
      %5456 = vmatpush1.msra.mxu0 %v5431
      %5457 = vmatprep.subr.mxu0 0.0
      %5458 = vmatpush1.msra.mxu0 %v5432
      %5459 = vmatprep.subr.mxu0 0.0
      %5460 = vmatpush1.msra.mxu0 %v5433
      %5461 = vmatprep.subr.mxu0 0.0
      %5462 = vmatpush1.msra.mxu0 %v5434
      %5463 = vmatprep.subr.mxu0 0.0
      %5464 = vmatpush1.msra.mxu0 %v5435
      %5465 = vmatprep.subr.mxu0 0.0
      %5466 = vmatpush1.msra.mxu0 %v5436
      %5467 = vmatprep.subr.mxu0 0.0
      %5468 = vmatpush1.msra.mxu0 %v5437
      %5469 = vmatprep.subr.mxu0 0.0
      %5470 = vmatpush1.msra.mxu0 %v5438
      %5471 = vmatprep.subr.mxu0 0.0
      %5472 = vmatpush1.msra.mxu0 %v5439
      %5473 = vmatprep.subr.mxu0 0.0
      %5474 = vmatpush1.msra.mxu0 0.0
      %5475 = vmatprep.subr.mxu0 0.0
      %5476 = vmatpush1.msra.mxu0 0.0
      %5477 = vmatprep.subr.mxu0 0.0
      %5478 = vmatpush1.msra.mxu0 0.0
      %5479 = vmatprep.subr.mxu0 0.0
      %5480 = vmatpush1.msra.mxu0 0.0
      %5481 = vmatprep.subr.mxu0 0.0
      %5482 = vmatpush1.msra.mxu0 0.0
      %5483 = vmatprep.subr.mxu0 0.0
      %5484 = vmatpush1.msra.mxu0 0.0
      %5485 = vmatprep.subr.mxu0 0.0
      %5486 = vmatpush1.msra.mxu0 0.0
      %5487 = vmatprep.subr.mxu0 0.0
      %5488 = vmatpush1.msra.mxu0 0.0
      %5489 = vmatprep.subr.mxu0 0.0
      %5490 = vmatpush1.msra.mxu0 0.0
      %5491 = vmatprep.subr.mxu0 0.0
      %5492 = vmatpush1.msra.mxu0 0.0
      %5493 = vmatprep.subr.mxu0 0.0
      %5494 = vmatpush1.msra.mxu0 0.0
      %5495 = vmatprep.subr.mxu0 0.0
      %5496 = vmatpush1.msra.mxu0 0.0
      %5497 = vmatprep.subr.mxu0 0.0
      %5498 = vmatpush1.msra.mxu0 0.0
      %5499 = vmatprep.subr.mxu0 0.0
      %5500 = vmatpush1.msra.mxu0 0.0
      %5501 = vmatprep.subr.mxu0 0.0
      %5502 = vmatpush1.msra.mxu0 0.0
      %5503 = vmatprep.subr.mxu0 0.0
      %5504 = vmatpush1.msra.mxu0 0.0
      %5505 = vmatprep.mubr.f32.mxu0 0.0
      %5506 = vmatmul.mubr.f32.gmra.mrb[0].mxu0 %v5423
      %v5507 = vpop.f32.mrb[0].mxu0
      %v5508 = vadd.f32 %v5440, %v5507
      %v5509 = vpop.f32.mrb[0].mxu0
      %5510 = vdwg.mxu0
      %5511 = vst [vmem:[%s384] sm:$0x1] %v5508
      %p5512 = scmp.lt.s32.totalorder %s22, 1
      %s5513 = scalar_select %p5512, %s22, 1
      %s5514 = smul.addr %s5513, 8
      %s5515 = scalar_lea.vmem %s11, %s5514
      // Predicated region
      $region65: #{net_forward.1} parent=63 // pred_check
        %p5516 = pneg %p276
      $region66: #{net_forward.1} parent=63 // pred_check_branch
        %5518 = sbr.rel (%p5516) target = $region68
      $region67: #{net_forward.1} parent=63 // pred_region
        _
      $region68: #{net_forward.1} parent=63 // pred_fallthru
        _
    $region64: #{net_forward.1} parent=5 // pred_fallthru
      _
    %p5519 = scmp.le.s32.totalorder 2, %s17
    // Predicated region
    $region69: #{net_forward.1} parent=5 // pred_check
      %p5520 = pneg %p5519
    $region70: #{net_forward.1} parent=5 // pred_check_branch
      %5522 = sbr.rel (%p5520) target = $region72
    $region71: #{net_forward.1} parent=5 // pred_region
      %s5523 = ssub.s32 %s17, 2
      // Predicated region
      $region73: #{net_forward.1} parent=71 // pred_check
        %p5524 = pneg %p282
      $region74: #{net_forward.1} parent=71 // pred_check_branch
        %5526 = sbr.rel (%p5524) target = $region76
      $region75: #{net_forward.1} parent=71 // pred_region
        %p5527 = scmp.lt.s32.totalorder %s23, 1
        %s5528 = scalar_select %p5527, %s23, 1
        %s5529 = smul.addr %s5528, 8
        %s5530 = scalar_lea.vmem %s11, %s5529
      $region76: #{net_forward.1} parent=71 // pred_fallthru
        _
    $region72: #{net_forward.1} parent=5 // pred_fallthru
      _
  $region6: #{net_forward.1} parent=0 // loop_footer
    %s21 = sadd.s32 1, %s17
  $region7: #{net_forward.1} parent=0 // loop_footer_branch
    %16 = sbr.rel target = $region3
  $region8: #{net_forward.1} parent=0 // loop_exit
    _

</llo_original>
